<compile_context>
chip_gen: v6e
topology: v6e:2x2x1
jax: 0.10.0
libtpu: 0.0.40
codegen_flags: <defaults>
</compile_context>

<pallas_src>
import jax
import jax.numpy as jnp
import numpy as np
from jax.experimental import pallas as pl
from jax.experimental.pallas import tpu as pltpu

# ----------------------------- static dims ---------------------------------
H = 32          # input H = W
KS = 5          # conv kernel size
C1 = 6          # conv1 out channels
O1 = H - KS + 1          # 28  conv1 spatial
Q1 = O1 // 2             # 14  pooled1 spatial
C2 = 16         # conv2 out channels
O2 = Q1 - KS + 1         # 10  conv2 spatial
Q2 = O2 // 2             # 5   pooled2 spatial
L1 = O1 * C1             # 168 conv1 packed lane width  (w*6 + c)
L2 = O2 * C2             # 160 conv2 packed lane width  (x*16 + c)
NF1, NF2, NCLS = 120, 84, 10


# ----------------------------- fused kernel --------------------------------
def _lenet5_kernel(x_ref, b1_ref, b1b_ref, b2_ref, b2b_ref,
                   w1_ref, w1b_ref, w2_ref, w2b_ref, w3_ref, w3b_ref,
                   s0_ref, s1_ref, r6_ref, u0_ref, u1_ref, r16_ref,
                   o_ref, p1_sc, p2_sc):
    f32 = jnp.float32
    nb = x_ref.shape[0]
    for n in range(nb):                                   # tiny batch, unrolled
        # ---- conv1: 5 band matmuls (one per kernel row tap) ----
        a1 = jnp.dot(x_ref[n, 0:O1, :], b1_ref[0], preferred_element_type=f32)
        for i in range(1, KS):
            a1 = a1 + jnp.dot(x_ref[n, i:i + O1, :], b1_ref[i],
                              preferred_element_type=f32)
        a1 = a1 + b1b_ref[...]                            # (28, 168)

        # ---- pool1: H-downsample via 0/1 selection matmuls, W via lane-shift
        h1 = jnp.maximum(
            jnp.dot(s0_ref[...], a1, preferred_element_type=f32),
            jnp.dot(s1_ref[...], a1, preferred_element_type=f32))   # (14, 168)
        p1_sc[...] = jnp.maximum(
            h1, jnp.dot(h1, r6_ref[...], preferred_element_type=f32))

        # ---- conv2: 5 band matmuls over pooled (W, Cin)-packed lanes ----
        a2 = jnp.dot(p1_sc[0:O2, :], b2_ref[0], preferred_element_type=f32)
        for i in range(1, KS):
            a2 = a2 + jnp.dot(p1_sc[i:i + O2, :], b2_ref[i],
                              preferred_element_type=f32)
        a2 = a2 + b2b_ref[...]                            # (10, 160)

        # ---- pool2 ----
        h2 = jnp.maximum(
            jnp.dot(u0_ref[...], a2, preferred_element_type=f32),
            jnp.dot(u1_ref[...], a2, preferred_element_type=f32))   # (5, 160)
        p2_sc[...] = jnp.maximum(
            h2, jnp.dot(h2, r16_ref[...], preferred_element_type=f32))

        # ---- fc1: NCHW flatten folded into per-pooled-row weight blocks ----
        f1 = jnp.dot(p2_sc[0:1, :], w1_ref[0], preferred_element_type=f32)
        for r in range(1, Q2):
            f1 = f1 + jnp.dot(p2_sc[r:r + 1, :], w1_ref[r],
                              preferred_element_type=f32)
        f1 = f1 + w1b_ref[...]                            # (1, 120)

        # ---- fc2 / fc3 ----
        f2 = jnp.dot(f1, w2_ref[...], preferred_element_type=f32) + w2b_ref[...]
        f3 = jnp.dot(f2, w3_ref[...], preferred_element_type=f32) + w3b_ref[...]
        o_ref[pl.ds(n, 1), :] = f3                        # (1, 10)


# ----------------------------- host-side packing ---------------------------
def pack_params(params):
    """One-time host packing of the PyTorch-layout weights into MXU-friendly
    band / selection matrices consumed by the fused kernel."""
    w1 = np.asarray(params["conv1_w"], np.float32)   # (6, 1, 5, 5)
    b1 = np.asarray(params["conv1_b"], np.float32)
    w2 = np.asarray(params["conv2_w"], np.float32)   # (16, 6, 5, 5)
    b2 = np.asarray(params["conv2_b"], np.float32)
    f1w = np.asarray(params["fc1_w"], np.float32)    # (120, 400) k=c*25+h*5+w
    f1b = np.asarray(params["fc1_b"], np.float32)
    f2w = np.asarray(params["fc2_w"], np.float32)    # (84, 120)
    f2b = np.asarray(params["fc2_b"], np.float32)
    f3w = np.asarray(params["fc3_w"], np.float32)    # (10, 84)
    f3b = np.asarray(params["fc3_b"], np.float32)

    # conv1 band matrices: (x[i:i+28,:] @ B1[i])[h, w*6+c] = sum_j x[h+i, w+j] * w1[c,0,i,j]
    B1 = np.zeros((KS, H, L1), np.float32)
    for i in range(KS):
        for w in range(O1):
            for j in range(KS):
                B1[i, w + j, w * C1:(w + 1) * C1] = w1[:, 0, i, j]
    b1p = np.tile(b1, O1)[None, :]                                   # (1, 168)

    # conv2 band matrices: input lanes are conv1 lanes (w*6+ci), only even w
    # (= pooled positions) are referenced, folding the W-downsample in.
    B2 = np.zeros((KS, L1, L2), np.float32)
    for i in range(KS):
        for x in range(O2):
            for j in range(KS):
                wpos = 2 * (x + j)
                for ci in range(C1):
                    B2[i, wpos * C1 + ci, x * C2:(x + 1) * C2] = w2[:, ci, i, j]
    b2p = np.tile(b2, O2)[None, :]                                   # (1, 160)

    # fc1: one (160, 120) block per pooled-H row; even-x selection + PyTorch
    # NCHW flatten order (c*25 + h*5 + w) folded into the packing.
    W1 = np.zeros((Q2, L2, NF1), np.float32)
    for h in range(Q2):
        for x in range(0, O2, 2):
            for c in range(C2):
                W1[h, x * C2 + c, :] = f1w[:, c * 25 + h * 5 + x // 2]
    b1f = f1b[None, :]

    W2 = f2w.T.copy()                                                # (120, 84)
    b2f = f2b[None, :]
    W3 = f3w.T.copy()                                                # (84, 10)
    b3f = f3b[None, :]

    # pooling constants: even/odd row selectors + lane-shift matrices
    S0 = np.zeros((Q1, O1), np.float32)
    S0[np.arange(Q1), 2 * np.arange(Q1)] = 1.0
    S1 = np.zeros((Q1, O1), np.float32)
    S1[np.arange(Q1), 2 * np.arange(Q1) + 1] = 1.0
    R6 = np.eye(L1, k=-C1, dtype=np.float32)    # (h1 @ R6)[:, l] = h1[:, l+6]
    U0 = np.zeros((Q2, O2), np.float32)
    U0[np.arange(Q2), 2 * np.arange(Q2)] = 1.0
    U1 = np.zeros((Q2, O2), np.float32)
    U1[np.arange(Q2), 2 * np.arange(Q2) + 1] = 1.0
    R16 = np.eye(L2, k=-C2, dtype=np.float32)   # lane shift by +16

    packed = (B1, b1p, B2, b2p, W1, b1f, W2, b2f, W3, b3f,
              S0, S1, R6, U0, U1, R16)
    return tuple(jnp.asarray(a) for a in packed)


# ----------------------------- forward wrapper -----------------------------
def lenet5_forward(packed, x):
    n = x.shape[0]
    assert x.shape[1:] == (1, H, H), "LeNet-5 expects (N, 1, 32, 32) input"
    x3 = x.reshape(n, H, H).astype(jnp.float32)

    flops = 2 * n * (KS * O1 * H * L1 + 2 * Q1 * O1 * L1 + Q1 * L1 * L1
                     + KS * O2 * L1 * L2 + 2 * Q2 * O2 * L2 + Q2 * L2 * L2
                     + Q2 * L2 * NF1 + NF1 * NF2 + NF2 * NCLS)
    nbytes = int(x3.size) * 4 + sum(int(a.size) * 4 for a in packed) + n * NCLS * 4

    vmem_specs = [pl.BlockSpec(memory_space=pltpu.MemorySpace.VMEM)
                  for _ in range(1 + len(packed))]
    return pl.pallas_call(
        _lenet5_kernel,
        out_shape=jax.ShapeDtypeStruct((n, NCLS), jnp.float32),
        in_specs=vmem_specs,
        out_specs=pl.BlockSpec(memory_space=pltpu.MemorySpace.VMEM),
        scratch_shapes=[pltpu.VMEM((Q1, L1), jnp.float32),
                        pltpu.VMEM((Q2, L2), jnp.float32)],
        cost_estimate=pl.CostEstimate(flops=flops, transcendentals=0,
                                      bytes_accessed=nbytes),
    )(x3, *packed)


# ----------------------------- init + reference ----------------------------
def init_params(key):
    ks = jax.random.split(key, 10)

    def u(k, shape, fan_in):
        bound = 1.0 / (fan_in ** 0.5)
        return jax.random.uniform(k, shape, jnp.float32, -bound, bound)

    return {
        "conv1_w": u(ks[0], (6, 1, 5, 5), 1 * 5 * 5),
        "conv1_b": u(ks[1], (6,), 1 * 5 * 5),
        "conv2_w": u(ks[2], (16, 6, 5, 5), 6 * 5 * 5),
        "conv2_b": u(ks[3], (16,), 6 * 5 * 5),
        "fc1_w": u(ks[4], (120, 16 * 5 * 5), 16 * 5 * 5),
        "fc1_b": u(ks[5], (120,), 16 * 5 * 5),
        "fc2_w": u(ks[6], (84, 120), 120),
        "fc2_b": u(ks[7], (84,), 120),
        "fc3_w": u(ks[8], (10, 84), 84),
        "fc3_b": u(ks[9], (10,), 84),
    }


def _reference_forward(params, x):
    hi = jax.lax.Precision.HIGHEST
    dn = ("NCHW", "OIHW", "NCHW")
    y = jax.lax.conv_general_dilated(x, params["conv1_w"], (1, 1), "VALID",
                                     dimension_numbers=dn, precision=hi)
    y = y + params["conv1_b"][None, :, None, None]
    n, c, h, w = y.shape
    y = y.reshape(n, c, h // 2, 2, w // 2, 2).max(axis=(3, 5))
    y = jax.lax.conv_general_dilated(y, params["conv2_w"], (1, 1), "VALID",
                                     dimension_numbers=dn, precision=hi)
    y = y + params["conv2_b"][None, :, None, None]
    n, c, h, w = y.shape
    y = y.reshape(n, c, h // 2, 2, w // 2, 2).max(axis=(3, 5))
    y = y.reshape(n, 16 * 5 * 5)
    y = jnp.dot(y, params["fc1_w"].T, precision=hi) + params["fc1_b"]
    y = jnp.dot(y, params["fc2_w"].T, precision=hi) + params["fc2_b"]
    y = jnp.dot(y, params["fc3_w"].T, precision=hi) + params["fc3_b"]
    return y


if __name__ == "__main__":
    key = jax.random.PRNGKey(0)
    pkey, xkey = jax.random.split(key)
    params = init_params(pkey)
    packed = pack_params(params)       # one-time host-side weight packing

    # LeNet-5 requires 32x32 single-channel input (16*5*5 = 400 after convs).
    x = jax.random.normal(xkey, (2, 1, 32, 32), dtype=jnp.float32)

    fwd = jax.jit(lenet5_forward)
    logits = jax.block_until_ready(fwd(packed, x))
    assert logits.shape == (2, 10)

    ref = _reference_forward(params, x)
    err = float(jnp.max(jnp.abs(logits - ref)))
    assert err < 1e-2, f"mismatch vs reference: {err}"

    print("KERNEL_OK")
</pallas_src>

<mosaic_0001>
module attributes {stable_mosaic.version = 11 : i64} {
  func.func @_lenet5_kernel(%arg0: memref<2x32x32xf32, #tpu.memory_space<vmem>>, %arg1: memref<5x32x168xf32, #tpu.memory_space<vmem>>, %arg2: memref<1x168xf32, #tpu.memory_space<vmem>>, %arg3: memref<5x168x160xf32, #tpu.memory_space<vmem>>, %arg4: memref<1x160xf32, #tpu.memory_space<vmem>>, %arg5: memref<5x160x120xf32, #tpu.memory_space<vmem>>, %arg6: memref<1x120xf32, #tpu.memory_space<vmem>>, %arg7: memref<120x84xf32, #tpu.memory_space<vmem>>, %arg8: memref<1x84xf32, #tpu.memory_space<vmem>>, %arg9: memref<84x10xf32, #tpu.memory_space<vmem>>, %arg10: memref<1x10xf32, #tpu.memory_space<vmem>>, %arg11: memref<14x28xf32, #tpu.memory_space<vmem>>, %arg12: memref<14x28xf32, #tpu.memory_space<vmem>>, %arg13: memref<168x168xf32, #tpu.memory_space<vmem>>, %arg14: memref<5x10xf32, #tpu.memory_space<vmem>>, %arg15: memref<5x10xf32, #tpu.memory_space<vmem>>, %arg16: memref<160x160xf32, #tpu.memory_space<vmem>>, %arg17: memref<2x10xf32, #tpu.memory_space<vmem>>, %arg18: memref<14x168xf32, #tpu.memory_space<vmem>>, %arg19: memref<5x160xf32, #tpu.memory_space<vmem>>) attributes {dimension_semantics = [], scalar_prefetch = 0 : i64, scratch_operands = 2 : i64, tpu.core_type = #tpu.core_type<tc>} {
    %c0 = arith.constant 0 : index
    %c0_0 = arith.constant 0 : index
    %c0_1 = arith.constant 0 : index
    %0 = vector.load %arg0[%c0, %c0_0, %c0_1] : memref<2x32x32xf32, #tpu.memory_space<vmem>>, vector<1x28x32xf32>
    %1 = vector.shape_cast %0 : vector<1x28x32xf32> to vector<28x32xf32>
    %c0_2 = arith.constant 0 : index
    %c0_3 = arith.constant 0 : index
    %c0_4 = arith.constant 0 : index
    %2 = vector.load %arg1[%c0_2, %c0_3, %c0_4] : memref<5x32x168xf32, #tpu.memory_space<vmem>>, vector<1x32x168xf32>
    %3 = vector.shape_cast %2 : vector<1x32x168xf32> to vector<32x168xf32>
    %cst = arith.constant dense<0.000000e+00> : vector<28x168xf32>
    %4 = tpu.matmul %1, %3, %cst {dimension_numbers = #tpu.dot_dimension_numbers<[1], [0], [0], [1], [0, 0, 1, 1], [], []>} : vector<28x32xf32>, vector<32x168xf32>, vector<28x168xf32> -> vector<28x168xf32>
    %c0_5 = arith.constant 0 : index
    %c1 = arith.constant 1 : index
    %c0_6 = arith.constant 0 : index
    %5 = vector.load %arg0[%c0_5, %c1, %c0_6] : memref<2x32x32xf32, #tpu.memory_space<vmem>>, vector<1x28x32xf32>
    %6 = vector.shape_cast %5 : vector<1x28x32xf32> to vector<28x32xf32>
    %c1_7 = arith.constant 1 : index
    %c0_8 = arith.constant 0 : index
    %c0_9 = arith.constant 0 : index
    %7 = vector.load %arg1[%c1_7, %c0_8, %c0_9] : memref<5x32x168xf32, #tpu.memory_space<vmem>>, vector<1x32x168xf32>
    %8 = vector.shape_cast %7 : vector<1x32x168xf32> to vector<32x168xf32>
    %cst_10 = arith.constant dense<0.000000e+00> : vector<28x168xf32>
    %9 = tpu.matmul %6, %8, %cst_10 {dimension_numbers = #tpu.dot_dimension_numbers<[1], [0], [0], [1], [0, 0, 1, 1], [], []>} : vector<28x32xf32>, vector<32x168xf32>, vector<28x168xf32> -> vector<28x168xf32>
    %10 = arith.addf %4, %9 : vector<28x168xf32>
    %c0_11 = arith.constant 0 : index
    %c2 = arith.constant 2 : index
    %c0_12 = arith.constant 0 : index
    %11 = vector.load %arg0[%c0_11, %c2, %c0_12] : memref<2x32x32xf32, #tpu.memory_space<vmem>>, vector<1x28x32xf32>
    %12 = vector.shape_cast %11 : vector<1x28x32xf32> to vector<28x32xf32>
    %c2_13 = arith.constant 2 : index
    %c0_14 = arith.constant 0 : index
    %c0_15 = arith.constant 0 : index
    %13 = vector.load %arg1[%c2_13, %c0_14, %c0_15] : memref<5x32x168xf32, #tpu.memory_space<vmem>>, vector<1x32x168xf32>
    %14 = vector.shape_cast %13 : vector<1x32x168xf32> to vector<32x168xf32>
    %cst_16 = arith.constant dense<0.000000e+00> : vector<28x168xf32>
    %15 = tpu.matmul %12, %14, %cst_16 {dimension_numbers = #tpu.dot_dimension_numbers<[1], [0], [0], [1], [0, 0, 1, 1], [], []>} : vector<28x32xf32>, vector<32x168xf32>, vector<28x168xf32> -> vector<28x168xf32>
    %16 = arith.addf %10, %15 : vector<28x168xf32>
    %c0_17 = arith.constant 0 : index
    %c3 = arith.constant 3 : index
    %c0_18 = arith.constant 0 : index
    %17 = vector.load %arg0[%c0_17, %c3, %c0_18] : memref<2x32x32xf32, #tpu.memory_space<vmem>>, vector<1x28x32xf32>
    %18 = vector.shape_cast %17 : vector<1x28x32xf32> to vector<28x32xf32>
    %c3_19 = arith.constant 3 : index
    %c0_20 = arith.constant 0 : index
    %c0_21 = arith.constant 0 : index
    %19 = vector.load %arg1[%c3_19, %c0_20, %c0_21] : memref<5x32x168xf32, #tpu.memory_space<vmem>>, vector<1x32x168xf32>
    %20 = vector.shape_cast %19 : vector<1x32x168xf32> to vector<32x168xf32>
    %cst_22 = arith.constant dense<0.000000e+00> : vector<28x168xf32>
    %21 = tpu.matmul %18, %20, %cst_22 {dimension_numbers = #tpu.dot_dimension_numbers<[1], [0], [0], [1], [0, 0, 1, 1], [], []>} : vector<28x32xf32>, vector<32x168xf32>, vector<28x168xf32> -> vector<28x168xf32>
    %22 = arith.addf %16, %21 : vector<28x168xf32>
    %c0_23 = arith.constant 0 : index
    %c4 = arith.constant 4 : index
    %c0_24 = arith.constant 0 : index
    %23 = vector.load %arg0[%c0_23, %c4, %c0_24] : memref<2x32x32xf32, #tpu.memory_space<vmem>>, vector<1x28x32xf32>
    %24 = vector.shape_cast %23 : vector<1x28x32xf32> to vector<28x32xf32>
    %c4_25 = arith.constant 4 : index
    %c0_26 = arith.constant 0 : index
    %c0_27 = arith.constant 0 : index
    %25 = vector.load %arg1[%c4_25, %c0_26, %c0_27] : memref<5x32x168xf32, #tpu.memory_space<vmem>>, vector<1x32x168xf32>
    %26 = vector.shape_cast %25 : vector<1x32x168xf32> to vector<32x168xf32>
    %cst_28 = arith.constant dense<0.000000e+00> : vector<28x168xf32>
    %27 = tpu.matmul %24, %26, %cst_28 {dimension_numbers = #tpu.dot_dimension_numbers<[1], [0], [0], [1], [0, 0, 1, 1], [], []>} : vector<28x32xf32>, vector<32x168xf32>, vector<28x168xf32> -> vector<28x168xf32>
    %28 = arith.addf %22, %27 : vector<28x168xf32>
    %c0_29 = arith.constant 0 : index
    %c0_30 = arith.constant 0 : index
    %29 = vector.load %arg2[%c0_29, %c0_30] : memref<1x168xf32, #tpu.memory_space<vmem>>, vector<1x168xf32>
    %30 = vector.broadcast %29 : vector<1x168xf32> to vector<28x168xf32>
    %31 = arith.addf %28, %30 : vector<28x168xf32>
    %c0_31 = arith.constant 0 : index
    %c0_32 = arith.constant 0 : index
    %32 = vector.load %arg11[%c0_31, %c0_32] : memref<14x28xf32, #tpu.memory_space<vmem>>, vector<14x28xf32>
    %cst_33 = arith.constant dense<0.000000e+00> : vector<14x168xf32>
    %33 = tpu.matmul %32, %31, %cst_33 {dimension_numbers = #tpu.dot_dimension_numbers<[1], [0], [0], [1], [0, 0, 1, 1], [], []>} : vector<14x28xf32>, vector<28x168xf32>, vector<14x168xf32> -> vector<14x168xf32>
    %c0_34 = arith.constant 0 : index
    %c0_35 = arith.constant 0 : index
    %34 = vector.load %arg12[%c0_34, %c0_35] : memref<14x28xf32, #tpu.memory_space<vmem>>, vector<14x28xf32>
    %cst_36 = arith.constant dense<0.000000e+00> : vector<14x168xf32>
    %35 = tpu.matmul %34, %31, %cst_36 {dimension_numbers = #tpu.dot_dimension_numbers<[1], [0], [0], [1], [0, 0, 1, 1], [], []>} : vector<14x28xf32>, vector<28x168xf32>, vector<14x168xf32> -> vector<14x168xf32>
    %36 = arith.maximumf %33, %35 : vector<14x168xf32>
    %c0_37 = arith.constant 0 : index
    %c0_38 = arith.constant 0 : index
    %37 = vector.load %arg13[%c0_37, %c0_38] : memref<168x168xf32, #tpu.memory_space<vmem>>, vector<168x168xf32>
    %cst_39 = arith.constant dense<0.000000e+00> : vector<14x168xf32>
    %38 = tpu.matmul %36, %37, %cst_39 {dimension_numbers = #tpu.dot_dimension_numbers<[1], [0], [0], [1], [0, 0, 1, 1], [], []>} : vector<14x168xf32>, vector<168x168xf32>, vector<14x168xf32> -> vector<14x168xf32>
    %39 = arith.maximumf %36, %38 : vector<14x168xf32>
    %c0_40 = arith.constant 0 : index
    %c0_41 = arith.constant 0 : index
    %40 = vector.load %arg18[%c0_40, %c0_41] : memref<14x168xf32, #tpu.memory_space<vmem>>, vector<14x168xf32>
    tpu.vector_store %arg18[%c0_40, %c0_41], %39 {strides = array<i32>} : memref<14x168xf32, #tpu.memory_space<vmem>>, vector<14x168xf32>,
    %c0_42 = arith.constant 0 : index
    %c0_43 = arith.constant 0 : index
    %41 = vector.load %arg18[%c0_42, %c0_43] : memref<14x168xf32, #tpu.memory_space<vmem>>, vector<10x168xf32>
    %c0_44 = arith.constant 0 : index
    %c0_45 = arith.constant 0 : index
    %c0_46 = arith.constant 0 : index
    %42 = vector.load %arg3[%c0_44, %c0_45, %c0_46] : memref<5x168x160xf32, #tpu.memory_space<vmem>>, vector<1x168x160xf32>
    %43 = vector.shape_cast %42 : vector<1x168x160xf32> to vector<168x160xf32>
    %cst_47 = arith.constant dense<0.000000e+00> : vector<10x160xf32>
    %44 = tpu.matmul %41, %43, %cst_47 {dimension_numbers = #tpu.dot_dimension_numbers<[1], [0], [0], [1], [0, 0, 1, 1], [], []>} : vector<10x168xf32>, vector<168x160xf32>, vector<10x160xf32> -> vector<10x160xf32>
    %c1_48 = arith.constant 1 : index
    %c0_49 = arith.constant 0 : index
    %45 = vector.load %arg18[%c1_48, %c0_49] : memref<14x168xf32, #tpu.memory_space<vmem>>, vector<10x168xf32>
    %c1_50 = arith.constant 1 : index
    %c0_51 = arith.constant 0 : index
    %c0_52 = arith.constant 0 : index
    %46 = vector.load %arg3[%c1_50, %c0_51, %c0_52] : memref<5x168x160xf32, #tpu.memory_space<vmem>>, vector<1x168x160xf32>
    %47 = vector.shape_cast %46 : vector<1x168x160xf32> to vector<168x160xf32>
    %cst_53 = arith.constant dense<0.000000e+00> : vector<10x160xf32>
    %48 = tpu.matmul %45, %47, %cst_53 {dimension_numbers = #tpu.dot_dimension_numbers<[1], [0], [0], [1], [0, 0, 1, 1], [], []>} : vector<10x168xf32>, vector<168x160xf32>, vector<10x160xf32> -> vector<10x160xf32>
    %49 = arith.addf %44, %48 : vector<10x160xf32>
    %c2_54 = arith.constant 2 : index
    %c0_55 = arith.constant 0 : index
    %50 = vector.load %arg18[%c2_54, %c0_55] : memref<14x168xf32, #tpu.memory_space<vmem>>, vector<10x168xf32>
    %c2_56 = arith.constant 2 : index
    %c0_57 = arith.constant 0 : index
    %c0_58 = arith.constant 0 : index
    %51 = vector.load %arg3[%c2_56, %c0_57, %c0_58] : memref<5x168x160xf32, #tpu.memory_space<vmem>>, vector<1x168x160xf32>
    %52 = vector.shape_cast %51 : vector<1x168x160xf32> to vector<168x160xf32>
    %cst_59 = arith.constant dense<0.000000e+00> : vector<10x160xf32>
    %53 = tpu.matmul %50, %52, %cst_59 {dimension_numbers = #tpu.dot_dimension_numbers<[1], [0], [0], [1], [0, 0, 1, 1], [], []>} : vector<10x168xf32>, vector<168x160xf32>, vector<10x160xf32> -> vector<10x160xf32>
    %54 = arith.addf %49, %53 : vector<10x160xf32>
    %c3_60 = arith.constant 3 : index
    %c0_61 = arith.constant 0 : index
    %55 = vector.load %arg18[%c3_60, %c0_61] : memref<14x168xf32, #tpu.memory_space<vmem>>, vector<10x168xf32>
    %c3_62 = arith.constant 3 : index
    %c0_63 = arith.constant 0 : index
    %c0_64 = arith.constant 0 : index
    %56 = vector.load %arg3[%c3_62, %c0_63, %c0_64] : memref<5x168x160xf32, #tpu.memory_space<vmem>>, vector<1x168x160xf32>
    %57 = vector.shape_cast %56 : vector<1x168x160xf32> to vector<168x160xf32>
    %cst_65 = arith.constant dense<0.000000e+00> : vector<10x160xf32>
    %58 = tpu.matmul %55, %57, %cst_65 {dimension_numbers = #tpu.dot_dimension_numbers<[1], [0], [0], [1], [0, 0, 1, 1], [], []>} : vector<10x168xf32>, vector<168x160xf32>, vector<10x160xf32> -> vector<10x160xf32>
    %59 = arith.addf %54, %58 : vector<10x160xf32>
    %c4_66 = arith.constant 4 : index
    %c0_67 = arith.constant 0 : index
    %60 = vector.load %arg18[%c4_66, %c0_67] : memref<14x168xf32, #tpu.memory_space<vmem>>, vector<10x168xf32>
    %c4_68 = arith.constant 4 : index
    %c0_69 = arith.constant 0 : index
    %c0_70 = arith.constant 0 : index
    %61 = vector.load %arg3[%c4_68, %c0_69, %c0_70] : memref<5x168x160xf32, #tpu.memory_space<vmem>>, vector<1x168x160xf32>
    %62 = vector.shape_cast %61 : vector<1x168x160xf32> to vector<168x160xf32>
    %cst_71 = arith.constant dense<0.000000e+00> : vector<10x160xf32>
    %63 = tpu.matmul %60, %62, %cst_71 {dimension_numbers = #tpu.dot_dimension_numbers<[1], [0], [0], [1], [0, 0, 1, 1], [], []>} : vector<10x168xf32>, vector<168x160xf32>, vector<10x160xf32> -> vector<10x160xf32>
    %64 = arith.addf %59, %63 : vector<10x160xf32>
    %c0_72 = arith.constant 0 : index
    %c0_73 = arith.constant 0 : index
    %65 = vector.load %arg4[%c0_72, %c0_73] : memref<1x160xf32, #tpu.memory_space<vmem>>, vector<1x160xf32>
    %66 = vector.broadcast %65 : vector<1x160xf32> to vector<10x160xf32>
    %67 = arith.addf %64, %66 : vector<10x160xf32>
    %c0_74 = arith.constant 0 : index
    %c0_75 = arith.constant 0 : index
    %68 = vector.load %arg14[%c0_74, %c0_75] : memref<5x10xf32, #tpu.memory_space<vmem>>, vector<5x10xf32>
    %cst_76 = arith.constant dense<0.000000e+00> : vector<5x160xf32>
    %69 = tpu.matmul %68, %67, %cst_76 {dimension_numbers = #tpu.dot_dimension_numbers<[1], [0], [0], [1], [0, 0, 1, 1], [], []>} : vector<5x10xf32>, vector<10x160xf32>, vector<5x160xf32> -> vector<5x160xf32>
    %c0_77 = arith.constant 0 : index
    %c0_78 = arith.constant 0 : index
    %70 = vector.load %arg15[%c0_77, %c0_78] : memref<5x10xf32, #tpu.memory_space<vmem>>, vector<5x10xf32>
    %cst_79 = arith.constant dense<0.000000e+00> : vector<5x160xf32>
    %71 = tpu.matmul %70, %67, %cst_79 {dimension_numbers = #tpu.dot_dimension_numbers<[1], [0], [0], [1], [0, 0, 1, 1], [], []>} : vector<5x10xf32>, vector<10x160xf32>, vector<5x160xf32> -> vector<5x160xf32>
    %72 = arith.maximumf %69, %71 : vector<5x160xf32>
    %c0_80 = arith.constant 0 : index
    %c0_81 = arith.constant 0 : index
    %73 = vector.load %arg16[%c0_80, %c0_81] : memref<160x160xf32, #tpu.memory_space<vmem>>, vector<160x160xf32>
    %cst_82 = arith.constant dense<0.000000e+00> : vector<5x160xf32>
    %74 = tpu.matmul %72, %73, %cst_82 {dimension_numbers = #tpu.dot_dimension_numbers<[1], [0], [0], [1], [0, 0, 1, 1], [], []>} : vector<5x160xf32>, vector<160x160xf32>, vector<5x160xf32> -> vector<5x160xf32>
    %75 = arith.maximumf %72, %74 : vector<5x160xf32>
    %c0_83 = arith.constant 0 : index
    %c0_84 = arith.constant 0 : index
    %76 = vector.load %arg19[%c0_83, %c0_84] : memref<5x160xf32, #tpu.memory_space<vmem>>, vector<5x160xf32>
    tpu.vector_store %arg19[%c0_83, %c0_84], %75 {strides = array<i32>} : memref<5x160xf32, #tpu.memory_space<vmem>>, vector<5x160xf32>,
    %c0_85 = arith.constant 0 : index
    %c0_86 = arith.constant 0 : index
    %77 = vector.load %arg19[%c0_85, %c0_86] : memref<5x160xf32, #tpu.memory_space<vmem>>, vector<1x160xf32>
    %c0_87 = arith.constant 0 : index
    %c0_88 = arith.constant 0 : index
    %c0_89 = arith.constant 0 : index
    %78 = vector.load %arg5[%c0_87, %c0_88, %c0_89] : memref<5x160x120xf32, #tpu.memory_space<vmem>>, vector<1x160x120xf32>
    %79 = vector.shape_cast %78 : vector<1x160x120xf32> to vector<160x120xf32>
    %cst_90 = arith.constant dense<0.000000e+00> : vector<1x120xf32>
    %80 = tpu.matmul %77, %79, %cst_90 {dimension_numbers = #tpu.dot_dimension_numbers<[1], [0], [0], [1], [0, 0, 1, 1], [], []>} : vector<1x160xf32>, vector<160x120xf32>, vector<1x120xf32> -> vector<1x120xf32>
    %c1_91 = arith.constant 1 : index
    %c0_92 = arith.constant 0 : index
    %81 = vector.load %arg19[%c1_91, %c0_92] : memref<5x160xf32, #tpu.memory_space<vmem>>, vector<1x160xf32>
    %c1_93 = arith.constant 1 : index
    %c0_94 = arith.constant 0 : index
    %c0_95 = arith.constant 0 : index
    %82 = vector.load %arg5[%c1_93, %c0_94, %c0_95] : memref<5x160x120xf32, #tpu.memory_space<vmem>>, vector<1x160x120xf32>
    %83 = vector.shape_cast %82 : vector<1x160x120xf32> to vector<160x120xf32>
    %cst_96 = arith.constant dense<0.000000e+00> : vector<1x120xf32>
    %84 = tpu.matmul %81, %83, %cst_96 {dimension_numbers = #tpu.dot_dimension_numbers<[1], [0], [0], [1], [0, 0, 1, 1], [], []>} : vector<1x160xf32>, vector<160x120xf32>, vector<1x120xf32> -> vector<1x120xf32>
    %85 = arith.addf %80, %84 : vector<1x120xf32>
    %c2_97 = arith.constant 2 : index
    %c0_98 = arith.constant 0 : index
    %86 = vector.load %arg19[%c2_97, %c0_98] : memref<5x160xf32, #tpu.memory_space<vmem>>, vector<1x160xf32>
    %c2_99 = arith.constant 2 : index
    %c0_100 = arith.constant 0 : index
    %c0_101 = arith.constant 0 : index
    %87 = vector.load %arg5[%c2_99, %c0_100, %c0_101] : memref<5x160x120xf32, #tpu.memory_space<vmem>>, vector<1x160x120xf32>
    %88 = vector.shape_cast %87 : vector<1x160x120xf32> to vector<160x120xf32>
    %cst_102 = arith.constant dense<0.000000e+00> : vector<1x120xf32>
    %89 = tpu.matmul %86, %88, %cst_102 {dimension_numbers = #tpu.dot_dimension_numbers<[1], [0], [0], [1], [0, 0, 1, 1], [], []>} : vector<1x160xf32>, vector<160x120xf32>, vector<1x120xf32> -> vector<1x120xf32>
    %90 = arith.addf %85, %89 : vector<1x120xf32>
    %c3_103 = arith.constant 3 : index
    %c0_104 = arith.constant 0 : index
    %91 = vector.load %arg19[%c3_103, %c0_104] : memref<5x160xf32, #tpu.memory_space<vmem>>, vector<1x160xf32>
    %c3_105 = arith.constant 3 : index
    %c0_106 = arith.constant 0 : index
    %c0_107 = arith.constant 0 : index
    %92 = vector.load %arg5[%c3_105, %c0_106, %c0_107] : memref<5x160x120xf32, #tpu.memory_space<vmem>>, vector<1x160x120xf32>
    %93 = vector.shape_cast %92 : vector<1x160x120xf32> to vector<160x120xf32>
    %cst_108 = arith.constant dense<0.000000e+00> : vector<1x120xf32>
    %94 = tpu.matmul %91, %93, %cst_108 {dimension_numbers = #tpu.dot_dimension_numbers<[1], [0], [0], [1], [0, 0, 1, 1], [], []>} : vector<1x160xf32>, vector<160x120xf32>, vector<1x120xf32> -> vector<1x120xf32>
    %95 = arith.addf %90, %94 : vector<1x120xf32>
    %c4_109 = arith.constant 4 : index
    %c0_110 = arith.constant 0 : index
    %96 = vector.load %arg19[%c4_109, %c0_110] : memref<5x160xf32, #tpu.memory_space<vmem>>, vector<1x160xf32>
    %c4_111 = arith.constant 4 : index
    %c0_112 = arith.constant 0 : index
    %c0_113 = arith.constant 0 : index
    %97 = vector.load %arg5[%c4_111, %c0_112, %c0_113] : memref<5x160x120xf32, #tpu.memory_space<vmem>>, vector<1x160x120xf32>
    %98 = vector.shape_cast %97 : vector<1x160x120xf32> to vector<160x120xf32>
    %cst_114 = arith.constant dense<0.000000e+00> : vector<1x120xf32>
    %99 = tpu.matmul %96, %98, %cst_114 {dimension_numbers = #tpu.dot_dimension_numbers<[1], [0], [0], [1], [0, 0, 1, 1], [], []>} : vector<1x160xf32>, vector<160x120xf32>, vector<1x120xf32> -> vector<1x120xf32>
    %100 = arith.addf %95, %99 : vector<1x120xf32>
    %c0_115 = arith.constant 0 : index
    %c0_116 = arith.constant 0 : index
    %101 = vector.load %arg6[%c0_115, %c0_116] : memref<1x120xf32, #tpu.memory_space<vmem>>, vector<1x120xf32>
    %102 = arith.addf %100, %101 : vector<1x120xf32>
    %c0_117 = arith.constant 0 : index
    %c0_118 = arith.constant 0 : index
    %103 = vector.load %arg7[%c0_117, %c0_118] : memref<120x84xf32, #tpu.memory_space<vmem>>, vector<120x84xf32>
    %cst_119 = arith.constant dense<0.000000e+00> : vector<1x84xf32>
    %104 = tpu.matmul %102, %103, %cst_119 {dimension_numbers = #tpu.dot_dimension_numbers<[1], [0], [0], [1], [0, 0, 1, 1], [], []>} : vector<1x120xf32>, vector<120x84xf32>, vector<1x84xf32> -> vector<1x84xf32>
    %c0_120 = arith.constant 0 : index
    %c0_121 = arith.constant 0 : index
    %105 = vector.load %arg8[%c0_120, %c0_121] : memref<1x84xf32, #tpu.memory_space<vmem>>, vector<1x84xf32>
    %106 = arith.addf %104, %105 : vector<1x84xf32>
    %c0_122 = arith.constant 0 : index
    %c0_123 = arith.constant 0 : index
    %107 = vector.load %arg9[%c0_122, %c0_123] : memref<84x10xf32, #tpu.memory_space<vmem>>, vector<84x10xf32>
    %cst_124 = arith.constant dense<0.000000e+00> : vector<1x10xf32>
    %108 = tpu.matmul %106, %107, %cst_124 {dimension_numbers = #tpu.dot_dimension_numbers<[1], [0], [0], [1], [0, 0, 1, 1], [], []>} : vector<1x84xf32>, vector<84x10xf32>, vector<1x10xf32> -> vector<1x10xf32>
    %c0_125 = arith.constant 0 : index
    %c0_126 = arith.constant 0 : index
    %109 = vector.load %arg10[%c0_125, %c0_126] : memref<1x10xf32, #tpu.memory_space<vmem>>, vector<1x10xf32>
    %110 = arith.addf %108, %109 : vector<1x10xf32>
    %c0_127 = arith.constant 0 : index
    %c0_128 = arith.constant 0 : index
    %111 = vector.load %arg17[%c0_127, %c0_128] : memref<2x10xf32, #tpu.memory_space<vmem>>, vector<1x10xf32>
    tpu.vector_store %arg17[%c0_127, %c0_128], %110 {strides = array<i32>} : memref<2x10xf32, #tpu.memory_space<vmem>>, vector<1x10xf32>,
    %c1_129 = arith.constant 1 : index
    %c0_130 = arith.constant 0 : index
    %c0_131 = arith.constant 0 : index
    %112 = vector.load %arg0[%c1_129, %c0_130, %c0_131] : memref<2x32x32xf32, #tpu.memory_space<vmem>>, vector<1x28x32xf32>
    %113 = vector.shape_cast %112 : vector<1x28x32xf32> to vector<28x32xf32>
    %c0_132 = arith.constant 0 : index
    %c0_133 = arith.constant 0 : index
    %c0_134 = arith.constant 0 : index
    %114 = vector.load %arg1[%c0_132, %c0_133, %c0_134] : memref<5x32x168xf32, #tpu.memory_space<vmem>>, vector<1x32x168xf32>
    %115 = vector.shape_cast %114 : vector<1x32x168xf32> to vector<32x168xf32>
    %cst_135 = arith.constant dense<0.000000e+00> : vector<28x168xf32>
    %116 = tpu.matmul %113, %115, %cst_135 {dimension_numbers = #tpu.dot_dimension_numbers<[1], [0], [0], [1], [0, 0, 1, 1], [], []>} : vector<28x32xf32>, vector<32x168xf32>, vector<28x168xf32> -> vector<28x168xf32>
    %c1_136 = arith.constant 1 : index
    %c1_137 = arith.constant 1 : index
    %c0_138 = arith.constant 0 : index
    %117 = vector.load %arg0[%c1_136, %c1_137, %c0_138] : memref<2x32x32xf32, #tpu.memory_space<vmem>>, vector<1x28x32xf32>
    %118 = vector.shape_cast %117 : vector<1x28x32xf32> to vector<28x32xf32>
    %c1_139 = arith.constant 1 : index
    %c0_140 = arith.constant 0 : index
    %c0_141 = arith.constant 0 : index
    %119 = vector.load %arg1[%c1_139, %c0_140, %c0_141] : memref<5x32x168xf32, #tpu.memory_space<vmem>>, vector<1x32x168xf32>
    %120 = vector.shape_cast %119 : vector<1x32x168xf32> to vector<32x168xf32>
    %cst_142 = arith.constant dense<0.000000e+00> : vector<28x168xf32>
    %121 = tpu.matmul %118, %120, %cst_142 {dimension_numbers = #tpu.dot_dimension_numbers<[1], [0], [0], [1], [0, 0, 1, 1], [], []>} : vector<28x32xf32>, vector<32x168xf32>, vector<28x168xf32> -> vector<28x168xf32>
    %122 = arith.addf %116, %121 : vector<28x168xf32>
    %c1_143 = arith.constant 1 : index
    %c2_144 = arith.constant 2 : index
    %c0_145 = arith.constant 0 : index
    %123 = vector.load %arg0[%c1_143, %c2_144, %c0_145] : memref<2x32x32xf32, #tpu.memory_space<vmem>>, vector<1x28x32xf32>
    %124 = vector.shape_cast %123 : vector<1x28x32xf32> to vector<28x32xf32>
    %c2_146 = arith.constant 2 : index
    %c0_147 = arith.constant 0 : index
    %c0_148 = arith.constant 0 : index
    %125 = vector.load %arg1[%c2_146, %c0_147, %c0_148] : memref<5x32x168xf32, #tpu.memory_space<vmem>>, vector<1x32x168xf32>
    %126 = vector.shape_cast %125 : vector<1x32x168xf32> to vector<32x168xf32>
    %cst_149 = arith.constant dense<0.000000e+00> : vector<28x168xf32>
    %127 = tpu.matmul %124, %126, %cst_149 {dimension_numbers = #tpu.dot_dimension_numbers<[1], [0], [0], [1], [0, 0, 1, 1], [], []>} : vector<28x32xf32>, vector<32x168xf32>, vector<28x168xf32> -> vector<28x168xf32>
    %128 = arith.addf %122, %127 : vector<28x168xf32>
    %c1_150 = arith.constant 1 : index
    %c3_151 = arith.constant 3 : index
    %c0_152 = arith.constant 0 : index
    %129 = vector.load %arg0[%c1_150, %c3_151, %c0_152] : memref<2x32x32xf32, #tpu.memory_space<vmem>>, vector<1x28x32xf32>
    %130 = vector.shape_cast %129 : vector<1x28x32xf32> to vector<28x32xf32>
    %c3_153 = arith.constant 3 : index
    %c0_154 = arith.constant 0 : index
    %c0_155 = arith.constant 0 : index
    %131 = vector.load %arg1[%c3_153, %c0_154, %c0_155] : memref<5x32x168xf32, #tpu.memory_space<vmem>>, vector<1x32x168xf32>
    %132 = vector.shape_cast %131 : vector<1x32x168xf32> to vector<32x168xf32>
    %cst_156 = arith.constant dense<0.000000e+00> : vector<28x168xf32>
    %133 = tpu.matmul %130, %132, %cst_156 {dimension_numbers = #tpu.dot_dimension_numbers<[1], [0], [0], [1], [0, 0, 1, 1], [], []>} : vector<28x32xf32>, vector<32x168xf32>, vector<28x168xf32> -> vector<28x168xf32>
    %134 = arith.addf %128, %133 : vector<28x168xf32>
    %c1_157 = arith.constant 1 : index
    %c4_158 = arith.constant 4 : index
    %c0_159 = arith.constant 0 : index
    %135 = vector.load %arg0[%c1_157, %c4_158, %c0_159] : memref<2x32x32xf32, #tpu.memory_space<vmem>>, vector<1x28x32xf32>
    %136 = vector.shape_cast %135 : vector<1x28x32xf32> to vector<28x32xf32>
    %c4_160 = arith.constant 4 : index
    %c0_161 = arith.constant 0 : index
    %c0_162 = arith.constant 0 : index
    %137 = vector.load %arg1[%c4_160, %c0_161, %c0_162] : memref<5x32x168xf32, #tpu.memory_space<vmem>>, vector<1x32x168xf32>
    %138 = vector.shape_cast %137 : vector<1x32x168xf32> to vector<32x168xf32>
    %cst_163 = arith.constant dense<0.000000e+00> : vector<28x168xf32>
    %139 = tpu.matmul %136, %138, %cst_163 {dimension_numbers = #tpu.dot_dimension_numbers<[1], [0], [0], [1], [0, 0, 1, 1], [], []>} : vector<28x32xf32>, vector<32x168xf32>, vector<28x168xf32> -> vector<28x168xf32>
    %140 = arith.addf %134, %139 : vector<28x168xf32>
    %c0_164 = arith.constant 0 : index
    %c0_165 = arith.constant 0 : index
    %141 = vector.load %arg2[%c0_164, %c0_165] : memref<1x168xf32, #tpu.memory_space<vmem>>, vector<1x168xf32>
    %142 = vector.broadcast %141 : vector<1x168xf32> to vector<28x168xf32>
    %143 = arith.addf %140, %142 : vector<28x168xf32>
    %c0_166 = arith.constant 0 : index
    %c0_167 = arith.constant 0 : index
    %144 = vector.load %arg11[%c0_166, %c0_167] : memref<14x28xf32, #tpu.memory_space<vmem>>, vector<14x28xf32>
    %cst_168 = arith.constant dense<0.000000e+00> : vector<14x168xf32>
    %145 = tpu.matmul %144, %143, %cst_168 {dimension_numbers = #tpu.dot_dimension_numbers<[1], [0], [0], [1], [0, 0, 1, 1], [], []>} : vector<14x28xf32>, vector<28x168xf32>, vector<14x168xf32> -> vector<14x168xf32>
    %c0_169 = arith.constant 0 : index
    %c0_170 = arith.constant 0 : index
    %146 = vector.load %arg12[%c0_169, %c0_170] : memref<14x28xf32, #tpu.memory_space<vmem>>, vector<14x28xf32>
    %cst_171 = arith.constant dense<0.000000e+00> : vector<14x168xf32>
    %147 = tpu.matmul %146, %143, %cst_171 {dimension_numbers = #tpu.dot_dimension_numbers<[1], [0], [0], [1], [0, 0, 1, 1], [], []>} : vector<14x28xf32>, vector<28x168xf32>, vector<14x168xf32> -> vector<14x168xf32>
    %148 = arith.maximumf %145, %147 : vector<14x168xf32>
    %c0_172 = arith.constant 0 : index
    %c0_173 = arith.constant 0 : index
    %149 = vector.load %arg13[%c0_172, %c0_173] : memref<168x168xf32, #tpu.memory_space<vmem>>, vector<168x168xf32>
    %cst_174 = arith.constant dense<0.000000e+00> : vector<14x168xf32>
    %150 = tpu.matmul %148, %149, %cst_174 {dimension_numbers = #tpu.dot_dimension_numbers<[1], [0], [0], [1], [0, 0, 1, 1], [], []>} : vector<14x168xf32>, vector<168x168xf32>, vector<14x168xf32> -> vector<14x168xf32>
    %151 = arith.maximumf %148, %150 : vector<14x168xf32>
    %c0_175 = arith.constant 0 : index
    %c0_176 = arith.constant 0 : index
    %152 = vector.load %arg18[%c0_175, %c0_176] : memref<14x168xf32, #tpu.memory_space<vmem>>, vector<14x168xf32>
    tpu.vector_store %arg18[%c0_175, %c0_176], %151 {strides = array<i32>} : memref<14x168xf32, #tpu.memory_space<vmem>>, vector<14x168xf32>,
    %c0_177 = arith.constant 0 : index
    %c0_178 = arith.constant 0 : index
    %153 = vector.load %arg18[%c0_177, %c0_178] : memref<14x168xf32, #tpu.memory_space<vmem>>, vector<10x168xf32>
    %c0_179 = arith.constant 0 : index
    %c0_180 = arith.constant 0 : index
    %c0_181 = arith.constant 0 : index
    %154 = vector.load %arg3[%c0_179, %c0_180, %c0_181] : memref<5x168x160xf32, #tpu.memory_space<vmem>>, vector<1x168x160xf32>
    %155 = vector.shape_cast %154 : vector<1x168x160xf32> to vector<168x160xf32>
    %cst_182 = arith.constant dense<0.000000e+00> : vector<10x160xf32>
    %156 = tpu.matmul %153, %155, %cst_182 {dimension_numbers = #tpu.dot_dimension_numbers<[1], [0], [0], [1], [0, 0, 1, 1], [], []>} : vector<10x168xf32>, vector<168x160xf32>, vector<10x160xf32> -> vector<10x160xf32>
    %c1_183 = arith.constant 1 : index
    %c0_184 = arith.constant 0 : index
    %157 = vector.load %arg18[%c1_183, %c0_184] : memref<14x168xf32, #tpu.memory_space<vmem>>, vector<10x168xf32>
    %c1_185 = arith.constant 1 : index
    %c0_186 = arith.constant 0 : index
    %c0_187 = arith.constant 0 : index
    %158 = vector.load %arg3[%c1_185, %c0_186, %c0_187] : memref<5x168x160xf32, #tpu.memory_space<vmem>>, vector<1x168x160xf32>
    %159 = vector.shape_cast %158 : vector<1x168x160xf32> to vector<168x160xf32>
    %cst_188 = arith.constant dense<0.000000e+00> : vector<10x160xf32>
    %160 = tpu.matmul %157, %159, %cst_188 {dimension_numbers = #tpu.dot_dimension_numbers<[1], [0], [0], [1], [0, 0, 1, 1], [], []>} : vector<10x168xf32>, vector<168x160xf32>, vector<10x160xf32> -> vector<10x160xf32>
    %161 = arith.addf %156, %160 : vector<10x160xf32>
    %c2_189 = arith.constant 2 : index
    %c0_190 = arith.constant 0 : index
    %162 = vector.load %arg18[%c2_189, %c0_190] : memref<14x168xf32, #tpu.memory_space<vmem>>, vector<10x168xf32>
    %c2_191 = arith.constant 2 : index
    %c0_192 = arith.constant 0 : index
    %c0_193 = arith.constant 0 : index
    %163 = vector.load %arg3[%c2_191, %c0_192, %c0_193] : memref<5x168x160xf32, #tpu.memory_space<vmem>>, vector<1x168x160xf32>
    %164 = vector.shape_cast %163 : vector<1x168x160xf32> to vector<168x160xf32>
    %cst_194 = arith.constant dense<0.000000e+00> : vector<10x160xf32>
    %165 = tpu.matmul %162, %164, %cst_194 {dimension_numbers = #tpu.dot_dimension_numbers<[1], [0], [0], [1], [0, 0, 1, 1], [], []>} : vector<10x168xf32>, vector<168x160xf32>, vector<10x160xf32> -> vector<10x160xf32>
    %166 = arith.addf %161, %165 : vector<10x160xf32>
    %c3_195 = arith.constant 3 : index
    %c0_196 = arith.constant 0 : index
    %167 = vector.load %arg18[%c3_195, %c0_196] : memref<14x168xf32, #tpu.memory_space<vmem>>, vector<10x168xf32>
    %c3_197 = arith.constant 3 : index
    %c0_198 = arith.constant 0 : index
    %c0_199 = arith.constant 0 : index
    %168 = vector.load %arg3[%c3_197, %c0_198, %c0_199] : memref<5x168x160xf32, #tpu.memory_space<vmem>>, vector<1x168x160xf32>
    %169 = vector.shape_cast %168 : vector<1x168x160xf32> to vector<168x160xf32>
    %cst_200 = arith.constant dense<0.000000e+00> : vector<10x160xf32>
    %170 = tpu.matmul %167, %169, %cst_200 {dimension_numbers = #tpu.dot_dimension_numbers<[1], [0], [0], [1], [0, 0, 1, 1], [], []>} : vector<10x168xf32>, vector<168x160xf32>, vector<10x160xf32> -> vector<10x160xf32>
    %171 = arith.addf %166, %170 : vector<10x160xf32>
    %c4_201 = arith.constant 4 : index
    %c0_202 = arith.constant 0 : index
    %172 = vector.load %arg18[%c4_201, %c0_202] : memref<14x168xf32, #tpu.memory_space<vmem>>, vector<10x168xf32>
    %c4_203 = arith.constant 4 : index
    %c0_204 = arith.constant 0 : index
    %c0_205 = arith.constant 0 : index
    %173 = vector.load %arg3[%c4_203, %c0_204, %c0_205] : memref<5x168x160xf32, #tpu.memory_space<vmem>>, vector<1x168x160xf32>
    %174 = vector.shape_cast %173 : vector<1x168x160xf32> to vector<168x160xf32>
    %cst_206 = arith.constant dense<0.000000e+00> : vector<10x160xf32>
    %175 = tpu.matmul %172, %174, %cst_206 {dimension_numbers = #tpu.dot_dimension_numbers<[1], [0], [0], [1], [0, 0, 1, 1], [], []>} : vector<10x168xf32>, vector<168x160xf32>, vector<10x160xf32> -> vector<10x160xf32>
    %176 = arith.addf %171, %175 : vector<10x160xf32>
    %c0_207 = arith.constant 0 : index
    %c0_208 = arith.constant 0 : index
    %177 = vector.load %arg4[%c0_207, %c0_208] : memref<1x160xf32, #tpu.memory_space<vmem>>, vector<1x160xf32>
    %178 = vector.broadcast %177 : vector<1x160xf32> to vector<10x160xf32>
    %179 = arith.addf %176, %178 : vector<10x160xf32>
    %c0_209 = arith.constant 0 : index
    %c0_210 = arith.constant 0 : index
    %180 = vector.load %arg14[%c0_209, %c0_210] : memref<5x10xf32, #tpu.memory_space<vmem>>, vector<5x10xf32>
    %cst_211 = arith.constant dense<0.000000e+00> : vector<5x160xf32>
    %181 = tpu.matmul %180, %179, %cst_211 {dimension_numbers = #tpu.dot_dimension_numbers<[1], [0], [0], [1], [0, 0, 1, 1], [], []>} : vector<5x10xf32>, vector<10x160xf32>, vector<5x160xf32> -> vector<5x160xf32>
    %c0_212 = arith.constant 0 : index
    %c0_213 = arith.constant 0 : index
    %182 = vector.load %arg15[%c0_212, %c0_213] : memref<5x10xf32, #tpu.memory_space<vmem>>, vector<5x10xf32>
    %cst_214 = arith.constant dense<0.000000e+00> : vector<5x160xf32>
    %183 = tpu.matmul %182, %179, %cst_214 {dimension_numbers = #tpu.dot_dimension_numbers<[1], [0], [0], [1], [0, 0, 1, 1], [], []>} : vector<5x10xf32>, vector<10x160xf32>, vector<5x160xf32> -> vector<5x160xf32>
    %184 = arith.maximumf %181, %183 : vector<5x160xf32>
    %c0_215 = arith.constant 0 : index
    %c0_216 = arith.constant 0 : index
    %185 = vector.load %arg16[%c0_215, %c0_216] : memref<160x160xf32, #tpu.memory_space<vmem>>, vector<160x160xf32>
    %cst_217 = arith.constant dense<0.000000e+00> : vector<5x160xf32>
    %186 = tpu.matmul %184, %185, %cst_217 {dimension_numbers = #tpu.dot_dimension_numbers<[1], [0], [0], [1], [0, 0, 1, 1], [], []>} : vector<5x160xf32>, vector<160x160xf32>, vector<5x160xf32> -> vector<5x160xf32>
    %187 = arith.maximumf %184, %186 : vector<5x160xf32>
    %c0_218 = arith.constant 0 : index
    %c0_219 = arith.constant 0 : index
    %188 = vector.load %arg19[%c0_218, %c0_219] : memref<5x160xf32, #tpu.memory_space<vmem>>, vector<5x160xf32>
    tpu.vector_store %arg19[%c0_218, %c0_219], %187 {strides = array<i32>} : memref<5x160xf32, #tpu.memory_space<vmem>>, vector<5x160xf32>,
    %c0_220 = arith.constant 0 : index
    %c0_221 = arith.constant 0 : index
    %189 = vector.load %arg19[%c0_220, %c0_221] : memref<5x160xf32, #tpu.memory_space<vmem>>, vector<1x160xf32>
    %c0_222 = arith.constant 0 : index
    %c0_223 = arith.constant 0 : index
    %c0_224 = arith.constant 0 : index
    %190 = vector.load %arg5[%c0_222, %c0_223, %c0_224] : memref<5x160x120xf32, #tpu.memory_space<vmem>>, vector<1x160x120xf32>
    %191 = vector.shape_cast %190 : vector<1x160x120xf32> to vector<160x120xf32>
    %cst_225 = arith.constant dense<0.000000e+00> : vector<1x120xf32>
    %192 = tpu.matmul %189, %191, %cst_225 {dimension_numbers = #tpu.dot_dimension_numbers<[1], [0], [0], [1], [0, 0, 1, 1], [], []>} : vector<1x160xf32>, vector<160x120xf32>, vector<1x120xf32> -> vector<1x120xf32>
    %c1_226 = arith.constant 1 : index
    %c0_227 = arith.constant 0 : index
    %193 = vector.load %arg19[%c1_226, %c0_227] : memref<5x160xf32, #tpu.memory_space<vmem>>, vector<1x160xf32>
    %c1_228 = arith.constant 1 : index
    %c0_229 = arith.constant 0 : index
    %c0_230 = arith.constant 0 : index
    %194 = vector.load %arg5[%c1_228, %c0_229, %c0_230] : memref<5x160x120xf32, #tpu.memory_space<vmem>>, vector<1x160x120xf32>
    %195 = vector.shape_cast %194 : vector<1x160x120xf32> to vector<160x120xf32>
    %cst_231 = arith.constant dense<0.000000e+00> : vector<1x120xf32>
    %196 = tpu.matmul %193, %195, %cst_231 {dimension_numbers = #tpu.dot_dimension_numbers<[1], [0], [0], [1], [0, 0, 1, 1], [], []>} : vector<1x160xf32>, vector<160x120xf32>, vector<1x120xf32> -> vector<1x120xf32>
    %197 = arith.addf %192, %196 : vector<1x120xf32>
    %c2_232 = arith.constant 2 : index
    %c0_233 = arith.constant 0 : index
    %198 = vector.load %arg19[%c2_232, %c0_233] : memref<5x160xf32, #tpu.memory_space<vmem>>, vector<1x160xf32>
    %c2_234 = arith.constant 2 : index
    %c0_235 = arith.constant 0 : index
    %c0_236 = arith.constant 0 : index
    %199 = vector.load %arg5[%c2_234, %c0_235, %c0_236] : memref<5x160x120xf32, #tpu.memory_space<vmem>>, vector<1x160x120xf32>
    %200 = vector.shape_cast %199 : vector<1x160x120xf32> to vector<160x120xf32>
    %cst_237 = arith.constant dense<0.000000e+00> : vector<1x120xf32>
    %201 = tpu.matmul %198, %200, %cst_237 {dimension_numbers = #tpu.dot_dimension_numbers<[1], [0], [0], [1], [0, 0, 1, 1], [], []>} : vector<1x160xf32>, vector<160x120xf32>, vector<1x120xf32> -> vector<1x120xf32>
    %202 = arith.addf %197, %201 : vector<1x120xf32>
    %c3_238 = arith.constant 3 : index
    %c0_239 = arith.constant 0 : index
    %203 = vector.load %arg19[%c3_238, %c0_239] : memref<5x160xf32, #tpu.memory_space<vmem>>, vector<1x160xf32>
    %c3_240 = arith.constant 3 : index
    %c0_241 = arith.constant 0 : index
    %c0_242 = arith.constant 0 : index
    %204 = vector.load %arg5[%c3_240, %c0_241, %c0_242] : memref<5x160x120xf32, #tpu.memory_space<vmem>>, vector<1x160x120xf32>
    %205 = vector.shape_cast %204 : vector<1x160x120xf32> to vector<160x120xf32>
    %cst_243 = arith.constant dense<0.000000e+00> : vector<1x120xf32>
    %206 = tpu.matmul %203, %205, %cst_243 {dimension_numbers = #tpu.dot_dimension_numbers<[1], [0], [0], [1], [0, 0, 1, 1], [], []>} : vector<1x160xf32>, vector<160x120xf32>, vector<1x120xf32> -> vector<1x120xf32>
    %207 = arith.addf %202, %206 : vector<1x120xf32>
    %c4_244 = arith.constant 4 : index
    %c0_245 = arith.constant 0 : index
    %208 = vector.load %arg19[%c4_244, %c0_245] : memref<5x160xf32, #tpu.memory_space<vmem>>, vector<1x160xf32>
    %c4_246 = arith.constant 4 : index
    %c0_247 = arith.constant 0 : index
    %c0_248 = arith.constant 0 : index
    %209 = vector.load %arg5[%c4_246, %c0_247, %c0_248] : memref<5x160x120xf32, #tpu.memory_space<vmem>>, vector<1x160x120xf32>
    %210 = vector.shape_cast %209 : vector<1x160x120xf32> to vector<160x120xf32>
    %cst_249 = arith.constant dense<0.000000e+00> : vector<1x120xf32>
    %211 = tpu.matmul %208, %210, %cst_249 {dimension_numbers = #tpu.dot_dimension_numbers<[1], [0], [0], [1], [0, 0, 1, 1], [], []>} : vector<1x160xf32>, vector<160x120xf32>, vector<1x120xf32> -> vector<1x120xf32>
    %212 = arith.addf %207, %211 : vector<1x120xf32>
    %c0_250 = arith.constant 0 : index
    %c0_251 = arith.constant 0 : index
    %213 = vector.load %arg6[%c0_250, %c0_251] : memref<1x120xf32, #tpu.memory_space<vmem>>, vector<1x120xf32>
    %214 = arith.addf %212, %213 : vector<1x120xf32>
    %c0_252 = arith.constant 0 : index
    %c0_253 = arith.constant 0 : index
    %215 = vector.load %arg7[%c0_252, %c0_253] : memref<120x84xf32, #tpu.memory_space<vmem>>, vector<120x84xf32>
    %cst_254 = arith.constant dense<0.000000e+00> : vector<1x84xf32>
    %216 = tpu.matmul %214, %215, %cst_254 {dimension_numbers = #tpu.dot_dimension_numbers<[1], [0], [0], [1], [0, 0, 1, 1], [], []>} : vector<1x120xf32>, vector<120x84xf32>, vector<1x84xf32> -> vector<1x84xf32>
    %c0_255 = arith.constant 0 : index
    %c0_256 = arith.constant 0 : index
    %217 = vector.load %arg8[%c0_255, %c0_256] : memref<1x84xf32, #tpu.memory_space<vmem>>, vector<1x84xf32>
    %218 = arith.addf %216, %217 : vector<1x84xf32>
    %c0_257 = arith.constant 0 : index
    %c0_258 = arith.constant 0 : index
    %219 = vector.load %arg9[%c0_257, %c0_258] : memref<84x10xf32, #tpu.memory_space<vmem>>, vector<84x10xf32>
    %cst_259 = arith.constant dense<0.000000e+00> : vector<1x10xf32>
    %220 = tpu.matmul %218, %219, %cst_259 {dimension_numbers = #tpu.dot_dimension_numbers<[1], [0], [0], [1], [0, 0, 1, 1], [], []>} : vector<1x84xf32>, vector<84x10xf32>, vector<1x10xf32> -> vector<1x10xf32>
    %c0_260 = arith.constant 0 : index
    %c0_261 = arith.constant 0 : index
    %221 = vector.load %arg10[%c0_260, %c0_261] : memref<1x10xf32, #tpu.memory_space<vmem>>, vector<1x10xf32>
    %222 = arith.addf %220, %221 : vector<1x10xf32>
    %c1_262 = arith.constant 1 : index
    %c0_263 = arith.constant 0 : index
    %223 = vector.load %arg17[%c1_262, %c0_263] : memref<2x10xf32, #tpu.memory_space<vmem>>, vector<1x10xf32>
    tpu.vector_store %arg17[%c1_262, %c0_263], %222 {strides = array<i32>} : memref<2x10xf32, #tpu.memory_space<vmem>>, vector<1x10xf32>,
    return
  }
}

</mosaic_0001>

<llo_original>
// kernel: lenet5_forward.1
$region0: #{lenet5_forward.1}
  #allocation0 [shape = 'u32[]', space=smem, size = 0x4, offset = 0x4, fixed_abs, tag = 'smem constant byte address 0x4 - core index']
  #allocation1 [shape = 'u32[144,128]{1,0:T(1,128)}', space=vmem, size = 0x12000, scoped, tag = 'internal scratch']
  #allocation2 [shape = 'f32[14,168]{1,0:T(8,128)}', space=vmem, size = 0x4000, scoped, tag = 'scratch operand']
  #allocation3 [shape = 'f32[5,160]{1,0:T(8,128)}', space=vmem, size = 0x2000, scoped, tag = 'scratch operand']
  %s0 = inlined_call_operand.vmem [shape: f32[2,32,32], index: 0, kind: input, shape index: {}]
  %s1 = inlined_call_operand.vmem [shape: f32[5,32,168], index: 1, kind: input, shape index: {}]
  %s2 = inlined_call_operand.vmem [shape: f32[1,168], index: 2, kind: input, shape index: {}]
  %s3 = inlined_call_operand.vmem [shape: f32[5,168,160], index: 3, kind: input, shape index: {}]
  %s4 = inlined_call_operand.vmem [shape: f32[1,160], index: 4, kind: input, shape index: {}]
  %s5 = inlined_call_operand.vmem [shape: f32[5,160,120], index: 5, kind: input, shape index: {}]
  %s6 = inlined_call_operand.vmem [shape: f32[1,120], index: 6, kind: input, shape index: {}]
  %s7 = inlined_call_operand.vmem [shape: f32[120,84], index: 7, kind: input, shape index: {}]
  %s8 = inlined_call_operand.vmem [shape: f32[1,84], index: 8, kind: input, shape index: {}]
  %s9 = inlined_call_operand.vmem [shape: f32[84,10], index: 9, kind: input, shape index: {}]
  %s10 = inlined_call_operand.vmem [shape: f32[1,10], index: 10, kind: input, shape index: {}]
  %s11 = inlined_call_operand.vmem [shape: f32[14,28], index: 11, kind: input, shape index: {}]
  %s12 = inlined_call_operand.vmem [shape: f32[14,28], index: 12, kind: input, shape index: {}]
  %s13 = inlined_call_operand.vmem [shape: f32[168,168], index: 13, kind: input, shape index: {}]
  %s14 = inlined_call_operand.vmem [shape: f32[5,10], index: 14, kind: input, shape index: {}]
  %s15 = inlined_call_operand.vmem [shape: f32[5,10], index: 15, kind: input, shape index: {}]
  %s16 = inlined_call_operand.vmem [shape: f32[160,160], index: 16, kind: input, shape index: {}]
  %s17 = inlined_call_operand.hbm [shape: f32[2,10], index: 17, kind: output, shape index: {}]
  %s18 = sld [smem:[#allocation0]]
  $region78: #{lenet5_forward.1} parent=0
    _
  %s20 = ssub.s32 1, %s18
  %s21 = scalar_select 0, %s20, %s18
  $region1: #{lenet5_forward.1} parent=0
    #allocation4 [shape = 'u8[1024]{0}', space=vmem, size = 0x400, scoped, tag = 'output window, operand 0, single buffered']
    #allocation5 [shape = 's32[1]{0}', space=sflag, size = 0x4, scoped, tag = 'scoped memory for lenet5_forward.1']
    %22 = vsyncpa [#allocation5], 0
    // Predicated region
    $region2: #{lenet5_forward.1} parent=1 // pred_check
      _
    $region3: #{lenet5_forward.1} parent=1 // pred_check_branch
      %24 = sbr.rel (0) target = $region5
    $region4: #{lenet5_forward.1} parent=1 // pred_region
      _
    $region5: #{lenet5_forward.1} parent=1 // pred_fallthru
      _
    // Predicated region
    $region6: #{lenet5_forward.1} parent=1 // pred_check
      _
    $region7: #{lenet5_forward.1} parent=1 // pred_check_branch
      %26 = sbr.rel (0) target = $region9
    $region8: #{lenet5_forward.1} parent=1 // pred_region
      _
    $region9: #{lenet5_forward.1} parent=1 // pred_fallthru
      _
    // Predicated region
    $region10: #{lenet5_forward.1} parent=1 // pred_check
      _
    $region11: #{lenet5_forward.1} parent=1 // pred_check_branch
      %28 = sbr.rel (0) target = $region13
    $region12: #{lenet5_forward.1} parent=1 // pred_region
      _
    $region13: #{lenet5_forward.1} parent=1 // pred_fallthru
      _
    // Predicated region
    $region14: #{lenet5_forward.1} parent=1 // pred_check
      _
    $region15: #{lenet5_forward.1} parent=1 // pred_check_branch
      %30 = sbr.rel (0) target = $region17
    $region16: #{lenet5_forward.1} parent=1 // pred_region
      _
    $region17: #{lenet5_forward.1} parent=1 // pred_fallthru
      _
    // Predicated region
    $region18: #{lenet5_forward.1} parent=1 // pred_check
      _
    $region19: #{lenet5_forward.1} parent=1 // pred_check_branch
      %32 = sbr.rel (0) target = $region21
    $region20: #{lenet5_forward.1} parent=1 // pred_region
      _
    $region21: #{lenet5_forward.1} parent=1 // pred_fallthru
      _
    // Predicated region
    $region22: #{lenet5_forward.1} parent=1 // pred_check
      _
    $region23: #{lenet5_forward.1} parent=1 // pred_check_branch
      %34 = sbr.rel (0) target = $region25
    $region24: #{lenet5_forward.1} parent=1 // pred_region
      _
    $region25: #{lenet5_forward.1} parent=1 // pred_fallthru
      _
    // Predicated region
    $region26: #{lenet5_forward.1} parent=1 // pred_check
      _
    $region27: #{lenet5_forward.1} parent=1 // pred_check_branch
      %36 = sbr.rel (0) target = $region29
    $region28: #{lenet5_forward.1} parent=1 // pred_region
      _
    $region29: #{lenet5_forward.1} parent=1 // pred_fallthru
      _
    // Predicated region
    $region30: #{lenet5_forward.1} parent=1 // pred_check
      _
    $region31: #{lenet5_forward.1} parent=1 // pred_check_branch
      %38 = sbr.rel (0) target = $region33
    $region32: #{lenet5_forward.1} parent=1 // pred_region
      _
    $region33: #{lenet5_forward.1} parent=1 // pred_fallthru
      _
    // Predicated region
    $region34: #{lenet5_forward.1} parent=1 // pred_check
      _
    $region35: #{lenet5_forward.1} parent=1 // pred_check_branch
      %40 = sbr.rel (0) target = $region37
    $region36: #{lenet5_forward.1} parent=1 // pred_region
      _
    $region37: #{lenet5_forward.1} parent=1 // pred_fallthru
      _
    // Predicated region
    $region38: #{lenet5_forward.1} parent=1 // pred_check
      _
    $region39: #{lenet5_forward.1} parent=1 // pred_check_branch
      %42 = sbr.rel (0) target = $region41
    $region40: #{lenet5_forward.1} parent=1 // pred_region
      _
    $region41: #{lenet5_forward.1} parent=1 // pred_fallthru
      _
    // Predicated region
    $region42: #{lenet5_forward.1} parent=1 // pred_check
      _
    $region43: #{lenet5_forward.1} parent=1 // pred_check_branch
      %44 = sbr.rel (0) target = $region45
    $region44: #{lenet5_forward.1} parent=1 // pred_region
      _
    $region45: #{lenet5_forward.1} parent=1 // pred_fallthru
      _
    // Predicated region
    $region46: #{lenet5_forward.1} parent=1 // pred_check
      _
    $region47: #{lenet5_forward.1} parent=1 // pred_check_branch
      %46 = sbr.rel (0) target = $region49
    $region48: #{lenet5_forward.1} parent=1 // pred_region
      _
    $region49: #{lenet5_forward.1} parent=1 // pred_fallthru
      _
    // Predicated region
    $region50: #{lenet5_forward.1} parent=1 // pred_check
      _
    $region51: #{lenet5_forward.1} parent=1 // pred_check_branch
      %48 = sbr.rel (0) target = $region53
    $region52: #{lenet5_forward.1} parent=1 // pred_region
      _
    $region53: #{lenet5_forward.1} parent=1 // pred_fallthru
      _
    // Predicated region
    $region54: #{lenet5_forward.1} parent=1 // pred_check
      _
    $region55: #{lenet5_forward.1} parent=1 // pred_check_branch
      %50 = sbr.rel (0) target = $region57
    $region56: #{lenet5_forward.1} parent=1 // pred_region
      _
    $region57: #{lenet5_forward.1} parent=1 // pred_fallthru
      _
    // Predicated region
    $region58: #{lenet5_forward.1} parent=1 // pred_check
      _
    $region59: #{lenet5_forward.1} parent=1 // pred_check_branch
      %52 = sbr.rel (0) target = $region61
    $region60: #{lenet5_forward.1} parent=1 // pred_region
      _
    $region61: #{lenet5_forward.1} parent=1 // pred_fallthru
      _
    // Predicated region
    $region62: #{lenet5_forward.1} parent=1 // pred_check
      _
    $region63: #{lenet5_forward.1} parent=1 // pred_check_branch
      %54 = sbr.rel (0) target = $region65
    $region64: #{lenet5_forward.1} parent=1 // pred_region
      _
    $region65: #{lenet5_forward.1} parent=1 // pred_fallthru
      _
    // Predicated region
    $region66: #{lenet5_forward.1} parent=1 // pred_check
      _
    $region67: #{lenet5_forward.1} parent=1 // pred_check_branch
      %56 = sbr.rel (0) target = $region69
    $region68: #{lenet5_forward.1} parent=1 // pred_region
      _
    $region69: #{lenet5_forward.1} parent=1 // pred_fallthru
      _
    %v57 = vld [vmem:[%s0] sm:$0xff]
    %v58 = vld [vmem:[%s0 + $0x8] sm:$0xff]
    %v59 = vld [vmem:[%s0 + $0x10] sm:$0xff]
    %v60 = vld [vmem:[%s0 + $0x18] sm:$0xf]
    %v61 = vld [vmem:[%s1] sm:$0xff]
    %v62 = vld [vmem:[%s1 + $0x8] sm:$0xff]
    %v63 = vld [vmem:[%s1 + $0x10] sm:$0xff]
    %v64 = vld [vmem:[%s1 + $0x18] sm:$0xff]
    %v65 = vld [vmem:[%s1 + $0x20] sm:$0xff]
    %v66 = vld [vmem:[%s1 + $0x28] sm:$0xff]
    %v67 = vld [vmem:[%s1 + $0x30] sm:$0xff]
    %v68 = vld [vmem:[%s1 + $0x38] sm:$0xff]
    %v69 = vld [vmem:[%s0 + $0x1] sm:$0xff]
    %v70 = vld [vmem:[%s0 + $0x9] sm:$0xff]
    %v71 = vld [vmem:[%s0 + $0x11] sm:$0xff]
    %v72 = vld [vmem:[%s0 + $0x19] sm:$0xf]
    %s73 = scalar_lea.vmem %s1, 64
    %v74 = vld [vmem:[%s73] sm:$0xff]
    %v75 = vld [vmem:[%s73 + $0x8] sm:$0xff]
    %v76 = vld [vmem:[%s73 + $0x10] sm:$0xff]
    %v77 = vld [vmem:[%s73 + $0x18] sm:$0xff]
    %v78 = vld [vmem:[%s73 + $0x20] sm:$0xff]
    %v79 = vld [vmem:[%s73 + $0x28] sm:$0xff]
    %v80 = vld [vmem:[%s73 + $0x30] sm:$0xff]
    %v81 = vld [vmem:[%s73 + $0x38] sm:$0xff]
    %vm82 = vcmask 261120
    %v84 = vsel %vm82, %v69, 0
    %v87 = vsel %vm82, %v70, 0
    %v90 = vsel %vm82, %v71, 0
    %v93 = vsel %vm82, %v72, 0
    %95 = vmatprep.subr.mxu0 0.0
    %96 = vmatpush1.msra.mxu0 0.0
    %97 = vmatprep.subr.mxu0 0.0
    %98 = vmatpush1.msra.mxu0 0.0
    %99 = vmatprep.subr.mxu0 0.0
    %100 = vmatpush1.msra.mxu0 0.0
    %101 = vmatprep.subr.mxu0 0.0
    %102 = vmatpush1.msra.mxu0 0.0
    %103 = vmatprep.subr.mxu0 0.0
    %104 = vmatpush1.msra.mxu0 0.0
    %105 = vmatprep.subr.mxu0 0.0
    %106 = vmatpush1.msra.mxu0 0.0
    %107 = vmatprep.subr.mxu0 0.0
    %108 = vmatpush1.msra.mxu0 0.0
    %109 = vmatprep.subr.mxu0 0.0
    %110 = vmatpush1.msra.mxu0 0.0
    %111 = vmatprep.subr.mxu0 0.0
    %112 = vmatpush1.msra.mxu0 0.0
    %113 = vmatprep.subr.mxu0 0.0
    %114 = vmatpush1.msra.mxu0 0.0
    %115 = vmatprep.subr.mxu0 0.0
    %116 = vmatpush1.msra.mxu0 0.0
    %117 = vmatprep.subr.mxu0 0.0
    %118 = vmatpush1.msra.mxu0 0.0
    %119 = vmatprep.subr.mxu0 %v81
    %120 = vmatpush1.msra.mxu0 %v80
    %121 = vmatprep.subr.mxu0 %v79
    %122 = vmatpush1.msra.mxu0 %v78
    %123 = vmatprep.subr.mxu0 %v77
    %124 = vmatpush1.msra.mxu0 %v76
    %125 = vmatprep.subr.mxu0 %v75
    %126 = vmatpush1.msra.mxu0 %v74
    %127 = vmatprep.subr.mxu0 0.0
    %128 = vmatpush2.msra.mxu0 0.0
    %129 = vmatprep.subr.mxu0 0.0
    %130 = vmatpush2.msra.mxu0 0.0
    %131 = vmatprep.subr.mxu0 0.0
    %132 = vmatpush2.msra.mxu0 0.0
    %133 = vmatprep.subr.mxu0 0.0
    %134 = vmatpush2.msra.mxu0 0.0
    %135 = vmatprep.subr.mxu0 0.0
    %136 = vmatpush2.msra.mxu0 0.0
    %137 = vmatprep.subr.mxu0 0.0
    %138 = vmatpush2.msra.mxu0 0.0
    %139 = vmatprep.subr.mxu0 0.0
    %140 = vmatpush2.msra.mxu0 0.0
    %141 = vmatprep.subr.mxu0 0.0
    %142 = vmatpush2.msra.mxu0 0.0
    %143 = vmatprep.subr.mxu0 0.0
    %144 = vmatpush2.msra.mxu0 0.0
    %145 = vmatprep.subr.mxu0 0.0
    %146 = vmatpush2.msra.mxu0 0.0
    %147 = vmatprep.subr.mxu0 0.0
    %148 = vmatpush2.msra.mxu0 0.0
    %149 = vmatprep.subr.mxu0 0.0
    %150 = vmatpush2.msra.mxu0 0.0
    %151 = vmatprep.subr.mxu0 0.0
    %152 = vmatpush2.msra.mxu0 0.0
    %153 = vmatprep.subr.mxu0 0.0
    %154 = vmatpush2.msra.mxu0 0.0
    %155 = vmatprep.subr.mxu0 0.0
    %156 = vmatpush2.msra.mxu0 0.0
    %157 = vmatprep.subr.mxu0 0.0
    %158 = vmatpush2.msra.mxu0 0.0
    %159 = vmatprep.mubr.f32.mxu0 0.0
    %160 = vmatmul.mubr.f32.gmra.mxu0 %v84
    %v161 = vpop.f32.mrf.mxu0
    %v162 = vadd.f32 0.0, %v161
    %v163 = vpop.f32.mrf.mxu0
    %v164 = vadd.f32 0.0, %v163
    %165 = vmatprep.mubr.f32.mxu0 0.0
    %166 = vmatmul.mubr.f32.gmra.mxu0 %v87
    %v167 = vpop.f32.mrf.mxu0
    %v168 = vadd.f32 0.0, %v167
    %v169 = vpop.f32.mrf.mxu0
    %v170 = vadd.f32 0.0, %v169
    %171 = vmatprep.mubr.f32.mxu0 0.0
    %172 = vmatmul.mubr.f32.gmra.mxu0 %v90
    %v173 = vpop.f32.mrf.mxu0
    %v174 = vadd.f32 0.0, %v173
    %v175 = vpop.f32.mrf.mxu0
    %v176 = vadd.f32 0.0, %v175
    %177 = vmatprep.mubr.f32.mxu0 0.0
    %178 = vmatmul.mubr.f32.gmra.mxu0 %v93
    %v179 = vpop.f32.mrf.mxu0
    %v180 = vadd.f32 0.0, %v179
    %v181 = vpop.f32.mrf.mxu0
    %v182 = vadd.f32 0.0, %v181
    %183 = vdwg.mxu0
    %v185 = vsel %vm82, %v57, 0
    %v188 = vsel %vm82, %v58, 0
    %v191 = vsel %vm82, %v59, 0
    %v194 = vsel %vm82, %v60, 0
    %196 = vmatprep.subr.mxu0 0.0
    %197 = vmatpush1.msra.mxu0 0.0
    %198 = vmatprep.subr.mxu0 0.0
    %199 = vmatpush1.msra.mxu0 0.0
    %200 = vmatprep.subr.mxu0 0.0
    %201 = vmatpush1.msra.mxu0 0.0
    %202 = vmatprep.subr.mxu0 0.0
    %203 = vmatpush1.msra.mxu0 0.0
    %204 = vmatprep.subr.mxu0 0.0
    %205 = vmatpush1.msra.mxu0 0.0
    %206 = vmatprep.subr.mxu0 0.0
    %207 = vmatpush1.msra.mxu0 0.0
    %208 = vmatprep.subr.mxu0 0.0
    %209 = vmatpush1.msra.mxu0 0.0
    %210 = vmatprep.subr.mxu0 0.0
    %211 = vmatpush1.msra.mxu0 0.0
    %212 = vmatprep.subr.mxu0 0.0
    %213 = vmatpush1.msra.mxu0 0.0
    %214 = vmatprep.subr.mxu0 0.0
    %215 = vmatpush1.msra.mxu0 0.0
    %216 = vmatprep.subr.mxu0 0.0
    %217 = vmatpush1.msra.mxu0 0.0
    %218 = vmatprep.subr.mxu0 0.0
    %219 = vmatpush1.msra.mxu0 0.0
    %220 = vmatprep.subr.mxu0 %v68
    %221 = vmatpush1.msra.mxu0 %v67
    %222 = vmatprep.subr.mxu0 %v66
    %223 = vmatpush1.msra.mxu0 %v65
    %224 = vmatprep.subr.mxu0 %v64
    %225 = vmatpush1.msra.mxu0 %v63
    %226 = vmatprep.subr.mxu0 %v62
    %227 = vmatpush1.msra.mxu0 %v61
    %228 = vmatprep.subr.mxu0 0.0
    %229 = vmatpush2.msra.mxu0 0.0
    %230 = vmatprep.subr.mxu0 0.0
    %231 = vmatpush2.msra.mxu0 0.0
    %232 = vmatprep.subr.mxu0 0.0
    %233 = vmatpush2.msra.mxu0 0.0
    %234 = vmatprep.subr.mxu0 0.0
    %235 = vmatpush2.msra.mxu0 0.0
    %236 = vmatprep.subr.mxu0 0.0
    %237 = vmatpush2.msra.mxu0 0.0
    %238 = vmatprep.subr.mxu0 0.0
    %239 = vmatpush2.msra.mxu0 0.0
    %240 = vmatprep.subr.mxu0 0.0
    %241 = vmatpush2.msra.mxu0 0.0
    %242 = vmatprep.subr.mxu0 0.0
    %243 = vmatpush2.msra.mxu0 0.0
    %244 = vmatprep.subr.mxu0 0.0
    %245 = vmatpush2.msra.mxu0 0.0
    %246 = vmatprep.subr.mxu0 0.0
    %247 = vmatpush2.msra.mxu0 0.0
    %248 = vmatprep.subr.mxu0 0.0
    %249 = vmatpush2.msra.mxu0 0.0
    %250 = vmatprep.subr.mxu0 0.0
    %251 = vmatpush2.msra.mxu0 0.0
    %252 = vmatprep.subr.mxu0 0.0
    %253 = vmatpush2.msra.mxu0 0.0
    %254 = vmatprep.subr.mxu0 0.0
    %255 = vmatpush2.msra.mxu0 0.0
    %256 = vmatprep.subr.mxu0 0.0
    %257 = vmatpush2.msra.mxu0 0.0
    %258 = vmatprep.subr.mxu0 0.0
    %259 = vmatpush2.msra.mxu0 0.0
    %260 = vmatprep.mubr.f32.mxu0 0.0
    %261 = vmatmul.mubr.f32.gmra.mxu0 %v185
    %v262 = vpop.f32.mrf.mxu0
    %v263 = vadd.f32 %v162, %v262
    %v264 = vpop.f32.mrf.mxu0
    %v265 = vadd.f32 %v164, %v264
    %266 = vmatprep.mubr.f32.mxu0 0.0
    %267 = vmatmul.mubr.f32.gmra.mxu0 %v188
    %v268 = vpop.f32.mrf.mxu0
    %v269 = vadd.f32 %v168, %v268
    %v270 = vpop.f32.mrf.mxu0
    %v271 = vadd.f32 %v170, %v270
    %272 = vmatprep.mubr.f32.mxu0 0.0
    %273 = vmatmul.mubr.f32.gmra.mxu0 %v191
    %v274 = vpop.f32.mrf.mxu0
    %v275 = vadd.f32 %v174, %v274
    %v276 = vpop.f32.mrf.mxu0
    %v277 = vadd.f32 %v176, %v276
    %278 = vmatprep.mubr.f32.mxu0 0.0
    %279 = vmatmul.mubr.f32.gmra.mxu0 %v194
    %v280 = vpop.f32.mrf.mxu0
    %v281 = vadd.f32 %v180, %v280
    %v282 = vpop.f32.mrf.mxu0
    %v283 = vadd.f32 %v182, %v282
    %284 = vdwg.mxu0
    %v285 = vld [vmem:[%s0 + $0x2] sm:$0xff]
    %v286 = vld [vmem:[%s0 + $0xa] sm:$0xff]
    %v287 = vld [vmem:[%s0 + $0x12] sm:$0xff]
    %v288 = vld [vmem:[%s0 + $0x1a] sm:$0xf]
    %s289 = scalar_lea.vmem %s1, 128
    %v290 = vld [vmem:[%s289] sm:$0xff]
    %v291 = vld [vmem:[%s289 + $0x8] sm:$0xff]
    %v292 = vld [vmem:[%s289 + $0x10] sm:$0xff]
    %v293 = vld [vmem:[%s289 + $0x18] sm:$0xff]
    %v294 = vld [vmem:[%s289 + $0x20] sm:$0xff]
    %v295 = vld [vmem:[%s289 + $0x28] sm:$0xff]
    %v296 = vld [vmem:[%s289 + $0x30] sm:$0xff]
    %v297 = vld [vmem:[%s289 + $0x38] sm:$0xff]
    %v299 = vsel %vm82, %v285, 0
    %v302 = vsel %vm82, %v286, 0
    %v305 = vsel %vm82, %v287, 0
    %v308 = vsel %vm82, %v288, 0
    %310 = vmatprep.subr.mxu0 0.0
    %311 = vmatpush1.msra.mxu0 0.0
    %312 = vmatprep.subr.mxu0 0.0
    %313 = vmatpush1.msra.mxu0 0.0
    %314 = vmatprep.subr.mxu0 0.0
    %315 = vmatpush1.msra.mxu0 0.0
    %316 = vmatprep.subr.mxu0 0.0
    %317 = vmatpush1.msra.mxu0 0.0
    %318 = vmatprep.subr.mxu0 0.0
    %319 = vmatpush1.msra.mxu0 0.0
    %320 = vmatprep.subr.mxu0 0.0
    %321 = vmatpush1.msra.mxu0 0.0
    %322 = vmatprep.subr.mxu0 0.0
    %323 = vmatpush1.msra.mxu0 0.0
    %324 = vmatprep.subr.mxu0 0.0
    %325 = vmatpush1.msra.mxu0 0.0
    %326 = vmatprep.subr.mxu0 0.0
    %327 = vmatpush1.msra.mxu0 0.0
    %328 = vmatprep.subr.mxu0 0.0
    %329 = vmatpush1.msra.mxu0 0.0
    %330 = vmatprep.subr.mxu0 0.0
    %331 = vmatpush1.msra.mxu0 0.0
    %332 = vmatprep.subr.mxu0 0.0
    %333 = vmatpush1.msra.mxu0 0.0
    %334 = vmatprep.subr.mxu0 %v297
    %335 = vmatpush1.msra.mxu0 %v296
    %336 = vmatprep.subr.mxu0 %v295
    %337 = vmatpush1.msra.mxu0 %v294
    %338 = vmatprep.subr.mxu0 %v293
    %339 = vmatpush1.msra.mxu0 %v292
    %340 = vmatprep.subr.mxu0 %v291
    %341 = vmatpush1.msra.mxu0 %v290
    %342 = vmatprep.subr.mxu0 0.0
    %343 = vmatpush2.msra.mxu0 0.0
    %344 = vmatprep.subr.mxu0 0.0
    %345 = vmatpush2.msra.mxu0 0.0
    %346 = vmatprep.subr.mxu0 0.0
    %347 = vmatpush2.msra.mxu0 0.0
    %348 = vmatprep.subr.mxu0 0.0
    %349 = vmatpush2.msra.mxu0 0.0
    %350 = vmatprep.subr.mxu0 0.0
    %351 = vmatpush2.msra.mxu0 0.0
    %352 = vmatprep.subr.mxu0 0.0
    %353 = vmatpush2.msra.mxu0 0.0
    %354 = vmatprep.subr.mxu0 0.0
    %355 = vmatpush2.msra.mxu0 0.0
    %356 = vmatprep.subr.mxu0 0.0
    %357 = vmatpush2.msra.mxu0 0.0
    %358 = vmatprep.subr.mxu0 0.0
    %359 = vmatpush2.msra.mxu0 0.0
    %360 = vmatprep.subr.mxu0 0.0
    %361 = vmatpush2.msra.mxu0 0.0
    %362 = vmatprep.subr.mxu0 0.0
    %363 = vmatpush2.msra.mxu0 0.0
    %364 = vmatprep.subr.mxu0 0.0
    %365 = vmatpush2.msra.mxu0 0.0
    %366 = vmatprep.subr.mxu0 0.0
    %367 = vmatpush2.msra.mxu0 0.0
    %368 = vmatprep.subr.mxu0 0.0
    %369 = vmatpush2.msra.mxu0 0.0
    %370 = vmatprep.subr.mxu0 0.0
    %371 = vmatpush2.msra.mxu0 0.0
    %372 = vmatprep.subr.mxu0 0.0
    %373 = vmatpush2.msra.mxu0 0.0
    %374 = vmatprep.mubr.f32.mxu0 0.0
    %375 = vmatmul.mubr.f32.gmra.mxu0 %v299
    %v376 = vpop.f32.mrf.mxu0
    %v377 = vadd.f32 0.0, %v376
    %v378 = vpop.f32.mrf.mxu0
    %v379 = vadd.f32 0.0, %v378
    %380 = vmatprep.mubr.f32.mxu0 0.0
    %381 = vmatmul.mubr.f32.gmra.mxu0 %v302
    %v382 = vpop.f32.mrf.mxu0
    %v383 = vadd.f32 0.0, %v382
    %v384 = vpop.f32.mrf.mxu0
    %v385 = vadd.f32 0.0, %v384
    %386 = vmatprep.mubr.f32.mxu0 0.0
    %387 = vmatmul.mubr.f32.gmra.mxu0 %v305
    %v388 = vpop.f32.mrf.mxu0
    %v389 = vadd.f32 0.0, %v388
    %v390 = vpop.f32.mrf.mxu0
    %v391 = vadd.f32 0.0, %v390
    %392 = vmatprep.mubr.f32.mxu0 0.0
    %393 = vmatmul.mubr.f32.gmra.mxu0 %v308
    %v394 = vpop.f32.mrf.mxu0
    %v395 = vadd.f32 0.0, %v394
    %v396 = vpop.f32.mrf.mxu0
    %v397 = vadd.f32 0.0, %v396
    %398 = vdwg.mxu0
    %v399 = vadd.f32 %v263, %v377
    %v400 = vadd.f32 %v265, %v379
    %v401 = vadd.f32 %v269, %v383
    %v402 = vadd.f32 %v271, %v385
    %v403 = vadd.f32 %v275, %v389
    %v404 = vadd.f32 %v277, %v391
    %v405 = vadd.f32 %v281, %v395
    %v406 = vadd.f32 %v283, %v397
    %v407 = vld [vmem:[%s0 + $0x3] sm:$0xff]
    %v408 = vld [vmem:[%s0 + $0xb] sm:$0xff]
    %v409 = vld [vmem:[%s0 + $0x13] sm:$0xff]
    %v410 = vld [vmem:[%s0 + $0x1b] sm:$0xf]
    %s411 = scalar_lea.vmem %s1, 192
    %v412 = vld [vmem:[%s411] sm:$0xff]
    %v413 = vld [vmem:[%s411 + $0x8] sm:$0xff]
    %v414 = vld [vmem:[%s411 + $0x10] sm:$0xff]
    %v415 = vld [vmem:[%s411 + $0x18] sm:$0xff]
    %v416 = vld [vmem:[%s411 + $0x20] sm:$0xff]
    %v417 = vld [vmem:[%s411 + $0x28] sm:$0xff]
    %v418 = vld [vmem:[%s411 + $0x30] sm:$0xff]
    %v419 = vld [vmem:[%s411 + $0x38] sm:$0xff]
    %v421 = vsel %vm82, %v407, 0
    %v424 = vsel %vm82, %v408, 0
    %v427 = vsel %vm82, %v409, 0
    %v430 = vsel %vm82, %v410, 0
    %432 = vmatprep.subr.mxu0 0.0
    %433 = vmatpush1.msra.mxu0 0.0
    %434 = vmatprep.subr.mxu0 0.0
    %435 = vmatpush1.msra.mxu0 0.0
    %436 = vmatprep.subr.mxu0 0.0
    %437 = vmatpush1.msra.mxu0 0.0
    %438 = vmatprep.subr.mxu0 0.0
    %439 = vmatpush1.msra.mxu0 0.0
    %440 = vmatprep.subr.mxu0 0.0
    %441 = vmatpush1.msra.mxu0 0.0
    %442 = vmatprep.subr.mxu0 0.0
    %443 = vmatpush1.msra.mxu0 0.0
    %444 = vmatprep.subr.mxu0 0.0
    %445 = vmatpush1.msra.mxu0 0.0
    %446 = vmatprep.subr.mxu0 0.0
    %447 = vmatpush1.msra.mxu0 0.0
    %448 = vmatprep.subr.mxu0 0.0
    %449 = vmatpush1.msra.mxu0 0.0
    %450 = vmatprep.subr.mxu0 0.0
    %451 = vmatpush1.msra.mxu0 0.0
    %452 = vmatprep.subr.mxu0 0.0
    %453 = vmatpush1.msra.mxu0 0.0
    %454 = vmatprep.subr.mxu0 0.0
    %455 = vmatpush1.msra.mxu0 0.0
    %456 = vmatprep.subr.mxu0 %v419
    %457 = vmatpush1.msra.mxu0 %v418
    %458 = vmatprep.subr.mxu0 %v417
    %459 = vmatpush1.msra.mxu0 %v416
    %460 = vmatprep.subr.mxu0 %v415
    %461 = vmatpush1.msra.mxu0 %v414
    %462 = vmatprep.subr.mxu0 %v413
    %463 = vmatpush1.msra.mxu0 %v412
    %464 = vmatprep.subr.mxu0 0.0
    %465 = vmatpush2.msra.mxu0 0.0
    %466 = vmatprep.subr.mxu0 0.0
    %467 = vmatpush2.msra.mxu0 0.0
    %468 = vmatprep.subr.mxu0 0.0
    %469 = vmatpush2.msra.mxu0 0.0
    %470 = vmatprep.subr.mxu0 0.0
    %471 = vmatpush2.msra.mxu0 0.0
    %472 = vmatprep.subr.mxu0 0.0
    %473 = vmatpush2.msra.mxu0 0.0
    %474 = vmatprep.subr.mxu0 0.0
    %475 = vmatpush2.msra.mxu0 0.0
    %476 = vmatprep.subr.mxu0 0.0
    %477 = vmatpush2.msra.mxu0 0.0
    %478 = vmatprep.subr.mxu0 0.0
    %479 = vmatpush2.msra.mxu0 0.0
    %480 = vmatprep.subr.mxu0 0.0
    %481 = vmatpush2.msra.mxu0 0.0
    %482 = vmatprep.subr.mxu0 0.0
    %483 = vmatpush2.msra.mxu0 0.0
    %484 = vmatprep.subr.mxu0 0.0
    %485 = vmatpush2.msra.mxu0 0.0
    %486 = vmatprep.subr.mxu0 0.0
    %487 = vmatpush2.msra.mxu0 0.0
    %488 = vmatprep.subr.mxu0 0.0
    %489 = vmatpush2.msra.mxu0 0.0
    %490 = vmatprep.subr.mxu0 0.0
    %491 = vmatpush2.msra.mxu0 0.0
    %492 = vmatprep.subr.mxu0 0.0
    %493 = vmatpush2.msra.mxu0 0.0
    %494 = vmatprep.subr.mxu0 0.0
    %495 = vmatpush2.msra.mxu0 0.0
    %496 = vmatprep.mubr.f32.mxu0 0.0
    %497 = vmatmul.mubr.f32.gmra.mxu0 %v421
    %v498 = vpop.f32.mrf.mxu0
    %v499 = vadd.f32 0.0, %v498
    %v500 = vpop.f32.mrf.mxu0
    %v501 = vadd.f32 0.0, %v500
    %502 = vmatprep.mubr.f32.mxu0 0.0
    %503 = vmatmul.mubr.f32.gmra.mxu0 %v424
    %v504 = vpop.f32.mrf.mxu0
    %v505 = vadd.f32 0.0, %v504
    %v506 = vpop.f32.mrf.mxu0
    %v507 = vadd.f32 0.0, %v506
    %508 = vmatprep.mubr.f32.mxu0 0.0
    %509 = vmatmul.mubr.f32.gmra.mxu0 %v427
    %v510 = vpop.f32.mrf.mxu0
    %v511 = vadd.f32 0.0, %v510
    %v512 = vpop.f32.mrf.mxu0
    %v513 = vadd.f32 0.0, %v512
    %514 = vmatprep.mubr.f32.mxu0 0.0
    %515 = vmatmul.mubr.f32.gmra.mxu0 %v430
    %v516 = vpop.f32.mrf.mxu0
    %v517 = vadd.f32 0.0, %v516
    %v518 = vpop.f32.mrf.mxu0
    %v519 = vadd.f32 0.0, %v518
    %520 = vdwg.mxu0
    %v521 = vadd.f32 %v399, %v499
    %v522 = vadd.f32 %v400, %v501
    %v523 = vadd.f32 %v401, %v505
    %v524 = vadd.f32 %v402, %v507
    %v525 = vadd.f32 %v403, %v511
    %v526 = vadd.f32 %v404, %v513
    %v527 = vadd.f32 %v405, %v517
    %v528 = vadd.f32 %v406, %v519
    %v529 = vld [vmem:[%s0 + $0x4] sm:$0xff]
    %v530 = vld [vmem:[%s0 + $0xc] sm:$0xff]
    %v531 = vld [vmem:[%s0 + $0x14] sm:$0xff]
    %v532 = vld [vmem:[%s0 + $0x1c] sm:$0xf]
    %s533 = scalar_lea.vmem %s1, 256
    %v534 = vld [vmem:[%s533] sm:$0xff]
    %v535 = vld [vmem:[%s533 + $0x8] sm:$0xff]
    %v536 = vld [vmem:[%s533 + $0x10] sm:$0xff]
    %v537 = vld [vmem:[%s533 + $0x18] sm:$0xff]
    %v538 = vld [vmem:[%s533 + $0x20] sm:$0xff]
    %v539 = vld [vmem:[%s533 + $0x28] sm:$0xff]
    %v540 = vld [vmem:[%s533 + $0x30] sm:$0xff]
    %v541 = vld [vmem:[%s533 + $0x38] sm:$0xff]
    %v543 = vsel %vm82, %v529, 0
    %v546 = vsel %vm82, %v530, 0
    %v549 = vsel %vm82, %v531, 0
    %v552 = vsel %vm82, %v532, 0
    %554 = vmatprep.subr.mxu0 0.0
    %555 = vmatpush1.msra.mxu0 0.0
    %556 = vmatprep.subr.mxu0 0.0
    %557 = vmatpush1.msra.mxu0 0.0
    %558 = vmatprep.subr.mxu0 0.0
    %559 = vmatpush1.msra.mxu0 0.0
    %560 = vmatprep.subr.mxu0 0.0
    %561 = vmatpush1.msra.mxu0 0.0
    %562 = vmatprep.subr.mxu0 0.0
    %563 = vmatpush1.msra.mxu0 0.0
    %564 = vmatprep.subr.mxu0 0.0
    %565 = vmatpush1.msra.mxu0 0.0
    %566 = vmatprep.subr.mxu0 0.0
    %567 = vmatpush1.msra.mxu0 0.0
    %568 = vmatprep.subr.mxu0 0.0
    %569 = vmatpush1.msra.mxu0 0.0
    %570 = vmatprep.subr.mxu0 0.0
    %571 = vmatpush1.msra.mxu0 0.0
    %572 = vmatprep.subr.mxu0 0.0
    %573 = vmatpush1.msra.mxu0 0.0
    %574 = vmatprep.subr.mxu0 0.0
    %575 = vmatpush1.msra.mxu0 0.0
    %576 = vmatprep.subr.mxu0 0.0
    %577 = vmatpush1.msra.mxu0 0.0
    %578 = vmatprep.subr.mxu0 %v541
    %579 = vmatpush1.msra.mxu0 %v540
    %580 = vmatprep.subr.mxu0 %v539
    %581 = vmatpush1.msra.mxu0 %v538
    %582 = vmatprep.subr.mxu0 %v537
    %583 = vmatpush1.msra.mxu0 %v536
    %584 = vmatprep.subr.mxu0 %v535
    %585 = vmatpush1.msra.mxu0 %v534
    %586 = vmatprep.subr.mxu0 0.0
    %587 = vmatpush2.msra.mxu0 0.0
    %588 = vmatprep.subr.mxu0 0.0
    %589 = vmatpush2.msra.mxu0 0.0
    %590 = vmatprep.subr.mxu0 0.0
    %591 = vmatpush2.msra.mxu0 0.0
    %592 = vmatprep.subr.mxu0 0.0
    %593 = vmatpush2.msra.mxu0 0.0
    %594 = vmatprep.subr.mxu0 0.0
    %595 = vmatpush2.msra.mxu0 0.0
    %596 = vmatprep.subr.mxu0 0.0
    %597 = vmatpush2.msra.mxu0 0.0
    %598 = vmatprep.subr.mxu0 0.0
    %599 = vmatpush2.msra.mxu0 0.0
    %600 = vmatprep.subr.mxu0 0.0
    %601 = vmatpush2.msra.mxu0 0.0
    %602 = vmatprep.subr.mxu0 0.0
    %603 = vmatpush2.msra.mxu0 0.0
    %604 = vmatprep.subr.mxu0 0.0
    %605 = vmatpush2.msra.mxu0 0.0
    %606 = vmatprep.subr.mxu0 0.0
    %607 = vmatpush2.msra.mxu0 0.0
    %608 = vmatprep.subr.mxu0 0.0
    %609 = vmatpush2.msra.mxu0 0.0
    %610 = vmatprep.subr.mxu0 0.0
    %611 = vmatpush2.msra.mxu0 0.0
    %612 = vmatprep.subr.mxu0 0.0
    %613 = vmatpush2.msra.mxu0 0.0
    %614 = vmatprep.subr.mxu0 0.0
    %615 = vmatpush2.msra.mxu0 0.0
    %616 = vmatprep.subr.mxu0 0.0
    %617 = vmatpush2.msra.mxu0 0.0
    %618 = vmatprep.mubr.f32.mxu0 0.0
    %619 = vmatmul.mubr.f32.gmra.mxu0 %v543
    %v620 = vpop.f32.mrf.mxu0
    %v621 = vadd.f32 0.0, %v620
    %v622 = vpop.f32.mrf.mxu0
    %v623 = vadd.f32 0.0, %v622
    %624 = vmatprep.mubr.f32.mxu0 0.0
    %625 = vmatmul.mubr.f32.gmra.mxu0 %v546
    %v626 = vpop.f32.mrf.mxu0
    %v627 = vadd.f32 0.0, %v626
    %v628 = vpop.f32.mrf.mxu0
    %v629 = vadd.f32 0.0, %v628
    %630 = vmatprep.mubr.f32.mxu0 0.0
    %631 = vmatmul.mubr.f32.gmra.mxu0 %v549
    %v632 = vpop.f32.mrf.mxu0
    %v633 = vadd.f32 0.0, %v632
    %v634 = vpop.f32.mrf.mxu0
    %v635 = vadd.f32 0.0, %v634
    %636 = vmatprep.mubr.f32.mxu0 0.0
    %637 = vmatmul.mubr.f32.gmra.mxu0 %v552
    %v638 = vpop.f32.mrf.mxu0
    %v639 = vadd.f32 0.0, %v638
    %v640 = vpop.f32.mrf.mxu0
    %v641 = vadd.f32 0.0, %v640
    %642 = vdwg.mxu0
    %v643 = vadd.f32 %v521, %v621
    %v644 = vadd.f32 %v522, %v623
    %v645 = vadd.f32 %v523, %v627
    %v646 = vadd.f32 %v524, %v629
    %v647 = vadd.f32 %v525, %v633
    %v648 = vadd.f32 %v526, %v635
    %v649 = vadd.f32 %v527, %v639
    %v650 = vadd.f32 %v528, %v641
    %v651 = vld [vmem:[%s2] sm:$0x3]
    %v653 = vlaneseq
    %v654 = vshrl.u32 %v653, 7
    %v655 = vsub.s32 0, %v654
    %v656 = vrot.slane %v651, %v655
    %v657 = vlaneseq
    %v658 = vshrl.u32 %v657, 7
    %v659 = vsub.s32 1, %v658
    %v660 = vrot.slane %v651, %v659
    %v663 = vadd.f32 %v643, %v656
    %v664 = vadd.f32 %v644, %v660
    %v665 = vadd.f32 %v645, %v656
    %v666 = vadd.f32 %v646, %v660
    %v667 = vadd.f32 %v647, %v656
    %v668 = vadd.f32 %v648, %v660
    %v669 = vadd.f32 %v649, %v656
    %v670 = vadd.f32 %v650, %v660
    %v671 = vld [vmem:[%s11] sm:$0xff]
    %v672 = vld [vmem:[%s11 + $0x8] sm:$0x3f]
    %vm673 = vcmask 228352
    %v675 = vsel %vm673, %v671, 0
    %v678 = vsel %vm673, %v672, 0
    %vm680 = vcmask 1043456
    %v682 = vsel %vm680, %v669, 0
    %v685 = vsel %vm680, %v670, 0
    %687 = vmatprep.subr.mxu0 0.0
    %688 = vmatpush1.msra.mxu0 0.0
    %689 = vmatprep.subr.mxu0 0.0
    %690 = vmatpush1.msra.mxu0 0.0
    %691 = vmatprep.subr.mxu0 0.0
    %692 = vmatpush1.msra.mxu0 0.0
    %693 = vmatprep.subr.mxu0 0.0
    %694 = vmatpush1.msra.mxu0 0.0
    %695 = vmatprep.subr.mxu0 0.0
    %696 = vmatpush1.msra.mxu0 0.0
    %697 = vmatprep.subr.mxu0 0.0
    %698 = vmatpush1.msra.mxu0 0.0
    %699 = vmatprep.subr.mxu0 0.0
    %700 = vmatpush1.msra.mxu0 0.0
    %701 = vmatprep.subr.mxu0 0.0
    %702 = vmatpush1.msra.mxu0 0.0
    %703 = vmatprep.subr.mxu0 0.0
    %704 = vmatpush1.msra.mxu0 0.0
    %705 = vmatprep.subr.mxu0 0.0
    %706 = vmatpush1.msra.mxu0 0.0
    %707 = vmatprep.subr.mxu0 0.0
    %708 = vmatpush1.msra.mxu0 0.0
    %709 = vmatprep.subr.mxu0 0.0
    %710 = vmatpush1.msra.mxu0 0.0
    %711 = vmatprep.subr.mxu0 %v685
    %712 = vmatpush1.msra.mxu0 %v682
    %713 = vmatprep.subr.mxu0 %v668
    %714 = vmatpush1.msra.mxu0 %v667
    %715 = vmatprep.subr.mxu0 %v666
    %716 = vmatpush1.msra.mxu0 %v665
    %717 = vmatprep.subr.mxu0 %v664
    %718 = vmatpush1.msra.mxu0 %v663
    %719 = vmatprep.subr.mxu0 0.0
    %720 = vmatpush2.msra.mxu0 0.0
    %721 = vmatprep.subr.mxu0 0.0
    %722 = vmatpush2.msra.mxu0 0.0
    %723 = vmatprep.subr.mxu0 0.0
    %724 = vmatpush2.msra.mxu0 0.0
    %725 = vmatprep.subr.mxu0 0.0
    %726 = vmatpush2.msra.mxu0 0.0
    %727 = vmatprep.subr.mxu0 0.0
    %728 = vmatpush2.msra.mxu0 0.0
    %729 = vmatprep.subr.mxu0 0.0
    %730 = vmatpush2.msra.mxu0 0.0
    %731 = vmatprep.subr.mxu0 0.0
    %732 = vmatpush2.msra.mxu0 0.0
    %733 = vmatprep.subr.mxu0 0.0
    %734 = vmatpush2.msra.mxu0 0.0
    %735 = vmatprep.subr.mxu0 0.0
    %736 = vmatpush2.msra.mxu0 0.0
    %737 = vmatprep.subr.mxu0 0.0
    %738 = vmatpush2.msra.mxu0 0.0
    %739 = vmatprep.subr.mxu0 0.0
    %740 = vmatpush2.msra.mxu0 0.0
    %741 = vmatprep.subr.mxu0 0.0
    %742 = vmatpush2.msra.mxu0 0.0
    %743 = vmatprep.subr.mxu0 0.0
    %744 = vmatpush2.msra.mxu0 0.0
    %745 = vmatprep.subr.mxu0 0.0
    %746 = vmatpush2.msra.mxu0 0.0
    %747 = vmatprep.subr.mxu0 0.0
    %748 = vmatpush2.msra.mxu0 0.0
    %749 = vmatprep.subr.mxu0 0.0
    %750 = vmatpush2.msra.mxu0 0.0
    %751 = vmatprep.mubr.f32.mxu0 0.0
    %752 = vmatmul.mubr.f32.gmra.mxu0 %v675
    %v753 = vpop.f32.mrf.mxu0
    %v754 = vadd.f32 0.0, %v753
    %v755 = vpop.f32.mrf.mxu0
    %v756 = vadd.f32 0.0, %v755
    %757 = vmatprep.mubr.f32.mxu0 0.0
    %758 = vmatmul.mubr.f32.gmra.mxu0 %v678
    %v759 = vpop.f32.mrf.mxu0
    %v760 = vadd.f32 0.0, %v759
    %v761 = vpop.f32.mrf.mxu0
    %v762 = vadd.f32 0.0, %v761
    %763 = vdwg.mxu0
    %v764 = vld [vmem:[%s12] sm:$0xff]
    %v765 = vld [vmem:[%s12 + $0x8] sm:$0x3f]
    %v767 = vsel %vm673, %v764, 0
    %v770 = vsel %vm673, %v765, 0
    %772 = vmatprep.subr.mxu0 0.0
    %773 = vmatpush1.msra.mxu0 0.0
    %774 = vmatprep.subr.mxu0 0.0
    %775 = vmatpush1.msra.mxu0 0.0
    %776 = vmatprep.subr.mxu0 0.0
    %777 = vmatpush1.msra.mxu0 0.0
    %778 = vmatprep.subr.mxu0 0.0
    %779 = vmatpush1.msra.mxu0 0.0
    %780 = vmatprep.subr.mxu0 0.0
    %781 = vmatpush1.msra.mxu0 0.0
    %782 = vmatprep.subr.mxu0 0.0
    %783 = vmatpush1.msra.mxu0 0.0
    %784 = vmatprep.subr.mxu0 0.0
    %785 = vmatpush1.msra.mxu0 0.0
    %786 = vmatprep.subr.mxu0 0.0
    %787 = vmatpush1.msra.mxu0 0.0
    %788 = vmatprep.subr.mxu0 0.0
    %789 = vmatpush1.msra.mxu0 0.0
    %790 = vmatprep.subr.mxu0 0.0
    %791 = vmatpush1.msra.mxu0 0.0
    %792 = vmatprep.subr.mxu0 0.0
    %793 = vmatpush1.msra.mxu0 0.0
    %794 = vmatprep.subr.mxu0 0.0
    %795 = vmatpush1.msra.mxu0 0.0
    %796 = vmatprep.subr.mxu0 %v685
    %797 = vmatpush1.msra.mxu0 %v682
    %798 = vmatprep.subr.mxu0 %v668
    %799 = vmatpush1.msra.mxu0 %v667
    %800 = vmatprep.subr.mxu0 %v666
    %801 = vmatpush1.msra.mxu0 %v665
    %802 = vmatprep.subr.mxu0 %v664
    %803 = vmatpush1.msra.mxu0 %v663
    %804 = vmatprep.subr.mxu0 0.0
    %805 = vmatpush2.msra.mxu0 0.0
    %806 = vmatprep.subr.mxu0 0.0
    %807 = vmatpush2.msra.mxu0 0.0
    %808 = vmatprep.subr.mxu0 0.0
    %809 = vmatpush2.msra.mxu0 0.0
    %810 = vmatprep.subr.mxu0 0.0
    %811 = vmatpush2.msra.mxu0 0.0
    %812 = vmatprep.subr.mxu0 0.0
    %813 = vmatpush2.msra.mxu0 0.0
    %814 = vmatprep.subr.mxu0 0.0
    %815 = vmatpush2.msra.mxu0 0.0
    %816 = vmatprep.subr.mxu0 0.0
    %817 = vmatpush2.msra.mxu0 0.0
    %818 = vmatprep.subr.mxu0 0.0
    %819 = vmatpush2.msra.mxu0 0.0
    %820 = vmatprep.subr.mxu0 0.0
    %821 = vmatpush2.msra.mxu0 0.0
    %822 = vmatprep.subr.mxu0 0.0
    %823 = vmatpush2.msra.mxu0 0.0
    %824 = vmatprep.subr.mxu0 0.0
    %825 = vmatpush2.msra.mxu0 0.0
    %826 = vmatprep.subr.mxu0 0.0
    %827 = vmatpush2.msra.mxu0 0.0
    %828 = vmatprep.subr.mxu0 0.0
    %829 = vmatpush2.msra.mxu0 0.0
    %830 = vmatprep.subr.mxu0 0.0
    %831 = vmatpush2.msra.mxu0 0.0
    %832 = vmatprep.subr.mxu0 0.0
    %833 = vmatpush2.msra.mxu0 0.0
    %834 = vmatprep.subr.mxu0 0.0
    %835 = vmatpush2.msra.mxu0 0.0
    %836 = vmatprep.mubr.f32.mxu0 0.0
    %837 = vmatmul.mubr.f32.gmra.mxu0 %v767
    %v838 = vpop.f32.mrf.mxu0
    %v839 = vadd.f32 0.0, %v838
    %v840 = vpop.f32.mrf.mxu0
    %v841 = vadd.f32 0.0, %v840
    %842 = vmatprep.mubr.f32.mxu0 0.0
    %843 = vmatmul.mubr.f32.gmra.mxu0 %v770
    %v844 = vpop.f32.mrf.mxu0
    %v845 = vadd.f32 0.0, %v844
    %v846 = vpop.f32.mrf.mxu0
    %v847 = vadd.f32 0.0, %v846
    %848 = vdwg.mxu0
    %v849 = vmax.f32 %v754, %v839
    %v850 = vmax.f32 %v756, %v841
    %v851 = vmax.f32 %v760, %v845
    %v852 = vmax.f32 %v762, %v847
    %v853 = vld [vmem:[%s13] sm:$0xff]
    %v854 = vld [vmem:[%s13 + $0x8] sm:$0xff]
    %v855 = vld [vmem:[%s13 + $0x10] sm:$0xff]
    %v856 = vld [vmem:[%s13 + $0x18] sm:$0xff]
    %v857 = vld [vmem:[%s13 + $0x20] sm:$0xff]
    %v858 = vld [vmem:[%s13 + $0x28] sm:$0xff]
    %v859 = vld [vmem:[%s13 + $0x30] sm:$0xff]
    %v860 = vld [vmem:[%s13 + $0x38] sm:$0xff]
    %v861 = vld [vmem:[%s13 + $0x40] sm:$0xff]
    %v862 = vld [vmem:[%s13 + $0x48] sm:$0xff]
    %v863 = vld [vmem:[%s13 + $0x50] sm:$0xff]
    %v864 = vld [vmem:[%s13 + $0x58] sm:$0xff]
    %v865 = vld [vmem:[%s13 + $0x60] sm:$0xff]
    %v866 = vld [vmem:[%s13 + $0x68] sm:$0xff]
    %v867 = vld [vmem:[%s13 + $0x70] sm:$0xff]
    %v868 = vld [vmem:[%s13 + $0x78] sm:$0xff]
    %v869 = vld [vmem:[%s13 + $0x80] sm:$0xff]
    %v870 = vld [vmem:[%s13 + $0x88] sm:$0xff]
    %v871 = vld [vmem:[%s13 + $0x90] sm:$0xff]
    %v872 = vld [vmem:[%s13 + $0x98] sm:$0xff]
    %v873 = vld [vmem:[%s13 + $0xa0] sm:$0xff]
    %v874 = vld [vmem:[%s13 + $0xa8] sm:$0xff]
    %v875 = vld [vmem:[%s13 + $0xb0] sm:$0xff]
    %v876 = vld [vmem:[%s13 + $0xb8] sm:$0xff]
    %v877 = vld [vmem:[%s13 + $0xc0] sm:$0xff]
    %v878 = vld [vmem:[%s13 + $0xc8] sm:$0xff]
    %v879 = vld [vmem:[%s13 + $0xd0] sm:$0xff]
    %v880 = vld [vmem:[%s13 + $0xd8] sm:$0xff]
    %v881 = vld [vmem:[%s13 + $0xe0] sm:$0xff]
    %v882 = vld [vmem:[%s13 + $0xe8] sm:$0xff]
    %v883 = vld [vmem:[%s13 + $0xf0] sm:$0xff]
    %v884 = vld [vmem:[%s13 + $0xf8] sm:$0xff]
    %v885 = vld [vmem:[%s13 + $0x100] sm:$0xff]
    %v886 = vld [vmem:[%s13 + $0x108] sm:$0xff]
    %v887 = vld [vmem:[%s13 + $0x110] sm:$0xff]
    %v888 = vld [vmem:[%s13 + $0x118] sm:$0xff]
    %v889 = vld [vmem:[%s13 + $0x120] sm:$0xff]
    %v890 = vld [vmem:[%s13 + $0x128] sm:$0xff]
    %v891 = vld [vmem:[%s13 + $0x130] sm:$0xff]
    %v892 = vld [vmem:[%s13 + $0x138] sm:$0xff]
    %v893 = vld [vmem:[%s13 + $0x140] sm:$0xff]
    %v894 = vld [vmem:[%s13 + $0x148] sm:$0xff]
    %vm895 = vcmask 326656
    %v897 = vsel %vm895, %v850, 0
    %v900 = vsel %vm895, %v852, 0
    %902 = vmatprep.subr.mxu0 %v884
    %903 = vmatpush1.msra.mxu0 %v883
    %904 = vmatprep.subr.mxu0 %v882
    %905 = vmatpush1.msra.mxu0 %v881
    %906 = vmatprep.subr.mxu0 %v880
    %907 = vmatpush1.msra.mxu0 %v879
    %908 = vmatprep.subr.mxu0 %v878
    %909 = vmatpush1.msra.mxu0 %v877
    %910 = vmatprep.subr.mxu0 %v876
    %911 = vmatpush1.msra.mxu0 %v875
    %912 = vmatprep.subr.mxu0 %v874
    %913 = vmatpush1.msra.mxu0 %v873
    %914 = vmatprep.subr.mxu0 %v872
    %915 = vmatpush1.msra.mxu0 %v871
    %916 = vmatprep.subr.mxu0 %v870
    %917 = vmatpush1.msra.mxu0 %v869
    %918 = vmatprep.subr.mxu0 %v868
    %919 = vmatpush1.msra.mxu0 %v867
    %920 = vmatprep.subr.mxu0 %v866
    %921 = vmatpush1.msra.mxu0 %v865
    %922 = vmatprep.subr.mxu0 %v864
    %923 = vmatpush1.msra.mxu0 %v863
    %924 = vmatprep.subr.mxu0 %v862
    %925 = vmatpush1.msra.mxu0 %v861
    %926 = vmatprep.subr.mxu0 %v860
    %927 = vmatpush1.msra.mxu0 %v859
    %928 = vmatprep.subr.mxu0 %v858
    %929 = vmatpush1.msra.mxu0 %v857
    %930 = vmatprep.subr.mxu0 %v856
    %931 = vmatpush1.msra.mxu0 %v855
    %932 = vmatprep.subr.mxu0 %v854
    %933 = vmatpush1.msra.mxu0 %v853
    %934 = vmatprep.subr.mxu0 0.0
    %935 = vmatpush2.msra.mxu0 0.0
    %936 = vmatprep.subr.mxu0 0.0
    %937 = vmatpush2.msra.mxu0 0.0
    %938 = vmatprep.subr.mxu0 0.0
    %939 = vmatpush2.msra.mxu0 0.0
    %940 = vmatprep.subr.mxu0 0.0
    %941 = vmatpush2.msra.mxu0 0.0
    %942 = vmatprep.subr.mxu0 0.0
    %943 = vmatpush2.msra.mxu0 0.0
    %944 = vmatprep.subr.mxu0 0.0
    %945 = vmatpush2.msra.mxu0 0.0
    %946 = vmatprep.subr.mxu0 0.0
    %947 = vmatpush2.msra.mxu0 0.0
    %948 = vmatprep.subr.mxu0 0.0
    %949 = vmatpush2.msra.mxu0 0.0
    %950 = vmatprep.subr.mxu0 0.0
    %951 = vmatpush2.msra.mxu0 0.0
    %952 = vmatprep.subr.mxu0 0.0
    %953 = vmatpush2.msra.mxu0 0.0
    %954 = vmatprep.subr.mxu0 0.0
    %955 = vmatpush2.msra.mxu0 0.0
    %956 = vmatprep.subr.mxu0 %v894
    %957 = vmatpush2.msra.mxu0 %v893
    %958 = vmatprep.subr.mxu0 %v892
    %959 = vmatpush2.msra.mxu0 %v891
    %960 = vmatprep.subr.mxu0 %v890
    %961 = vmatpush2.msra.mxu0 %v889
    %962 = vmatprep.subr.mxu0 %v888
    %963 = vmatpush2.msra.mxu0 %v887
    %964 = vmatprep.subr.mxu0 %v886
    %965 = vmatpush2.msra.mxu0 %v885
    %966 = vmatprep.mubr.f32.mxu0 %v897
    %967 = vmatmul.mubr.f32.gmra.mxu0 %v849
    %v968 = vpop.f32.mrf.mxu0
    %v969 = vadd.f32 0.0, %v968
    %v970 = vpop.f32.mrf.mxu0
    %v971 = vadd.f32 0.0, %v970
    %972 = vmatprep.mubr.f32.mxu0 %v900
    %973 = vmatmul.mubr.f32.gmra.mxu0 %v851
    %v974 = vpop.f32.mrf.mxu0
    %v975 = vadd.f32 0.0, %v974
    %v976 = vpop.f32.mrf.mxu0
    %v977 = vadd.f32 0.0, %v976
    %978 = vdwg.mxu0
    %v979 = vmax.f32 %v849, %v969
    %v980 = vmax.f32 %v850, %v971
    %v981 = vmax.f32 %v851, %v975
    %v982 = vmax.f32 %v852, %v977
    %983 = vst [vmem:[#allocation2] sm:$0xff] %v979
    %984 = vst.msk [vmem:[#allocation2 + $0x8] sm:$0xff] %vm895, %v980
    %985 = vst [vmem:[#allocation2 + $0x10] sm:$0x3f] %v981
    %vm986 = vcmask 324608
    %987 = vst.msk [vmem:[#allocation2 + $0x18] sm:$0x3f] %vm986, %v982
    %v988 = vld [vmem:[#allocation2] sm:$0xff]
    %v989 = vld [vmem:[#allocation2 + $0x8] sm:$0xff]
    %v990 = vld [vmem:[#allocation2 + $0x10] sm:$0x3]
    %v991 = vld [vmem:[#allocation2 + $0x18] sm:$0x3]
    %v992 = vld [vmem:[%s3] sm:$0xff]
    %v993 = vld [vmem:[%s3 + $0x8] sm:$0xff]
    %v994 = vld [vmem:[%s3 + $0x10] sm:$0xff]
    %v995 = vld [vmem:[%s3 + $0x18] sm:$0xff]
    %v996 = vld [vmem:[%s3 + $0x20] sm:$0xff]
    %v997 = vld [vmem:[%s3 + $0x28] sm:$0xff]
    %v998 = vld [vmem:[%s3 + $0x30] sm:$0xff]
    %v999 = vld [vmem:[%s3 + $0x38] sm:$0xff]
    %v1000 = vld [vmem:[%s3 + $0x40] sm:$0xff]
    %v1001 = vld [vmem:[%s3 + $0x48] sm:$0xff]
    %v1002 = vld [vmem:[%s3 + $0x50] sm:$0xff]
    %v1003 = vld [vmem:[%s3 + $0x58] sm:$0xff]
    %v1004 = vld [vmem:[%s3 + $0x60] sm:$0xff]
    %v1005 = vld [vmem:[%s3 + $0x68] sm:$0xff]
    %v1006 = vld [vmem:[%s3 + $0x70] sm:$0xff]
    %v1007 = vld [vmem:[%s3 + $0x78] sm:$0xff]
    %v1008 = vld [vmem:[%s3 + $0x80] sm:$0xff]
    %v1009 = vld [vmem:[%s3 + $0x88] sm:$0xff]
    %v1010 = vld [vmem:[%s3 + $0x90] sm:$0xff]
    %v1011 = vld [vmem:[%s3 + $0x98] sm:$0xff]
    %v1012 = vld [vmem:[%s3 + $0xa0] sm:$0xff]
    %v1013 = vld [vmem:[%s3 + $0xa8] sm:$0xff]
    %v1014 = vld [vmem:[%s3 + $0xb0] sm:$0xff]
    %v1015 = vld [vmem:[%s3 + $0xb8] sm:$0xff]
    %v1016 = vld [vmem:[%s3 + $0xc0] sm:$0xff]
    %v1017 = vld [vmem:[%s3 + $0xc8] sm:$0xff]
    %v1018 = vld [vmem:[%s3 + $0xd0] sm:$0xff]
    %v1019 = vld [vmem:[%s3 + $0xd8] sm:$0xff]
    %v1020 = vld [vmem:[%s3 + $0xe0] sm:$0xff]
    %v1021 = vld [vmem:[%s3 + $0xe8] sm:$0xff]
    %v1022 = vld [vmem:[%s3 + $0xf0] sm:$0xff]
    %v1023 = vld [vmem:[%s3 + $0xf8] sm:$0xff]
    %v1024 = vld [vmem:[%s3 + $0x100] sm:$0xff]
    %v1025 = vld [vmem:[%s3 + $0x108] sm:$0xff]
    %v1026 = vld [vmem:[%s3 + $0x110] sm:$0xff]
    %v1027 = vld [vmem:[%s3 + $0x118] sm:$0xff]
    %v1028 = vld [vmem:[%s3 + $0x120] sm:$0xff]
    %v1029 = vld [vmem:[%s3 + $0x128] sm:$0xff]
    %v1030 = vld [vmem:[%s3 + $0x130] sm:$0xff]
    %v1031 = vld [vmem:[%s3 + $0x138] sm:$0xff]
    %v1032 = vld [vmem:[%s3 + $0x140] sm:$0xff]
    %v1033 = vld [vmem:[%s3 + $0x148] sm:$0xff]
    %v1034 = vld [vmem:[#allocation2] sm:$0xfe]
    %v1035 = vld [vmem:[#allocation2 + $0x8] sm:$0xfe]
    %v1036 = vld [vmem:[#allocation2 + $0x10] sm:$0x7]
    %v1037 = vld [vmem:[#allocation2 + $0x18] sm:$0x7]
    %s1038 = scalar_lea.vmem %s3, 336
    %v1039 = vld [vmem:[%s1038] sm:$0xff]
    %v1040 = vld [vmem:[%s1038 + $0x8] sm:$0xff]
    %v1041 = vld [vmem:[%s1038 + $0x10] sm:$0xff]
    %v1042 = vld [vmem:[%s1038 + $0x18] sm:$0xff]
    %v1043 = vld [vmem:[%s1038 + $0x20] sm:$0xff]
    %v1044 = vld [vmem:[%s1038 + $0x28] sm:$0xff]
    %v1045 = vld [vmem:[%s1038 + $0x30] sm:$0xff]
    %v1046 = vld [vmem:[%s1038 + $0x38] sm:$0xff]
    %v1047 = vld [vmem:[%s1038 + $0x40] sm:$0xff]
    %v1048 = vld [vmem:[%s1038 + $0x48] sm:$0xff]
    %v1049 = vld [vmem:[%s1038 + $0x50] sm:$0xff]
    %v1050 = vld [vmem:[%s1038 + $0x58] sm:$0xff]
    %v1051 = vld [vmem:[%s1038 + $0x60] sm:$0xff]
    %v1052 = vld [vmem:[%s1038 + $0x68] sm:$0xff]
    %v1053 = vld [vmem:[%s1038 + $0x70] sm:$0xff]
    %v1054 = vld [vmem:[%s1038 + $0x78] sm:$0xff]
    %v1055 = vld [vmem:[%s1038 + $0x80] sm:$0xff]
    %v1056 = vld [vmem:[%s1038 + $0x88] sm:$0xff]
    %v1057 = vld [vmem:[%s1038 + $0x90] sm:$0xff]
    %v1058 = vld [vmem:[%s1038 + $0x98] sm:$0xff]
    %v1059 = vld [vmem:[%s1038 + $0xa0] sm:$0xff]
    %v1060 = vld [vmem:[%s1038 + $0xa8] sm:$0xff]
    %v1061 = vld [vmem:[%s1038 + $0xb0] sm:$0xff]
    %v1062 = vld [vmem:[%s1038 + $0xb8] sm:$0xff]
    %v1063 = vld [vmem:[%s1038 + $0xc0] sm:$0xff]
    %v1064 = vld [vmem:[%s1038 + $0xc8] sm:$0xff]
    %v1065 = vld [vmem:[%s1038 + $0xd0] sm:$0xff]
    %v1066 = vld [vmem:[%s1038 + $0xd8] sm:$0xff]
    %v1067 = vld [vmem:[%s1038 + $0xe0] sm:$0xff]
    %v1068 = vld [vmem:[%s1038 + $0xe8] sm:$0xff]
    %v1069 = vld [vmem:[%s1038 + $0xf0] sm:$0xff]
    %v1070 = vld [vmem:[%s1038 + $0xf8] sm:$0xff]
    %v1071 = vld [vmem:[%s1038 + $0x100] sm:$0xff]
    %v1072 = vld [vmem:[%s1038 + $0x108] sm:$0xff]
    %v1073 = vld [vmem:[%s1038 + $0x110] sm:$0xff]
    %v1074 = vld [vmem:[%s1038 + $0x118] sm:$0xff]
    %v1075 = vld [vmem:[%s1038 + $0x120] sm:$0xff]
    %v1076 = vld [vmem:[%s1038 + $0x128] sm:$0xff]
    %v1077 = vld [vmem:[%s1038 + $0x130] sm:$0xff]
    %v1078 = vld [vmem:[%s1038 + $0x138] sm:$0xff]
    %v1079 = vld [vmem:[%s1038 + $0x140] sm:$0xff]
    %v1080 = vld [vmem:[%s1038 + $0x148] sm:$0xff]
    %vm1085 = vcmask 1046528
    %v1086 = vrot.slane %v1034, 1
    %v1087 = vrot.slane %v1036, 1
    %v1088 = vsel %vm1085, %v1086, %v1087
    %v1089 = vrot.slane %v1035, 1
    %v1090 = vrot.slane %v1037, 1
    %v1091 = vsel %vm1085, %v1089, %v1090
    %v1094 = vsel %vm895, %v1091, 0
    %v1096 = vsel %vm895, %v1090, 0
    %1098 = vmatprep.subr.mxu0 %v1070
    %1099 = vmatpush1.msra.mxu0 %v1069
    %1100 = vmatprep.subr.mxu0 %v1068
    %1101 = vmatpush1.msra.mxu0 %v1067
    %1102 = vmatprep.subr.mxu0 %v1066
    %1103 = vmatpush1.msra.mxu0 %v1065
    %1104 = vmatprep.subr.mxu0 %v1064
    %1105 = vmatpush1.msra.mxu0 %v1063
    %1106 = vmatprep.subr.mxu0 %v1062
    %1107 = vmatpush1.msra.mxu0 %v1061
    %1108 = vmatprep.subr.mxu0 %v1060
    %1109 = vmatpush1.msra.mxu0 %v1059
    %1110 = vmatprep.subr.mxu0 %v1058
    %1111 = vmatpush1.msra.mxu0 %v1057
    %1112 = vmatprep.subr.mxu0 %v1056
    %1113 = vmatpush1.msra.mxu0 %v1055
    %1114 = vmatprep.subr.mxu0 %v1054
    %1115 = vmatpush1.msra.mxu0 %v1053
    %1116 = vmatprep.subr.mxu0 %v1052
    %1117 = vmatpush1.msra.mxu0 %v1051
    %1118 = vmatprep.subr.mxu0 %v1050
    %1119 = vmatpush1.msra.mxu0 %v1049
    %1120 = vmatprep.subr.mxu0 %v1048
    %1121 = vmatpush1.msra.mxu0 %v1047
    %1122 = vmatprep.subr.mxu0 %v1046
    %1123 = vmatpush1.msra.mxu0 %v1045
    %1124 = vmatprep.subr.mxu0 %v1044
    %1125 = vmatpush1.msra.mxu0 %v1043
    %1126 = vmatprep.subr.mxu0 %v1042
    %1127 = vmatpush1.msra.mxu0 %v1041
    %1128 = vmatprep.subr.mxu0 %v1040
    %1129 = vmatpush1.msra.mxu0 %v1039
    %1130 = vmatprep.subr.mxu0 0.0
    %1131 = vmatpush2.msra.mxu0 0.0
    %1132 = vmatprep.subr.mxu0 0.0
    %1133 = vmatpush2.msra.mxu0 0.0
    %1134 = vmatprep.subr.mxu0 0.0
    %1135 = vmatpush2.msra.mxu0 0.0
    %1136 = vmatprep.subr.mxu0 0.0
    %1137 = vmatpush2.msra.mxu0 0.0
    %1138 = vmatprep.subr.mxu0 0.0
    %1139 = vmatpush2.msra.mxu0 0.0
    %1140 = vmatprep.subr.mxu0 0.0
    %1141 = vmatpush2.msra.mxu0 0.0
    %1142 = vmatprep.subr.mxu0 0.0
    %1143 = vmatpush2.msra.mxu0 0.0
    %1144 = vmatprep.subr.mxu0 0.0
    %1145 = vmatpush2.msra.mxu0 0.0
    %1146 = vmatprep.subr.mxu0 0.0
    %1147 = vmatpush2.msra.mxu0 0.0
    %1148 = vmatprep.subr.mxu0 0.0
    %1149 = vmatpush2.msra.mxu0 0.0
    %1150 = vmatprep.subr.mxu0 0.0
    %1151 = vmatpush2.msra.mxu0 0.0
    %1152 = vmatprep.subr.mxu0 %v1080
    %1153 = vmatpush2.msra.mxu0 %v1079
    %1154 = vmatprep.subr.mxu0 %v1078
    %1155 = vmatpush2.msra.mxu0 %v1077
    %1156 = vmatprep.subr.mxu0 %v1076
    %1157 = vmatpush2.msra.mxu0 %v1075
    %1158 = vmatprep.subr.mxu0 %v1074
    %1159 = vmatpush2.msra.mxu0 %v1073
    %1160 = vmatprep.subr.mxu0 %v1072
    %1161 = vmatpush2.msra.mxu0 %v1071
    %1162 = vmatprep.mubr.f32.mxu0 %v1094
    %1163 = vmatmul.mubr.f32.gmra.mxu0 %v1088
    %v1164 = vpop.f32.mrf.mxu0
    %v1165 = vadd.f32 0.0, %v1164
    %v1166 = vpop.f32.mrf.mxu0
    %v1167 = vadd.f32 0.0, %v1166
    %1168 = vmatprep.mubr.f32.mxu0 %v1096
    %1169 = vmatmul.mubr.f32.gmra.mxu0 %v1087
    %v1170 = vpop.f32.mrf.mxu0
    %v1171 = vadd.f32 0.0, %v1170
    %v1172 = vpop.f32.mrf.mxu0
    %v1173 = vadd.f32 0.0, %v1172
    %1174 = vdwg.mxu0
    %v1176 = vsel %vm895, %v989, 0
    %v1179 = vsel %vm895, %v991, 0
    %1181 = vmatprep.subr.mxu0 %v1023
    %1182 = vmatpush1.msra.mxu0 %v1022
    %1183 = vmatprep.subr.mxu0 %v1021
    %1184 = vmatpush1.msra.mxu0 %v1020
    %1185 = vmatprep.subr.mxu0 %v1019
    %1186 = vmatpush1.msra.mxu0 %v1018
    %1187 = vmatprep.subr.mxu0 %v1017
    %1188 = vmatpush1.msra.mxu0 %v1016
    %1189 = vmatprep.subr.mxu0 %v1015
    %1190 = vmatpush1.msra.mxu0 %v1014
    %1191 = vmatprep.subr.mxu0 %v1013
    %1192 = vmatpush1.msra.mxu0 %v1012
    %1193 = vmatprep.subr.mxu0 %v1011
    %1194 = vmatpush1.msra.mxu0 %v1010
    %1195 = vmatprep.subr.mxu0 %v1009
    %1196 = vmatpush1.msra.mxu0 %v1008
    %1197 = vmatprep.subr.mxu0 %v1007
    %1198 = vmatpush1.msra.mxu0 %v1006
    %1199 = vmatprep.subr.mxu0 %v1005
    %1200 = vmatpush1.msra.mxu0 %v1004
    %1201 = vmatprep.subr.mxu0 %v1003
    %1202 = vmatpush1.msra.mxu0 %v1002
    %1203 = vmatprep.subr.mxu0 %v1001
    %1204 = vmatpush1.msra.mxu0 %v1000
    %1205 = vmatprep.subr.mxu0 %v999
    %1206 = vmatpush1.msra.mxu0 %v998
    %1207 = vmatprep.subr.mxu0 %v997
    %1208 = vmatpush1.msra.mxu0 %v996
    %1209 = vmatprep.subr.mxu0 %v995
    %1210 = vmatpush1.msra.mxu0 %v994
    %1211 = vmatprep.subr.mxu0 %v993
    %1212 = vmatpush1.msra.mxu0 %v992
    %1213 = vmatprep.subr.mxu0 0.0
    %1214 = vmatpush2.msra.mxu0 0.0
    %1215 = vmatprep.subr.mxu0 0.0
    %1216 = vmatpush2.msra.mxu0 0.0
    %1217 = vmatprep.subr.mxu0 0.0
    %1218 = vmatpush2.msra.mxu0 0.0
    %1219 = vmatprep.subr.mxu0 0.0
    %1220 = vmatpush2.msra.mxu0 0.0
    %1221 = vmatprep.subr.mxu0 0.0
    %1222 = vmatpush2.msra.mxu0 0.0
    %1223 = vmatprep.subr.mxu0 0.0
    %1224 = vmatpush2.msra.mxu0 0.0
    %1225 = vmatprep.subr.mxu0 0.0
    %1226 = vmatpush2.msra.mxu0 0.0
    %1227 = vmatprep.subr.mxu0 0.0
    %1228 = vmatpush2.msra.mxu0 0.0
    %1229 = vmatprep.subr.mxu0 0.0
    %1230 = vmatpush2.msra.mxu0 0.0
    %1231 = vmatprep.subr.mxu0 0.0
    %1232 = vmatpush2.msra.mxu0 0.0
    %1233 = vmatprep.subr.mxu0 0.0
    %1234 = vmatpush2.msra.mxu0 0.0
    %1235 = vmatprep.subr.mxu0 %v1033
    %1236 = vmatpush2.msra.mxu0 %v1032
    %1237 = vmatprep.subr.mxu0 %v1031
    %1238 = vmatpush2.msra.mxu0 %v1030
    %1239 = vmatprep.subr.mxu0 %v1029
    %1240 = vmatpush2.msra.mxu0 %v1028
    %1241 = vmatprep.subr.mxu0 %v1027
    %1242 = vmatpush2.msra.mxu0 %v1026
    %1243 = vmatprep.subr.mxu0 %v1025
    %1244 = vmatpush2.msra.mxu0 %v1024
    %1245 = vmatprep.mubr.f32.mxu0 %v1176
    %1246 = vmatmul.mubr.f32.gmra.mxu0 %v988
    %v1247 = vpop.f32.mrf.mxu0
    %v1248 = vadd.f32 %v1165, %v1247
    %v1249 = vpop.f32.mrf.mxu0
    %v1250 = vadd.f32 %v1167, %v1249
    %1251 = vmatprep.mubr.f32.mxu0 %v1179
    %1252 = vmatmul.mubr.f32.gmra.mxu0 %v990
    %v1253 = vpop.f32.mrf.mxu0
    %v1254 = vadd.f32 %v1171, %v1253
    %v1255 = vpop.f32.mrf.mxu0
    %v1256 = vadd.f32 %v1173, %v1255
    %1257 = vdwg.mxu0
    %v1258 = vld [vmem:[#allocation2] sm:$0xfc]
    %v1259 = vld [vmem:[#allocation2 + $0x8] sm:$0xfc]
    %v1260 = vld [vmem:[#allocation2 + $0x10] sm:$0xf]
    %v1261 = vld [vmem:[#allocation2 + $0x18] sm:$0xf]
    %s1262 = scalar_lea.vmem %s3, 672
    %v1263 = vld [vmem:[%s1262] sm:$0xff]
    %v1264 = vld [vmem:[%s1262 + $0x8] sm:$0xff]
    %v1265 = vld [vmem:[%s1262 + $0x10] sm:$0xff]
    %v1266 = vld [vmem:[%s1262 + $0x18] sm:$0xff]
    %v1267 = vld [vmem:[%s1262 + $0x20] sm:$0xff]
    %v1268 = vld [vmem:[%s1262 + $0x28] sm:$0xff]
    %v1269 = vld [vmem:[%s1262 + $0x30] sm:$0xff]
    %v1270 = vld [vmem:[%s1262 + $0x38] sm:$0xff]
    %v1271 = vld [vmem:[%s1262 + $0x40] sm:$0xff]
    %v1272 = vld [vmem:[%s1262 + $0x48] sm:$0xff]
    %v1273 = vld [vmem:[%s1262 + $0x50] sm:$0xff]
    %v1274 = vld [vmem:[%s1262 + $0x58] sm:$0xff]
    %v1275 = vld [vmem:[%s1262 + $0x60] sm:$0xff]
    %v1276 = vld [vmem:[%s1262 + $0x68] sm:$0xff]
    %v1277 = vld [vmem:[%s1262 + $0x70] sm:$0xff]
    %v1278 = vld [vmem:[%s1262 + $0x78] sm:$0xff]
    %v1279 = vld [vmem:[%s1262 + $0x80] sm:$0xff]
    %v1280 = vld [vmem:[%s1262 + $0x88] sm:$0xff]
    %v1281 = vld [vmem:[%s1262 + $0x90] sm:$0xff]
    %v1282 = vld [vmem:[%s1262 + $0x98] sm:$0xff]
    %v1283 = vld [vmem:[%s1262 + $0xa0] sm:$0xff]
    %v1284 = vld [vmem:[%s1262 + $0xa8] sm:$0xff]
    %v1285 = vld [vmem:[%s1262 + $0xb0] sm:$0xff]
    %v1286 = vld [vmem:[%s1262 + $0xb8] sm:$0xff]
    %v1287 = vld [vmem:[%s1262 + $0xc0] sm:$0xff]
    %v1288 = vld [vmem:[%s1262 + $0xc8] sm:$0xff]
    %v1289 = vld [vmem:[%s1262 + $0xd0] sm:$0xff]
    %v1290 = vld [vmem:[%s1262 + $0xd8] sm:$0xff]
    %v1291 = vld [vmem:[%s1262 + $0xe0] sm:$0xff]
    %v1292 = vld [vmem:[%s1262 + $0xe8] sm:$0xff]
    %v1293 = vld [vmem:[%s1262 + $0xf0] sm:$0xff]
    %v1294 = vld [vmem:[%s1262 + $0xf8] sm:$0xff]
    %v1295 = vld [vmem:[%s1262 + $0x100] sm:$0xff]
    %v1296 = vld [vmem:[%s1262 + $0x108] sm:$0xff]
    %v1297 = vld [vmem:[%s1262 + $0x110] sm:$0xff]
    %v1298 = vld [vmem:[%s1262 + $0x118] sm:$0xff]
    %v1299 = vld [vmem:[%s1262 + $0x120] sm:$0xff]
    %v1300 = vld [vmem:[%s1262 + $0x128] sm:$0xff]
    %v1301 = vld [vmem:[%s1262 + $0x130] sm:$0xff]
    %v1302 = vld [vmem:[%s1262 + $0x138] sm:$0xff]
    %v1303 = vld [vmem:[%s1262 + $0x140] sm:$0xff]
    %v1304 = vld [vmem:[%s1262 + $0x148] sm:$0xff]
    %vm1309 = vcmask 1045504
    %v1310 = vrot.slane %v1258, 2
    %v1311 = vrot.slane %v1260, 2
    %v1312 = vsel %vm1309, %v1310, %v1311
    %v1313 = vrot.slane %v1259, 2
    %v1314 = vrot.slane %v1261, 2
    %v1315 = vsel %vm1309, %v1313, %v1314
    %v1318 = vsel %vm895, %v1315, 0
    %v1320 = vsel %vm895, %v1314, 0
    %1322 = vmatprep.subr.mxu0 %v1294
    %1323 = vmatpush1.msra.mxu0 %v1293
    %1324 = vmatprep.subr.mxu0 %v1292
    %1325 = vmatpush1.msra.mxu0 %v1291
    %1326 = vmatprep.subr.mxu0 %v1290
    %1327 = vmatpush1.msra.mxu0 %v1289
    %1328 = vmatprep.subr.mxu0 %v1288
    %1329 = vmatpush1.msra.mxu0 %v1287
    %1330 = vmatprep.subr.mxu0 %v1286
    %1331 = vmatpush1.msra.mxu0 %v1285
    %1332 = vmatprep.subr.mxu0 %v1284
    %1333 = vmatpush1.msra.mxu0 %v1283
    %1334 = vmatprep.subr.mxu0 %v1282
    %1335 = vmatpush1.msra.mxu0 %v1281
    %1336 = vmatprep.subr.mxu0 %v1280
    %1337 = vmatpush1.msra.mxu0 %v1279
    %1338 = vmatprep.subr.mxu0 %v1278
    %1339 = vmatpush1.msra.mxu0 %v1277
    %1340 = vmatprep.subr.mxu0 %v1276
    %1341 = vmatpush1.msra.mxu0 %v1275
    %1342 = vmatprep.subr.mxu0 %v1274
    %1343 = vmatpush1.msra.mxu0 %v1273
    %1344 = vmatprep.subr.mxu0 %v1272
    %1345 = vmatpush1.msra.mxu0 %v1271
    %1346 = vmatprep.subr.mxu0 %v1270
    %1347 = vmatpush1.msra.mxu0 %v1269
    %1348 = vmatprep.subr.mxu0 %v1268
    %1349 = vmatpush1.msra.mxu0 %v1267
    %1350 = vmatprep.subr.mxu0 %v1266
    %1351 = vmatpush1.msra.mxu0 %v1265
    %1352 = vmatprep.subr.mxu0 %v1264
    %1353 = vmatpush1.msra.mxu0 %v1263
    %1354 = vmatprep.subr.mxu0 0.0
    %1355 = vmatpush2.msra.mxu0 0.0
    %1356 = vmatprep.subr.mxu0 0.0
    %1357 = vmatpush2.msra.mxu0 0.0
    %1358 = vmatprep.subr.mxu0 0.0
    %1359 = vmatpush2.msra.mxu0 0.0
    %1360 = vmatprep.subr.mxu0 0.0
    %1361 = vmatpush2.msra.mxu0 0.0
    %1362 = vmatprep.subr.mxu0 0.0
    %1363 = vmatpush2.msra.mxu0 0.0
    %1364 = vmatprep.subr.mxu0 0.0
    %1365 = vmatpush2.msra.mxu0 0.0
    %1366 = vmatprep.subr.mxu0 0.0
    %1367 = vmatpush2.msra.mxu0 0.0
    %1368 = vmatprep.subr.mxu0 0.0
    %1369 = vmatpush2.msra.mxu0 0.0
    %1370 = vmatprep.subr.mxu0 0.0
    %1371 = vmatpush2.msra.mxu0 0.0
    %1372 = vmatprep.subr.mxu0 0.0
    %1373 = vmatpush2.msra.mxu0 0.0
    %1374 = vmatprep.subr.mxu0 0.0
    %1375 = vmatpush2.msra.mxu0 0.0
    %1376 = vmatprep.subr.mxu0 %v1304
    %1377 = vmatpush2.msra.mxu0 %v1303
    %1378 = vmatprep.subr.mxu0 %v1302
    %1379 = vmatpush2.msra.mxu0 %v1301
    %1380 = vmatprep.subr.mxu0 %v1300
    %1381 = vmatpush2.msra.mxu0 %v1299
    %1382 = vmatprep.subr.mxu0 %v1298
    %1383 = vmatpush2.msra.mxu0 %v1297
    %1384 = vmatprep.subr.mxu0 %v1296
    %1385 = vmatpush2.msra.mxu0 %v1295
    %1386 = vmatprep.mubr.f32.mxu0 %v1318
    %1387 = vmatmul.mubr.f32.gmra.mxu0 %v1312
    %v1388 = vpop.f32.mrf.mxu0
    %v1389 = vadd.f32 0.0, %v1388
    %v1390 = vpop.f32.mrf.mxu0
    %v1391 = vadd.f32 0.0, %v1390
    %1392 = vmatprep.mubr.f32.mxu0 %v1320
    %1393 = vmatmul.mubr.f32.gmra.mxu0 %v1311
    %v1394 = vpop.f32.mrf.mxu0
    %v1395 = vadd.f32 0.0, %v1394
    %v1396 = vpop.f32.mrf.mxu0
    %v1397 = vadd.f32 0.0, %v1396
    %1398 = vdwg.mxu0
    %v1399 = vadd.f32 %v1248, %v1389
    %v1400 = vadd.f32 %v1250, %v1391
    %v1401 = vadd.f32 %v1254, %v1395
    %v1402 = vadd.f32 %v1256, %v1397
    %v1403 = vld [vmem:[#allocation2] sm:$0xf8]
    %v1404 = vld [vmem:[#allocation2 + $0x8] sm:$0xf8]
    %v1405 = vld [vmem:[#allocation2 + $0x10] sm:$0x1f]
    %v1406 = vld [vmem:[#allocation2 + $0x18] sm:$0x1f]
    %s1407 = scalar_lea.vmem %s3, 1008
    %v1408 = vld [vmem:[%s1407] sm:$0xff]
    %v1409 = vld [vmem:[%s1407 + $0x8] sm:$0xff]
    %v1410 = vld [vmem:[%s1407 + $0x10] sm:$0xff]
    %v1411 = vld [vmem:[%s1407 + $0x18] sm:$0xff]
    %v1412 = vld [vmem:[%s1407 + $0x20] sm:$0xff]
    %v1413 = vld [vmem:[%s1407 + $0x28] sm:$0xff]
    %v1414 = vld [vmem:[%s1407 + $0x30] sm:$0xff]
    %v1415 = vld [vmem:[%s1407 + $0x38] sm:$0xff]
    %v1416 = vld [vmem:[%s1407 + $0x40] sm:$0xff]
    %v1417 = vld [vmem:[%s1407 + $0x48] sm:$0xff]
    %v1418 = vld [vmem:[%s1407 + $0x50] sm:$0xff]
    %v1419 = vld [vmem:[%s1407 + $0x58] sm:$0xff]
    %v1420 = vld [vmem:[%s1407 + $0x60] sm:$0xff]
    %v1421 = vld [vmem:[%s1407 + $0x68] sm:$0xff]
    %v1422 = vld [vmem:[%s1407 + $0x70] sm:$0xff]
    %v1423 = vld [vmem:[%s1407 + $0x78] sm:$0xff]
    %v1424 = vld [vmem:[%s1407 + $0x80] sm:$0xff]
    %v1425 = vld [vmem:[%s1407 + $0x88] sm:$0xff]
    %v1426 = vld [vmem:[%s1407 + $0x90] sm:$0xff]
    %v1427 = vld [vmem:[%s1407 + $0x98] sm:$0xff]
    %v1428 = vld [vmem:[%s1407 + $0xa0] sm:$0xff]
    %v1429 = vld [vmem:[%s1407 + $0xa8] sm:$0xff]
    %v1430 = vld [vmem:[%s1407 + $0xb0] sm:$0xff]
    %v1431 = vld [vmem:[%s1407 + $0xb8] sm:$0xff]
    %v1432 = vld [vmem:[%s1407 + $0xc0] sm:$0xff]
    %v1433 = vld [vmem:[%s1407 + $0xc8] sm:$0xff]
    %v1434 = vld [vmem:[%s1407 + $0xd0] sm:$0xff]
    %v1435 = vld [vmem:[%s1407 + $0xd8] sm:$0xff]
    %v1436 = vld [vmem:[%s1407 + $0xe0] sm:$0xff]
    %v1437 = vld [vmem:[%s1407 + $0xe8] sm:$0xff]
    %v1438 = vld [vmem:[%s1407 + $0xf0] sm:$0xff]
    %v1439 = vld [vmem:[%s1407 + $0xf8] sm:$0xff]
    %v1440 = vld [vmem:[%s1407 + $0x100] sm:$0xff]
    %v1441 = vld [vmem:[%s1407 + $0x108] sm:$0xff]
    %v1442 = vld [vmem:[%s1407 + $0x110] sm:$0xff]
    %v1443 = vld [vmem:[%s1407 + $0x118] sm:$0xff]
    %v1444 = vld [vmem:[%s1407 + $0x120] sm:$0xff]
    %v1445 = vld [vmem:[%s1407 + $0x128] sm:$0xff]
    %v1446 = vld [vmem:[%s1407 + $0x130] sm:$0xff]
    %v1447 = vld [vmem:[%s1407 + $0x138] sm:$0xff]
    %v1448 = vld [vmem:[%s1407 + $0x140] sm:$0xff]
    %v1449 = vld [vmem:[%s1407 + $0x148] sm:$0xff]
    %vm1454 = vcmask 1044480
    %v1455 = vrot.slane %v1403, 3
    %v1456 = vrot.slane %v1405, 3
    %v1457 = vsel %vm1454, %v1455, %v1456
    %v1458 = vrot.slane %v1404, 3
    %v1459 = vrot.slane %v1406, 3
    %v1460 = vsel %vm1454, %v1458, %v1459
    %v1463 = vsel %vm895, %v1460, 0
    %v1465 = vsel %vm895, %v1459, 0
    %1467 = vmatprep.subr.mxu0 %v1439
    %1468 = vmatpush1.msra.mxu0 %v1438
    %1469 = vmatprep.subr.mxu0 %v1437
    %1470 = vmatpush1.msra.mxu0 %v1436
    %1471 = vmatprep.subr.mxu0 %v1435
    %1472 = vmatpush1.msra.mxu0 %v1434
    %1473 = vmatprep.subr.mxu0 %v1433
    %1474 = vmatpush1.msra.mxu0 %v1432
    %1475 = vmatprep.subr.mxu0 %v1431
    %1476 = vmatpush1.msra.mxu0 %v1430
    %1477 = vmatprep.subr.mxu0 %v1429
    %1478 = vmatpush1.msra.mxu0 %v1428
    %1479 = vmatprep.subr.mxu0 %v1427
    %1480 = vmatpush1.msra.mxu0 %v1426
    %1481 = vmatprep.subr.mxu0 %v1425
    %1482 = vmatpush1.msra.mxu0 %v1424
    %1483 = vmatprep.subr.mxu0 %v1423
    %1484 = vmatpush1.msra.mxu0 %v1422
    %1485 = vmatprep.subr.mxu0 %v1421
    %1486 = vmatpush1.msra.mxu0 %v1420
    %1487 = vmatprep.subr.mxu0 %v1419
    %1488 = vmatpush1.msra.mxu0 %v1418
    %1489 = vmatprep.subr.mxu0 %v1417
    %1490 = vmatpush1.msra.mxu0 %v1416
    %1491 = vmatprep.subr.mxu0 %v1415
    %1492 = vmatpush1.msra.mxu0 %v1414
    %1493 = vmatprep.subr.mxu0 %v1413
    %1494 = vmatpush1.msra.mxu0 %v1412
    %1495 = vmatprep.subr.mxu0 %v1411
    %1496 = vmatpush1.msra.mxu0 %v1410
    %1497 = vmatprep.subr.mxu0 %v1409
    %1498 = vmatpush1.msra.mxu0 %v1408
    %1499 = vmatprep.subr.mxu0 0.0
    %1500 = vmatpush2.msra.mxu0 0.0
    %1501 = vmatprep.subr.mxu0 0.0
    %1502 = vmatpush2.msra.mxu0 0.0
    %1503 = vmatprep.subr.mxu0 0.0
    %1504 = vmatpush2.msra.mxu0 0.0
    %1505 = vmatprep.subr.mxu0 0.0
    %1506 = vmatpush2.msra.mxu0 0.0
    %1507 = vmatprep.subr.mxu0 0.0
    %1508 = vmatpush2.msra.mxu0 0.0
    %1509 = vmatprep.subr.mxu0 0.0
    %1510 = vmatpush2.msra.mxu0 0.0
    %1511 = vmatprep.subr.mxu0 0.0
    %1512 = vmatpush2.msra.mxu0 0.0
    %1513 = vmatprep.subr.mxu0 0.0
    %1514 = vmatpush2.msra.mxu0 0.0
    %1515 = vmatprep.subr.mxu0 0.0
    %1516 = vmatpush2.msra.mxu0 0.0
    %1517 = vmatprep.subr.mxu0 0.0
    %1518 = vmatpush2.msra.mxu0 0.0
    %1519 = vmatprep.subr.mxu0 0.0
    %1520 = vmatpush2.msra.mxu0 0.0
    %1521 = vmatprep.subr.mxu0 %v1449
    %1522 = vmatpush2.msra.mxu0 %v1448
    %1523 = vmatprep.subr.mxu0 %v1447
    %1524 = vmatpush2.msra.mxu0 %v1446
    %1525 = vmatprep.subr.mxu0 %v1445
    %1526 = vmatpush2.msra.mxu0 %v1444
    %1527 = vmatprep.subr.mxu0 %v1443
    %1528 = vmatpush2.msra.mxu0 %v1442
    %1529 = vmatprep.subr.mxu0 %v1441
    %1530 = vmatpush2.msra.mxu0 %v1440
    %1531 = vmatprep.mubr.f32.mxu0 %v1463
    %1532 = vmatmul.mubr.f32.gmra.mxu0 %v1457
    %v1533 = vpop.f32.mrf.mxu0
    %v1534 = vadd.f32 0.0, %v1533
    %v1535 = vpop.f32.mrf.mxu0
    %v1536 = vadd.f32 0.0, %v1535
    %1537 = vmatprep.mubr.f32.mxu0 %v1465
    %1538 = vmatmul.mubr.f32.gmra.mxu0 %v1456
    %v1539 = vpop.f32.mrf.mxu0
    %v1540 = vadd.f32 0.0, %v1539
    %v1541 = vpop.f32.mrf.mxu0
    %v1542 = vadd.f32 0.0, %v1541
    %1543 = vdwg.mxu0
    %v1544 = vadd.f32 %v1399, %v1534
    %v1545 = vadd.f32 %v1400, %v1536
    %v1546 = vadd.f32 %v1401, %v1540
    %v1547 = vadd.f32 %v1402, %v1542
    %v1548 = vld [vmem:[#allocation2] sm:$0xf0]
    %v1549 = vld [vmem:[#allocation2 + $0x8] sm:$0xf0]
    %v1550 = vld [vmem:[#allocation2 + $0x10] sm:$0x3f]
    %v1551 = vld [vmem:[#allocation2 + $0x18] sm:$0x3f]
    %s1552 = scalar_lea.vmem %s3, 1344
    %v1553 = vld [vmem:[%s1552] sm:$0xff]
    %v1554 = vld [vmem:[%s1552 + $0x8] sm:$0xff]
    %v1555 = vld [vmem:[%s1552 + $0x10] sm:$0xff]
    %v1556 = vld [vmem:[%s1552 + $0x18] sm:$0xff]
    %v1557 = vld [vmem:[%s1552 + $0x20] sm:$0xff]
    %v1558 = vld [vmem:[%s1552 + $0x28] sm:$0xff]
    %v1559 = vld [vmem:[%s1552 + $0x30] sm:$0xff]
    %v1560 = vld [vmem:[%s1552 + $0x38] sm:$0xff]
    %v1561 = vld [vmem:[%s1552 + $0x40] sm:$0xff]
    %v1562 = vld [vmem:[%s1552 + $0x48] sm:$0xff]
    %v1563 = vld [vmem:[%s1552 + $0x50] sm:$0xff]
    %v1564 = vld [vmem:[%s1552 + $0x58] sm:$0xff]
    %v1565 = vld [vmem:[%s1552 + $0x60] sm:$0xff]
    %v1566 = vld [vmem:[%s1552 + $0x68] sm:$0xff]
    %v1567 = vld [vmem:[%s1552 + $0x70] sm:$0xff]
    %v1568 = vld [vmem:[%s1552 + $0x78] sm:$0xff]
    %v1569 = vld [vmem:[%s1552 + $0x80] sm:$0xff]
    %v1570 = vld [vmem:[%s1552 + $0x88] sm:$0xff]
    %v1571 = vld [vmem:[%s1552 + $0x90] sm:$0xff]
    %v1572 = vld [vmem:[%s1552 + $0x98] sm:$0xff]
    %v1573 = vld [vmem:[%s1552 + $0xa0] sm:$0xff]
    %v1574 = vld [vmem:[%s1552 + $0xa8] sm:$0xff]
    %v1575 = vld [vmem:[%s1552 + $0xb0] sm:$0xff]
    %v1576 = vld [vmem:[%s1552 + $0xb8] sm:$0xff]
    %v1577 = vld [vmem:[%s1552 + $0xc0] sm:$0xff]
    %v1578 = vld [vmem:[%s1552 + $0xc8] sm:$0xff]
    %v1579 = vld [vmem:[%s1552 + $0xd0] sm:$0xff]
    %v1580 = vld [vmem:[%s1552 + $0xd8] sm:$0xff]
    %v1581 = vld [vmem:[%s1552 + $0xe0] sm:$0xff]
    %v1582 = vld [vmem:[%s1552 + $0xe8] sm:$0xff]
    %v1583 = vld [vmem:[%s1552 + $0xf0] sm:$0xff]
    %v1584 = vld [vmem:[%s1552 + $0xf8] sm:$0xff]
    %v1585 = vld [vmem:[%s1552 + $0x100] sm:$0xff]
    %v1586 = vld [vmem:[%s1552 + $0x108] sm:$0xff]
    %v1587 = vld [vmem:[%s1552 + $0x110] sm:$0xff]
    %v1588 = vld [vmem:[%s1552 + $0x118] sm:$0xff]
    %v1589 = vld [vmem:[%s1552 + $0x120] sm:$0xff]
    %v1590 = vld [vmem:[%s1552 + $0x128] sm:$0xff]
    %v1591 = vld [vmem:[%s1552 + $0x130] sm:$0xff]
    %v1592 = vld [vmem:[%s1552 + $0x138] sm:$0xff]
    %v1593 = vld [vmem:[%s1552 + $0x140] sm:$0xff]
    %v1594 = vld [vmem:[%s1552 + $0x148] sm:$0xff]
    %v1599 = vrot.slane %v1548, 4
    %v1600 = vrot.slane %v1550, 4
    %v1601 = vsel %vm680, %v1599, %v1600
    %v1602 = vrot.slane %v1549, 4
    %v1603 = vrot.slane %v1551, 4
    %v1604 = vsel %vm680, %v1602, %v1603
    %v1607 = vsel %vm895, %v1604, 0
    %v1609 = vsel %vm895, %v1603, 0
    %1611 = vmatprep.subr.mxu0 %v1584
    %1612 = vmatpush1.msra.mxu0 %v1583
    %1613 = vmatprep.subr.mxu0 %v1582
    %1614 = vmatpush1.msra.mxu0 %v1581
    %1615 = vmatprep.subr.mxu0 %v1580
    %1616 = vmatpush1.msra.mxu0 %v1579
    %1617 = vmatprep.subr.mxu0 %v1578
    %1618 = vmatpush1.msra.mxu0 %v1577
    %1619 = vmatprep.subr.mxu0 %v1576
    %1620 = vmatpush1.msra.mxu0 %v1575
    %1621 = vmatprep.subr.mxu0 %v1574
    %1622 = vmatpush1.msra.mxu0 %v1573
    %1623 = vmatprep.subr.mxu0 %v1572
    %1624 = vmatpush1.msra.mxu0 %v1571
    %1625 = vmatprep.subr.mxu0 %v1570
    %1626 = vmatpush1.msra.mxu0 %v1569
    %1627 = vmatprep.subr.mxu0 %v1568
    %1628 = vmatpush1.msra.mxu0 %v1567
    %1629 = vmatprep.subr.mxu0 %v1566
    %1630 = vmatpush1.msra.mxu0 %v1565
    %1631 = vmatprep.subr.mxu0 %v1564
    %1632 = vmatpush1.msra.mxu0 %v1563
    %1633 = vmatprep.subr.mxu0 %v1562
    %1634 = vmatpush1.msra.mxu0 %v1561
    %1635 = vmatprep.subr.mxu0 %v1560
    %1636 = vmatpush1.msra.mxu0 %v1559
    %1637 = vmatprep.subr.mxu0 %v1558
    %1638 = vmatpush1.msra.mxu0 %v1557
    %1639 = vmatprep.subr.mxu0 %v1556
    %1640 = vmatpush1.msra.mxu0 %v1555
    %1641 = vmatprep.subr.mxu0 %v1554
    %1642 = vmatpush1.msra.mxu0 %v1553
    %1643 = vmatprep.subr.mxu0 0.0
    %1644 = vmatpush2.msra.mxu0 0.0
    %1645 = vmatprep.subr.mxu0 0.0
    %1646 = vmatpush2.msra.mxu0 0.0
    %1647 = vmatprep.subr.mxu0 0.0
    %1648 = vmatpush2.msra.mxu0 0.0
    %1649 = vmatprep.subr.mxu0 0.0
    %1650 = vmatpush2.msra.mxu0 0.0
    %1651 = vmatprep.subr.mxu0 0.0
    %1652 = vmatpush2.msra.mxu0 0.0
    %1653 = vmatprep.subr.mxu0 0.0
    %1654 = vmatpush2.msra.mxu0 0.0
    %1655 = vmatprep.subr.mxu0 0.0
    %1656 = vmatpush2.msra.mxu0 0.0
    %1657 = vmatprep.subr.mxu0 0.0
    %1658 = vmatpush2.msra.mxu0 0.0
    %1659 = vmatprep.subr.mxu0 0.0
    %1660 = vmatpush2.msra.mxu0 0.0
    %1661 = vmatprep.subr.mxu0 0.0
    %1662 = vmatpush2.msra.mxu0 0.0
    %1663 = vmatprep.subr.mxu0 0.0
    %1664 = vmatpush2.msra.mxu0 0.0
    %1665 = vmatprep.subr.mxu0 %v1594
    %1666 = vmatpush2.msra.mxu0 %v1593
    %1667 = vmatprep.subr.mxu0 %v1592
    %1668 = vmatpush2.msra.mxu0 %v1591
    %1669 = vmatprep.subr.mxu0 %v1590
    %1670 = vmatpush2.msra.mxu0 %v1589
    %1671 = vmatprep.subr.mxu0 %v1588
    %1672 = vmatpush2.msra.mxu0 %v1587
    %1673 = vmatprep.subr.mxu0 %v1586
    %1674 = vmatpush2.msra.mxu0 %v1585
    %1675 = vmatprep.mubr.f32.mxu0 %v1607
    %1676 = vmatmul.mubr.f32.gmra.mxu0 %v1601
    %v1677 = vpop.f32.mrf.mxu0
    %v1678 = vadd.f32 0.0, %v1677
    %v1679 = vpop.f32.mrf.mxu0
    %v1680 = vadd.f32 0.0, %v1679
    %1681 = vmatprep.mubr.f32.mxu0 %v1609
    %1682 = vmatmul.mubr.f32.gmra.mxu0 %v1600
    %v1683 = vpop.f32.mrf.mxu0
    %v1684 = vadd.f32 0.0, %v1683
    %v1685 = vpop.f32.mrf.mxu0
    %v1686 = vadd.f32 0.0, %v1685
    %1687 = vdwg.mxu0
    %v1688 = vadd.f32 %v1544, %v1678
    %v1689 = vadd.f32 %v1545, %v1680
    %v1690 = vadd.f32 %v1546, %v1684
    %v1691 = vadd.f32 %v1547, %v1686
    %v1692 = vld [vmem:[%s4] sm:$0x3]
    %v1694 = vlaneseq
    %v1695 = vshrl.u32 %v1694, 7
    %v1696 = vsub.s32 0, %v1695
    %v1697 = vrot.slane %v1692, %v1696
    %v1698 = vlaneseq
    %v1699 = vshrl.u32 %v1698, 7
    %v1700 = vsub.s32 1, %v1699
    %v1701 = vrot.slane %v1692, %v1700
    %v1704 = vadd.f32 %v1688, %v1697
    %v1705 = vadd.f32 %v1689, %v1701
    %v1706 = vadd.f32 %v1690, %v1697
    %v1707 = vadd.f32 %v1691, %v1701
    %v1708 = vld [vmem:[%s14] sm:$0x1f]
    %vm1709 = vcmask 80896
    %v1711 = vsel %vm1709, %v1708, 0
    %vm1713 = vcmask 1041408
    %v1715 = vsel %vm1713, %v1706, 0
    %v1718 = vsel %vm1713, %v1707, 0
    %1720 = vmatprep.subr.mxu0 0.0
    %1721 = vmatpush1.msra.mxu0 0.0
    %1722 = vmatprep.subr.mxu0 0.0
    %1723 = vmatpush1.msra.mxu0 0.0
    %1724 = vmatprep.subr.mxu0 0.0
    %1725 = vmatpush1.msra.mxu0 0.0
    %1726 = vmatprep.subr.mxu0 0.0
    %1727 = vmatpush1.msra.mxu0 0.0
    %1728 = vmatprep.subr.mxu0 0.0
    %1729 = vmatpush1.msra.mxu0 0.0
    %1730 = vmatprep.subr.mxu0 0.0
    %1731 = vmatpush1.msra.mxu0 0.0
    %1732 = vmatprep.subr.mxu0 0.0
    %1733 = vmatpush1.msra.mxu0 0.0
    %1734 = vmatprep.subr.mxu0 0.0
    %1735 = vmatpush1.msra.mxu0 0.0
    %1736 = vmatprep.subr.mxu0 0.0
    %1737 = vmatpush1.msra.mxu0 0.0
    %1738 = vmatprep.subr.mxu0 0.0
    %1739 = vmatpush1.msra.mxu0 0.0
    %1740 = vmatprep.subr.mxu0 0.0
    %1741 = vmatpush1.msra.mxu0 0.0
    %1742 = vmatprep.subr.mxu0 0.0
    %1743 = vmatpush1.msra.mxu0 0.0
    %1744 = vmatprep.subr.mxu0 0.0
    %1745 = vmatpush1.msra.mxu0 0.0
    %1746 = vmatprep.subr.mxu0 0.0
    %1747 = vmatpush1.msra.mxu0 0.0
    %1748 = vmatprep.subr.mxu0 %v1718
    %1749 = vmatpush1.msra.mxu0 %v1715
    %1750 = vmatprep.subr.mxu0 %v1705
    %1751 = vmatpush1.msra.mxu0 %v1704
    %1752 = vmatprep.subr.mxu0 0.0
    %1753 = vmatpush2.msra.mxu0 0.0
    %1754 = vmatprep.subr.mxu0 0.0
    %1755 = vmatpush2.msra.mxu0 0.0
    %1756 = vmatprep.subr.mxu0 0.0
    %1757 = vmatpush2.msra.mxu0 0.0
    %1758 = vmatprep.subr.mxu0 0.0
    %1759 = vmatpush2.msra.mxu0 0.0
    %1760 = vmatprep.subr.mxu0 0.0
    %1761 = vmatpush2.msra.mxu0 0.0
    %1762 = vmatprep.subr.mxu0 0.0
    %1763 = vmatpush2.msra.mxu0 0.0
    %1764 = vmatprep.subr.mxu0 0.0
    %1765 = vmatpush2.msra.mxu0 0.0
    %1766 = vmatprep.subr.mxu0 0.0
    %1767 = vmatpush2.msra.mxu0 0.0
    %1768 = vmatprep.subr.mxu0 0.0
    %1769 = vmatpush2.msra.mxu0 0.0
    %1770 = vmatprep.subr.mxu0 0.0
    %1771 = vmatpush2.msra.mxu0 0.0
    %1772 = vmatprep.subr.mxu0 0.0
    %1773 = vmatpush2.msra.mxu0 0.0
    %1774 = vmatprep.subr.mxu0 0.0
    %1775 = vmatpush2.msra.mxu0 0.0
    %1776 = vmatprep.subr.mxu0 0.0
    %1777 = vmatpush2.msra.mxu0 0.0
    %1778 = vmatprep.subr.mxu0 0.0
    %1779 = vmatpush2.msra.mxu0 0.0
    %1780 = vmatprep.subr.mxu0 0.0
    %1781 = vmatpush2.msra.mxu0 0.0
    %1782 = vmatprep.subr.mxu0 0.0
    %1783 = vmatpush2.msra.mxu0 0.0
    %1784 = vmatprep.mubr.f32.mxu0 0.0
    %1785 = vmatmul.mubr.f32.gmra.mxu0 %v1711
    %v1786 = vpop.f32.mrf.mxu0
    %v1787 = vadd.f32 0.0, %v1786
    %v1788 = vpop.f32.mrf.mxu0
    %v1789 = vadd.f32 0.0, %v1788
    %1790 = vdwg.mxu0
    %v1791 = vld [vmem:[%s15] sm:$0x1f]
    %v1793 = vsel %vm1709, %v1791, 0
    %1795 = vmatprep.subr.mxu0 0.0
    %1796 = vmatpush1.msra.mxu0 0.0
    %1797 = vmatprep.subr.mxu0 0.0
    %1798 = vmatpush1.msra.mxu0 0.0
    %1799 = vmatprep.subr.mxu0 0.0
    %1800 = vmatpush1.msra.mxu0 0.0
    %1801 = vmatprep.subr.mxu0 0.0
    %1802 = vmatpush1.msra.mxu0 0.0
    %1803 = vmatprep.subr.mxu0 0.0
    %1804 = vmatpush1.msra.mxu0 0.0
    %1805 = vmatprep.subr.mxu0 0.0
    %1806 = vmatpush1.msra.mxu0 0.0
    %1807 = vmatprep.subr.mxu0 0.0
    %1808 = vmatpush1.msra.mxu0 0.0
    %1809 = vmatprep.subr.mxu0 0.0
    %1810 = vmatpush1.msra.mxu0 0.0
    %1811 = vmatprep.subr.mxu0 0.0
    %1812 = vmatpush1.msra.mxu0 0.0
    %1813 = vmatprep.subr.mxu0 0.0
    %1814 = vmatpush1.msra.mxu0 0.0
    %1815 = vmatprep.subr.mxu0 0.0
    %1816 = vmatpush1.msra.mxu0 0.0
    %1817 = vmatprep.subr.mxu0 0.0
    %1818 = vmatpush1.msra.mxu0 0.0
    %1819 = vmatprep.subr.mxu0 0.0
    %1820 = vmatpush1.msra.mxu0 0.0
    %1821 = vmatprep.subr.mxu0 0.0
    %1822 = vmatpush1.msra.mxu0 0.0
    %1823 = vmatprep.subr.mxu0 %v1718
    %1824 = vmatpush1.msra.mxu0 %v1715
    %1825 = vmatprep.subr.mxu0 %v1705
    %1826 = vmatpush1.msra.mxu0 %v1704
    %1827 = vmatprep.subr.mxu0 0.0
    %1828 = vmatpush2.msra.mxu0 0.0
    %1829 = vmatprep.subr.mxu0 0.0
    %1830 = vmatpush2.msra.mxu0 0.0
    %1831 = vmatprep.subr.mxu0 0.0
    %1832 = vmatpush2.msra.mxu0 0.0
    %1833 = vmatprep.subr.mxu0 0.0
    %1834 = vmatpush2.msra.mxu0 0.0
    %1835 = vmatprep.subr.mxu0 0.0
    %1836 = vmatpush2.msra.mxu0 0.0
    %1837 = vmatprep.subr.mxu0 0.0
    %1838 = vmatpush2.msra.mxu0 0.0
    %1839 = vmatprep.subr.mxu0 0.0
    %1840 = vmatpush2.msra.mxu0 0.0
    %1841 = vmatprep.subr.mxu0 0.0
    %1842 = vmatpush2.msra.mxu0 0.0
    %1843 = vmatprep.subr.mxu0 0.0
    %1844 = vmatpush2.msra.mxu0 0.0
    %1845 = vmatprep.subr.mxu0 0.0
    %1846 = vmatpush2.msra.mxu0 0.0
    %1847 = vmatprep.subr.mxu0 0.0
    %1848 = vmatpush2.msra.mxu0 0.0
    %1849 = vmatprep.subr.mxu0 0.0
    %1850 = vmatpush2.msra.mxu0 0.0
    %1851 = vmatprep.subr.mxu0 0.0
    %1852 = vmatpush2.msra.mxu0 0.0
    %1853 = vmatprep.subr.mxu0 0.0
    %1854 = vmatpush2.msra.mxu0 0.0
    %1855 = vmatprep.subr.mxu0 0.0
    %1856 = vmatpush2.msra.mxu0 0.0
    %1857 = vmatprep.subr.mxu0 0.0
    %1858 = vmatpush2.msra.mxu0 0.0
    %1859 = vmatprep.mubr.f32.mxu0 0.0
    %1860 = vmatmul.mubr.f32.gmra.mxu0 %v1793
    %v1861 = vpop.f32.mrf.mxu0
    %v1862 = vadd.f32 0.0, %v1861
    %v1863 = vpop.f32.mrf.mxu0
    %v1864 = vadd.f32 0.0, %v1863
    %1865 = vdwg.mxu0
    %v1866 = vmax.f32 %v1787, %v1862
    %v1867 = vmax.f32 %v1789, %v1864
    %v1868 = vld [vmem:[%s16] sm:$0xff]
    %v1869 = vld [vmem:[%s16 + $0x8] sm:$0xff]
    %v1870 = vld [vmem:[%s16 + $0x10] sm:$0xff]
    %v1871 = vld [vmem:[%s16 + $0x18] sm:$0xff]
    %v1872 = vld [vmem:[%s16 + $0x20] sm:$0xff]
    %v1873 = vld [vmem:[%s16 + $0x28] sm:$0xff]
    %v1874 = vld [vmem:[%s16 + $0x30] sm:$0xff]
    %v1875 = vld [vmem:[%s16 + $0x38] sm:$0xff]
    %v1876 = vld [vmem:[%s16 + $0x40] sm:$0xff]
    %v1877 = vld [vmem:[%s16 + $0x48] sm:$0xff]
    %v1878 = vld [vmem:[%s16 + $0x50] sm:$0xff]
    %v1879 = vld [vmem:[%s16 + $0x58] sm:$0xff]
    %v1880 = vld [vmem:[%s16 + $0x60] sm:$0xff]
    %v1881 = vld [vmem:[%s16 + $0x68] sm:$0xff]
    %v1882 = vld [vmem:[%s16 + $0x70] sm:$0xff]
    %v1883 = vld [vmem:[%s16 + $0x78] sm:$0xff]
    %v1884 = vld [vmem:[%s16 + $0x80] sm:$0xff]
    %v1885 = vld [vmem:[%s16 + $0x88] sm:$0xff]
    %v1886 = vld [vmem:[%s16 + $0x90] sm:$0xff]
    %v1887 = vld [vmem:[%s16 + $0x98] sm:$0xff]
    %v1888 = vld [vmem:[%s16 + $0xa0] sm:$0xff]
    %v1889 = vld [vmem:[%s16 + $0xa8] sm:$0xff]
    %v1890 = vld [vmem:[%s16 + $0xb0] sm:$0xff]
    %v1891 = vld [vmem:[%s16 + $0xb8] sm:$0xff]
    %v1892 = vld [vmem:[%s16 + $0xc0] sm:$0xff]
    %v1893 = vld [vmem:[%s16 + $0xc8] sm:$0xff]
    %v1894 = vld [vmem:[%s16 + $0xd0] sm:$0xff]
    %v1895 = vld [vmem:[%s16 + $0xd8] sm:$0xff]
    %v1896 = vld [vmem:[%s16 + $0xe0] sm:$0xff]
    %v1897 = vld [vmem:[%s16 + $0xe8] sm:$0xff]
    %v1898 = vld [vmem:[%s16 + $0xf0] sm:$0xff]
    %v1899 = vld [vmem:[%s16 + $0xf8] sm:$0xff]
    %v1900 = vld [vmem:[%s16 + $0x100] sm:$0xff]
    %v1901 = vld [vmem:[%s16 + $0x108] sm:$0xff]
    %v1902 = vld [vmem:[%s16 + $0x110] sm:$0xff]
    %v1903 = vld [vmem:[%s16 + $0x118] sm:$0xff]
    %v1904 = vld [vmem:[%s16 + $0x120] sm:$0xff]
    %v1905 = vld [vmem:[%s16 + $0x128] sm:$0xff]
    %v1906 = vld [vmem:[%s16 + $0x130] sm:$0xff]
    %v1907 = vld [vmem:[%s16 + $0x138] sm:$0xff]
    %v1909 = vsel %vm82, %v1867, 0
    %1911 = vmatprep.subr.mxu0 %v1899
    %1912 = vmatpush1.msra.mxu0 %v1898
    %1913 = vmatprep.subr.mxu0 %v1897
    %1914 = vmatpush1.msra.mxu0 %v1896
    %1915 = vmatprep.subr.mxu0 %v1895
    %1916 = vmatpush1.msra.mxu0 %v1894
    %1917 = vmatprep.subr.mxu0 %v1893
    %1918 = vmatpush1.msra.mxu0 %v1892
    %1919 = vmatprep.subr.mxu0 %v1891
    %1920 = vmatpush1.msra.mxu0 %v1890
    %1921 = vmatprep.subr.mxu0 %v1889
    %1922 = vmatpush1.msra.mxu0 %v1888
    %1923 = vmatprep.subr.mxu0 %v1887
    %1924 = vmatpush1.msra.mxu0 %v1886
    %1925 = vmatprep.subr.mxu0 %v1885
    %1926 = vmatpush1.msra.mxu0 %v1884
    %1927 = vmatprep.subr.mxu0 %v1883
    %1928 = vmatpush1.msra.mxu0 %v1882
    %1929 = vmatprep.subr.mxu0 %v1881
    %1930 = vmatpush1.msra.mxu0 %v1880
    %1931 = vmatprep.subr.mxu0 %v1879
    %1932 = vmatpush1.msra.mxu0 %v1878
    %1933 = vmatprep.subr.mxu0 %v1877
    %1934 = vmatpush1.msra.mxu0 %v1876
    %1935 = vmatprep.subr.mxu0 %v1875
    %1936 = vmatpush1.msra.mxu0 %v1874
    %1937 = vmatprep.subr.mxu0 %v1873
    %1938 = vmatpush1.msra.mxu0 %v1872
    %1939 = vmatprep.subr.mxu0 %v1871
    %1940 = vmatpush1.msra.mxu0 %v1870
    %1941 = vmatprep.subr.mxu0 %v1869
    %1942 = vmatpush1.msra.mxu0 %v1868
    %1943 = vmatprep.subr.mxu0 0.0
    %1944 = vmatpush2.msra.mxu0 0.0
    %1945 = vmatprep.subr.mxu0 0.0
    %1946 = vmatpush2.msra.mxu0 0.0
    %1947 = vmatprep.subr.mxu0 0.0
    %1948 = vmatpush2.msra.mxu0 0.0
    %1949 = vmatprep.subr.mxu0 0.0
    %1950 = vmatpush2.msra.mxu0 0.0
    %1951 = vmatprep.subr.mxu0 0.0
    %1952 = vmatpush2.msra.mxu0 0.0
    %1953 = vmatprep.subr.mxu0 0.0
    %1954 = vmatpush2.msra.mxu0 0.0
    %1955 = vmatprep.subr.mxu0 0.0
    %1956 = vmatpush2.msra.mxu0 0.0
    %1957 = vmatprep.subr.mxu0 0.0
    %1958 = vmatpush2.msra.mxu0 0.0
    %1959 = vmatprep.subr.mxu0 0.0
    %1960 = vmatpush2.msra.mxu0 0.0
    %1961 = vmatprep.subr.mxu0 0.0
    %1962 = vmatpush2.msra.mxu0 0.0
    %1963 = vmatprep.subr.mxu0 0.0
    %1964 = vmatpush2.msra.mxu0 0.0
    %1965 = vmatprep.subr.mxu0 0.0
    %1966 = vmatpush2.msra.mxu0 0.0
    %1967 = vmatprep.subr.mxu0 %v1907
    %1968 = vmatpush2.msra.mxu0 %v1906
    %1969 = vmatprep.subr.mxu0 %v1905
    %1970 = vmatpush2.msra.mxu0 %v1904
    %1971 = vmatprep.subr.mxu0 %v1903
    %1972 = vmatpush2.msra.mxu0 %v1902
    %1973 = vmatprep.subr.mxu0 %v1901
    %1974 = vmatpush2.msra.mxu0 %v1900
    %1975 = vmatprep.mubr.f32.mxu0 %v1909
    %1976 = vmatmul.mubr.f32.gmra.mxu0 %v1866
    %v1977 = vpop.f32.mrf.mxu0
    %v1978 = vadd.f32 0.0, %v1977
    %v1979 = vpop.f32.mrf.mxu0
    %v1980 = vadd.f32 0.0, %v1979
    %1981 = vdwg.mxu0
    %v1982 = vmax.f32 %v1866, %v1978
    %v1983 = vmax.f32 %v1867, %v1980
    %1984 = vst [vmem:[#allocation3] sm:$0x1f] %v1982
    %vm1985 = vcmask 258048
    %1986 = vst.msk [vmem:[#allocation3 + $0x8] sm:$0x1f] %vm1985, %v1983
    %v1987 = vld [vmem:[#allocation3] ss:$8 sm:$0x3]
    %v1988 = vld [vmem:[%s5] sm:$0xff]
    %v1989 = vld [vmem:[%s5 + $0x8] sm:$0xff]
    %v1990 = vld [vmem:[%s5 + $0x10] sm:$0xff]
    %v1991 = vld [vmem:[%s5 + $0x18] sm:$0xff]
    %v1992 = vld [vmem:[%s5 + $0x20] sm:$0xff]
    %v1993 = vld [vmem:[%s5 + $0x28] sm:$0xff]
    %v1994 = vld [vmem:[%s5 + $0x30] sm:$0xff]
    %v1995 = vld [vmem:[%s5 + $0x38] sm:$0xff]
    %v1996 = vld [vmem:[%s5 + $0x40] sm:$0xff]
    %v1997 = vld [vmem:[%s5 + $0x48] sm:$0xff]
    %v1998 = vld [vmem:[%s5 + $0x50] sm:$0xff]
    %v1999 = vld [vmem:[%s5 + $0x58] sm:$0xff]
    %v2000 = vld [vmem:[%s5 + $0x60] sm:$0xff]
    %v2001 = vld [vmem:[%s5 + $0x68] sm:$0xff]
    %v2002 = vld [vmem:[%s5 + $0x70] sm:$0xff]
    %v2003 = vld [vmem:[%s5 + $0x78] sm:$0xff]
    %v2004 = vld [vmem:[%s5 + $0x80] sm:$0xff]
    %v2005 = vld [vmem:[%s5 + $0x88] sm:$0xff]
    %v2006 = vld [vmem:[%s5 + $0x90] sm:$0xff]
    %v2007 = vld [vmem:[%s5 + $0x98] sm:$0xff]
    %s2008 = scalar_lea.vmem [#allocation3], 1
    %v2009 = vld [vmem:[%s2008] ss:$8 sm:$0x3]
    %s2010 = scalar_lea.vmem %s5, 160
    %v2011 = vld [vmem:[%s2010] sm:$0xff]
    %v2012 = vld [vmem:[%s2010 + $0x8] sm:$0xff]
    %v2013 = vld [vmem:[%s2010 + $0x10] sm:$0xff]
    %v2014 = vld [vmem:[%s2010 + $0x18] sm:$0xff]
    %v2015 = vld [vmem:[%s2010 + $0x20] sm:$0xff]
    %v2016 = vld [vmem:[%s2010 + $0x28] sm:$0xff]
    %v2017 = vld [vmem:[%s2010 + $0x30] sm:$0xff]
    %v2018 = vld [vmem:[%s2010 + $0x38] sm:$0xff]
    %v2019 = vld [vmem:[%s2010 + $0x40] sm:$0xff]
    %v2020 = vld [vmem:[%s2010 + $0x48] sm:$0xff]
    %v2021 = vld [vmem:[%s2010 + $0x50] sm:$0xff]
    %v2022 = vld [vmem:[%s2010 + $0x58] sm:$0xff]
    %v2023 = vld [vmem:[%s2010 + $0x60] sm:$0xff]
    %v2024 = vld [vmem:[%s2010 + $0x68] sm:$0xff]
    %v2025 = vld [vmem:[%s2010 + $0x70] sm:$0xff]
    %v2026 = vld [vmem:[%s2010 + $0x78] sm:$0xff]
    %v2027 = vld [vmem:[%s2010 + $0x80] sm:$0xff]
    %v2028 = vld [vmem:[%s2010 + $0x88] sm:$0xff]
    %v2029 = vld [vmem:[%s2010 + $0x90] sm:$0xff]
    %v2030 = vld [vmem:[%s2010 + $0x98] sm:$0xff]
    %v2032 = vlaneseq
    %v2033 = vshrl.u32 %v2032, 7
    %v2034 = vsub.s32 0, %v2033
    %v2035 = vrot.slane %v2009, %v2034
    %v2036 = vlaneseq
    %v2037 = vshrl.u32 %v2036, 7
    %v2038 = vsub.s32 1, %v2037
    %v2039 = vrot.slane %v2009, %v2038
    %v2041 = vsel %vm82, %v2039, 0
    %2043 = vmatprep.subr.mxu0 0.0
    %2044 = vmatpush1.msra.mxu0 %v2026
    %2045 = vmatprep.subr.mxu0 0.0
    %2046 = vmatpush1.msra.mxu0 %v2025
    %2047 = vmatprep.subr.mxu0 0.0
    %2048 = vmatpush1.msra.mxu0 %v2024
    %2049 = vmatprep.subr.mxu0 0.0
    %2050 = vmatpush1.msra.mxu0 %v2023
    %2051 = vmatprep.subr.mxu0 0.0
    %2052 = vmatpush1.msra.mxu0 %v2022
    %2053 = vmatprep.subr.mxu0 0.0
    %2054 = vmatpush1.msra.mxu0 %v2021
    %2055 = vmatprep.subr.mxu0 0.0
    %2056 = vmatpush1.msra.mxu0 %v2020
    %2057 = vmatprep.subr.mxu0 0.0
    %2058 = vmatpush1.msra.mxu0 %v2019
    %2059 = vmatprep.subr.mxu0 0.0
    %2060 = vmatpush1.msra.mxu0 %v2018
    %2061 = vmatprep.subr.mxu0 0.0
    %2062 = vmatpush1.msra.mxu0 %v2017
    %2063 = vmatprep.subr.mxu0 0.0
    %2064 = vmatpush1.msra.mxu0 %v2016
    %2065 = vmatprep.subr.mxu0 0.0
    %2066 = vmatpush1.msra.mxu0 %v2015
    %2067 = vmatprep.subr.mxu0 0.0
    %2068 = vmatpush1.msra.mxu0 %v2014
    %2069 = vmatprep.subr.mxu0 0.0
    %2070 = vmatpush1.msra.mxu0 %v2013
    %2071 = vmatprep.subr.mxu0 0.0
    %2072 = vmatpush1.msra.mxu0 %v2012
    %2073 = vmatprep.subr.mxu0 0.0
    %2074 = vmatpush1.msra.mxu0 %v2011
    %2075 = vmatprep.subr.mxu0 0.0
    %2076 = vmatpush2.msra.mxu0 0.0
    %2077 = vmatprep.subr.mxu0 0.0
    %2078 = vmatpush2.msra.mxu0 0.0
    %2079 = vmatprep.subr.mxu0 0.0
    %2080 = vmatpush2.msra.mxu0 0.0
    %2081 = vmatprep.subr.mxu0 0.0
    %2082 = vmatpush2.msra.mxu0 0.0
    %2083 = vmatprep.subr.mxu0 0.0
    %2084 = vmatpush2.msra.mxu0 0.0
    %2085 = vmatprep.subr.mxu0 0.0
    %2086 = vmatpush2.msra.mxu0 0.0
    %2087 = vmatprep.subr.mxu0 0.0
    %2088 = vmatpush2.msra.mxu0 0.0
    %2089 = vmatprep.subr.mxu0 0.0
    %2090 = vmatpush2.msra.mxu0 0.0
    %2091 = vmatprep.subr.mxu0 0.0
    %2092 = vmatpush2.msra.mxu0 0.0
    %2093 = vmatprep.subr.mxu0 0.0
    %2094 = vmatpush2.msra.mxu0 0.0
    %2095 = vmatprep.subr.mxu0 0.0
    %2096 = vmatpush2.msra.mxu0 0.0
    %2097 = vmatprep.subr.mxu0 0.0
    %2098 = vmatpush2.msra.mxu0 0.0
    %2099 = vmatprep.subr.mxu0 0.0
    %2100 = vmatpush2.msra.mxu0 %v2030
    %2101 = vmatprep.subr.mxu0 0.0
    %2102 = vmatpush2.msra.mxu0 %v2029
    %2103 = vmatprep.subr.mxu0 0.0
    %2104 = vmatpush2.msra.mxu0 %v2028
    %2105 = vmatprep.subr.mxu0 0.0
    %2106 = vmatpush2.msra.mxu0 %v2027
    %2107 = vmatprep.mubr.f32.mxu0 %v2041
    %2108 = vmatmul.mubr.f32.gmra.mxu0 %v2035
    %v2109 = vpop.f32.mrf.mxu0
    %v2110 = vadd.f32 0.0, %v2109
    %v2111 = vpop.f32.mrf.mxu0
    %2112 = vdwg.mxu0
    %v2114 = vlaneseq
    %v2115 = vshrl.u32 %v2114, 7
    %v2116 = vsub.s32 0, %v2115
    %v2117 = vrot.slane %v1987, %v2116
    %v2118 = vlaneseq
    %v2119 = vshrl.u32 %v2118, 7
    %v2120 = vsub.s32 1, %v2119
    %v2121 = vrot.slane %v1987, %v2120
    %v2123 = vsel %vm82, %v2121, 0
    %2125 = vmatprep.subr.mxu0 0.0
    %2126 = vmatpush1.msra.mxu0 %v2003
    %2127 = vmatprep.subr.mxu0 0.0
    %2128 = vmatpush1.msra.mxu0 %v2002
    %2129 = vmatprep.subr.mxu0 0.0
    %2130 = vmatpush1.msra.mxu0 %v2001
    %2131 = vmatprep.subr.mxu0 0.0
    %2132 = vmatpush1.msra.mxu0 %v2000
    %2133 = vmatprep.subr.mxu0 0.0
    %2134 = vmatpush1.msra.mxu0 %v1999
    %2135 = vmatprep.subr.mxu0 0.0
    %2136 = vmatpush1.msra.mxu0 %v1998
    %2137 = vmatprep.subr.mxu0 0.0
    %2138 = vmatpush1.msra.mxu0 %v1997
    %2139 = vmatprep.subr.mxu0 0.0
    %2140 = vmatpush1.msra.mxu0 %v1996
    %2141 = vmatprep.subr.mxu0 0.0
    %2142 = vmatpush1.msra.mxu0 %v1995
    %2143 = vmatprep.subr.mxu0 0.0
    %2144 = vmatpush1.msra.mxu0 %v1994
    %2145 = vmatprep.subr.mxu0 0.0
    %2146 = vmatpush1.msra.mxu0 %v1993
    %2147 = vmatprep.subr.mxu0 0.0
    %2148 = vmatpush1.msra.mxu0 %v1992
    %2149 = vmatprep.subr.mxu0 0.0
    %2150 = vmatpush1.msra.mxu0 %v1991
    %2151 = vmatprep.subr.mxu0 0.0
    %2152 = vmatpush1.msra.mxu0 %v1990
    %2153 = vmatprep.subr.mxu0 0.0
    %2154 = vmatpush1.msra.mxu0 %v1989
    %2155 = vmatprep.subr.mxu0 0.0
    %2156 = vmatpush1.msra.mxu0 %v1988
    %2157 = vmatprep.subr.mxu0 0.0
    %2158 = vmatpush2.msra.mxu0 0.0
    %2159 = vmatprep.subr.mxu0 0.0
    %2160 = vmatpush2.msra.mxu0 0.0
    %2161 = vmatprep.subr.mxu0 0.0
    %2162 = vmatpush2.msra.mxu0 0.0
    %2163 = vmatprep.subr.mxu0 0.0
    %2164 = vmatpush2.msra.mxu0 0.0
    %2165 = vmatprep.subr.mxu0 0.0
    %2166 = vmatpush2.msra.mxu0 0.0
    %2167 = vmatprep.subr.mxu0 0.0
    %2168 = vmatpush2.msra.mxu0 0.0
    %2169 = vmatprep.subr.mxu0 0.0
    %2170 = vmatpush2.msra.mxu0 0.0
    %2171 = vmatprep.subr.mxu0 0.0
    %2172 = vmatpush2.msra.mxu0 0.0
    %2173 = vmatprep.subr.mxu0 0.0
    %2174 = vmatpush2.msra.mxu0 0.0
    %2175 = vmatprep.subr.mxu0 0.0
    %2176 = vmatpush2.msra.mxu0 0.0
    %2177 = vmatprep.subr.mxu0 0.0
    %2178 = vmatpush2.msra.mxu0 0.0
    %2179 = vmatprep.subr.mxu0 0.0
    %2180 = vmatpush2.msra.mxu0 0.0
    %2181 = vmatprep.subr.mxu0 0.0
    %2182 = vmatpush2.msra.mxu0 %v2007
    %2183 = vmatprep.subr.mxu0 0.0
    %2184 = vmatpush2.msra.mxu0 %v2006
    %2185 = vmatprep.subr.mxu0 0.0
    %2186 = vmatpush2.msra.mxu0 %v2005
    %2187 = vmatprep.subr.mxu0 0.0
    %2188 = vmatpush2.msra.mxu0 %v2004
    %2189 = vmatprep.mubr.f32.mxu0 %v2123
    %2190 = vmatmul.mubr.f32.gmra.mxu0 %v2117
    %v2191 = vpop.f32.mrf.mxu0
    %v2192 = vadd.f32 %v2110, %v2191
    %v2193 = vpop.f32.mrf.mxu0
    %2194 = vdwg.mxu0
    %s2195 = scalar_lea.vmem [#allocation3], 2
    %v2196 = vld [vmem:[%s2195] ss:$8 sm:$0x3]
    %s2197 = scalar_lea.vmem %s5, 320
    %v2198 = vld [vmem:[%s2197] sm:$0xff]
    %v2199 = vld [vmem:[%s2197 + $0x8] sm:$0xff]
    %v2200 = vld [vmem:[%s2197 + $0x10] sm:$0xff]
    %v2201 = vld [vmem:[%s2197 + $0x18] sm:$0xff]
    %v2202 = vld [vmem:[%s2197 + $0x20] sm:$0xff]
    %v2203 = vld [vmem:[%s2197 + $0x28] sm:$0xff]
    %v2204 = vld [vmem:[%s2197 + $0x30] sm:$0xff]
    %v2205 = vld [vmem:[%s2197 + $0x38] sm:$0xff]
    %v2206 = vld [vmem:[%s2197 + $0x40] sm:$0xff]
    %v2207 = vld [vmem:[%s2197 + $0x48] sm:$0xff]
    %v2208 = vld [vmem:[%s2197 + $0x50] sm:$0xff]
    %v2209 = vld [vmem:[%s2197 + $0x58] sm:$0xff]
    %v2210 = vld [vmem:[%s2197 + $0x60] sm:$0xff]
    %v2211 = vld [vmem:[%s2197 + $0x68] sm:$0xff]
    %v2212 = vld [vmem:[%s2197 + $0x70] sm:$0xff]
    %v2213 = vld [vmem:[%s2197 + $0x78] sm:$0xff]
    %v2214 = vld [vmem:[%s2197 + $0x80] sm:$0xff]
    %v2215 = vld [vmem:[%s2197 + $0x88] sm:$0xff]
    %v2216 = vld [vmem:[%s2197 + $0x90] sm:$0xff]
    %v2217 = vld [vmem:[%s2197 + $0x98] sm:$0xff]
    %v2219 = vlaneseq
    %v2220 = vshrl.u32 %v2219, 7
    %v2221 = vsub.s32 0, %v2220
    %v2222 = vrot.slane %v2196, %v2221
    %v2223 = vlaneseq
    %v2224 = vshrl.u32 %v2223, 7
    %v2225 = vsub.s32 1, %v2224
    %v2226 = vrot.slane %v2196, %v2225
    %v2228 = vsel %vm82, %v2226, 0
    %2230 = vmatprep.subr.mxu0 0.0
    %2231 = vmatpush1.msra.mxu0 %v2213
    %2232 = vmatprep.subr.mxu0 0.0
    %2233 = vmatpush1.msra.mxu0 %v2212
    %2234 = vmatprep.subr.mxu0 0.0
    %2235 = vmatpush1.msra.mxu0 %v2211
    %2236 = vmatprep.subr.mxu0 0.0
    %2237 = vmatpush1.msra.mxu0 %v2210
    %2238 = vmatprep.subr.mxu0 0.0
    %2239 = vmatpush1.msra.mxu0 %v2209
    %2240 = vmatprep.subr.mxu0 0.0
    %2241 = vmatpush1.msra.mxu0 %v2208
    %2242 = vmatprep.subr.mxu0 0.0
    %2243 = vmatpush1.msra.mxu0 %v2207
    %2244 = vmatprep.subr.mxu0 0.0
    %2245 = vmatpush1.msra.mxu0 %v2206
    %2246 = vmatprep.subr.mxu0 0.0
    %2247 = vmatpush1.msra.mxu0 %v2205
    %2248 = vmatprep.subr.mxu0 0.0
    %2249 = vmatpush1.msra.mxu0 %v2204
    %2250 = vmatprep.subr.mxu0 0.0
    %2251 = vmatpush1.msra.mxu0 %v2203
    %2252 = vmatprep.subr.mxu0 0.0
    %2253 = vmatpush1.msra.mxu0 %v2202
    %2254 = vmatprep.subr.mxu0 0.0
    %2255 = vmatpush1.msra.mxu0 %v2201
    %2256 = vmatprep.subr.mxu0 0.0
    %2257 = vmatpush1.msra.mxu0 %v2200
    %2258 = vmatprep.subr.mxu0 0.0
    %2259 = vmatpush1.msra.mxu0 %v2199
    %2260 = vmatprep.subr.mxu0 0.0
    %2261 = vmatpush1.msra.mxu0 %v2198
    %2262 = vmatprep.subr.mxu0 0.0
    %2263 = vmatpush2.msra.mxu0 0.0
    %2264 = vmatprep.subr.mxu0 0.0
    %2265 = vmatpush2.msra.mxu0 0.0
    %2266 = vmatprep.subr.mxu0 0.0
    %2267 = vmatpush2.msra.mxu0 0.0
    %2268 = vmatprep.subr.mxu0 0.0
    %2269 = vmatpush2.msra.mxu0 0.0
    %2270 = vmatprep.subr.mxu0 0.0
    %2271 = vmatpush2.msra.mxu0 0.0
    %2272 = vmatprep.subr.mxu0 0.0
    %2273 = vmatpush2.msra.mxu0 0.0
    %2274 = vmatprep.subr.mxu0 0.0
    %2275 = vmatpush2.msra.mxu0 0.0
    %2276 = vmatprep.subr.mxu0 0.0
    %2277 = vmatpush2.msra.mxu0 0.0
    %2278 = vmatprep.subr.mxu0 0.0
    %2279 = vmatpush2.msra.mxu0 0.0
    %2280 = vmatprep.subr.mxu0 0.0
    %2281 = vmatpush2.msra.mxu0 0.0
    %2282 = vmatprep.subr.mxu0 0.0
    %2283 = vmatpush2.msra.mxu0 0.0
    %2284 = vmatprep.subr.mxu0 0.0
    %2285 = vmatpush2.msra.mxu0 0.0
    %2286 = vmatprep.subr.mxu0 0.0
    %2287 = vmatpush2.msra.mxu0 %v2217
    %2288 = vmatprep.subr.mxu0 0.0
    %2289 = vmatpush2.msra.mxu0 %v2216
    %2290 = vmatprep.subr.mxu0 0.0
    %2291 = vmatpush2.msra.mxu0 %v2215
    %2292 = vmatprep.subr.mxu0 0.0
    %2293 = vmatpush2.msra.mxu0 %v2214
    %2294 = vmatprep.mubr.f32.mxu0 %v2228
    %2295 = vmatmul.mubr.f32.gmra.mxu0 %v2222
    %v2296 = vpop.f32.mrf.mxu0
    %v2297 = vadd.f32 0.0, %v2296
    %v2298 = vpop.f32.mrf.mxu0
    %2299 = vdwg.mxu0
    %v2300 = vadd.f32 %v2192, %v2297
    %s2301 = scalar_lea.vmem [#allocation3], 3
    %v2302 = vld [vmem:[%s2301] ss:$8 sm:$0x3]
    %s2303 = scalar_lea.vmem %s5, 480
    %v2304 = vld [vmem:[%s2303] sm:$0xff]
    %v2305 = vld [vmem:[%s2303 + $0x8] sm:$0xff]
    %v2306 = vld [vmem:[%s2303 + $0x10] sm:$0xff]
    %v2307 = vld [vmem:[%s2303 + $0x18] sm:$0xff]
    %v2308 = vld [vmem:[%s2303 + $0x20] sm:$0xff]
    %v2309 = vld [vmem:[%s2303 + $0x28] sm:$0xff]
    %v2310 = vld [vmem:[%s2303 + $0x30] sm:$0xff]
    %v2311 = vld [vmem:[%s2303 + $0x38] sm:$0xff]
    %v2312 = vld [vmem:[%s2303 + $0x40] sm:$0xff]
    %v2313 = vld [vmem:[%s2303 + $0x48] sm:$0xff]
    %v2314 = vld [vmem:[%s2303 + $0x50] sm:$0xff]
    %v2315 = vld [vmem:[%s2303 + $0x58] sm:$0xff]
    %v2316 = vld [vmem:[%s2303 + $0x60] sm:$0xff]
    %v2317 = vld [vmem:[%s2303 + $0x68] sm:$0xff]
    %v2318 = vld [vmem:[%s2303 + $0x70] sm:$0xff]
    %v2319 = vld [vmem:[%s2303 + $0x78] sm:$0xff]
    %v2320 = vld [vmem:[%s2303 + $0x80] sm:$0xff]
    %v2321 = vld [vmem:[%s2303 + $0x88] sm:$0xff]
    %v2322 = vld [vmem:[%s2303 + $0x90] sm:$0xff]
    %v2323 = vld [vmem:[%s2303 + $0x98] sm:$0xff]
    %v2325 = vlaneseq
    %v2326 = vshrl.u32 %v2325, 7
    %v2327 = vsub.s32 0, %v2326
    %v2328 = vrot.slane %v2302, %v2327
    %v2329 = vlaneseq
    %v2330 = vshrl.u32 %v2329, 7
    %v2331 = vsub.s32 1, %v2330
    %v2332 = vrot.slane %v2302, %v2331
    %v2334 = vsel %vm82, %v2332, 0
    %2336 = vmatprep.subr.mxu0 0.0
    %2337 = vmatpush1.msra.mxu0 %v2319
    %2338 = vmatprep.subr.mxu0 0.0
    %2339 = vmatpush1.msra.mxu0 %v2318
    %2340 = vmatprep.subr.mxu0 0.0
    %2341 = vmatpush1.msra.mxu0 %v2317
    %2342 = vmatprep.subr.mxu0 0.0
    %2343 = vmatpush1.msra.mxu0 %v2316
    %2344 = vmatprep.subr.mxu0 0.0
    %2345 = vmatpush1.msra.mxu0 %v2315
    %2346 = vmatprep.subr.mxu0 0.0
    %2347 = vmatpush1.msra.mxu0 %v2314
    %2348 = vmatprep.subr.mxu0 0.0
    %2349 = vmatpush1.msra.mxu0 %v2313
    %2350 = vmatprep.subr.mxu0 0.0
    %2351 = vmatpush1.msra.mxu0 %v2312
    %2352 = vmatprep.subr.mxu0 0.0
    %2353 = vmatpush1.msra.mxu0 %v2311
    %2354 = vmatprep.subr.mxu0 0.0
    %2355 = vmatpush1.msra.mxu0 %v2310
    %2356 = vmatprep.subr.mxu0 0.0
    %2357 = vmatpush1.msra.mxu0 %v2309
    %2358 = vmatprep.subr.mxu0 0.0
    %2359 = vmatpush1.msra.mxu0 %v2308
    %2360 = vmatprep.subr.mxu0 0.0
    %2361 = vmatpush1.msra.mxu0 %v2307
    %2362 = vmatprep.subr.mxu0 0.0
    %2363 = vmatpush1.msra.mxu0 %v2306
    %2364 = vmatprep.subr.mxu0 0.0
    %2365 = vmatpush1.msra.mxu0 %v2305
    %2366 = vmatprep.subr.mxu0 0.0
    %2367 = vmatpush1.msra.mxu0 %v2304
    %2368 = vmatprep.subr.mxu0 0.0
    %2369 = vmatpush2.msra.mxu0 0.0
    %2370 = vmatprep.subr.mxu0 0.0
    %2371 = vmatpush2.msra.mxu0 0.0
    %2372 = vmatprep.subr.mxu0 0.0
    %2373 = vmatpush2.msra.mxu0 0.0
    %2374 = vmatprep.subr.mxu0 0.0
    %2375 = vmatpush2.msra.mxu0 0.0
    %2376 = vmatprep.subr.mxu0 0.0
    %2377 = vmatpush2.msra.mxu0 0.0
    %2378 = vmatprep.subr.mxu0 0.0
    %2379 = vmatpush2.msra.mxu0 0.0
    %2380 = vmatprep.subr.mxu0 0.0
    %2381 = vmatpush2.msra.mxu0 0.0
    %2382 = vmatprep.subr.mxu0 0.0
    %2383 = vmatpush2.msra.mxu0 0.0
    %2384 = vmatprep.subr.mxu0 0.0
    %2385 = vmatpush2.msra.mxu0 0.0
    %2386 = vmatprep.subr.mxu0 0.0
    %2387 = vmatpush2.msra.mxu0 0.0
    %2388 = vmatprep.subr.mxu0 0.0
    %2389 = vmatpush2.msra.mxu0 0.0
    %2390 = vmatprep.subr.mxu0 0.0
    %2391 = vmatpush2.msra.mxu0 0.0
    %2392 = vmatprep.subr.mxu0 0.0
    %2393 = vmatpush2.msra.mxu0 %v2323
    %2394 = vmatprep.subr.mxu0 0.0
    %2395 = vmatpush2.msra.mxu0 %v2322
    %2396 = vmatprep.subr.mxu0 0.0
    %2397 = vmatpush2.msra.mxu0 %v2321
    %2398 = vmatprep.subr.mxu0 0.0
    %2399 = vmatpush2.msra.mxu0 %v2320
    %2400 = vmatprep.mubr.f32.mxu0 %v2334
    %2401 = vmatmul.mubr.f32.gmra.mxu0 %v2328
    %v2402 = vpop.f32.mrf.mxu0
    %v2403 = vadd.f32 0.0, %v2402
    %v2404 = vpop.f32.mrf.mxu0
    %2405 = vdwg.mxu0
    %v2406 = vadd.f32 %v2300, %v2403
    %s2407 = scalar_lea.vmem [#allocation3], 4
    %v2408 = vld [vmem:[%s2407] ss:$8 sm:$0x3]
    %s2409 = scalar_lea.vmem %s5, 640
    %v2410 = vld [vmem:[%s2409] sm:$0xff]
    %v2411 = vld [vmem:[%s2409 + $0x8] sm:$0xff]
    %v2412 = vld [vmem:[%s2409 + $0x10] sm:$0xff]
    %v2413 = vld [vmem:[%s2409 + $0x18] sm:$0xff]
    %v2414 = vld [vmem:[%s2409 + $0x20] sm:$0xff]
    %v2415 = vld [vmem:[%s2409 + $0x28] sm:$0xff]
    %v2416 = vld [vmem:[%s2409 + $0x30] sm:$0xff]
    %v2417 = vld [vmem:[%s2409 + $0x38] sm:$0xff]
    %v2418 = vld [vmem:[%s2409 + $0x40] sm:$0xff]
    %v2419 = vld [vmem:[%s2409 + $0x48] sm:$0xff]
    %v2420 = vld [vmem:[%s2409 + $0x50] sm:$0xff]
    %v2421 = vld [vmem:[%s2409 + $0x58] sm:$0xff]
    %v2422 = vld [vmem:[%s2409 + $0x60] sm:$0xff]
    %v2423 = vld [vmem:[%s2409 + $0x68] sm:$0xff]
    %v2424 = vld [vmem:[%s2409 + $0x70] sm:$0xff]
    %v2425 = vld [vmem:[%s2409 + $0x78] sm:$0xff]
    %v2426 = vld [vmem:[%s2409 + $0x80] sm:$0xff]
    %v2427 = vld [vmem:[%s2409 + $0x88] sm:$0xff]
    %v2428 = vld [vmem:[%s2409 + $0x90] sm:$0xff]
    %v2429 = vld [vmem:[%s2409 + $0x98] sm:$0xff]
    %v2431 = vlaneseq
    %v2432 = vshrl.u32 %v2431, 7
    %v2433 = vsub.s32 0, %v2432
    %v2434 = vrot.slane %v2408, %v2433
    %v2435 = vlaneseq
    %v2436 = vshrl.u32 %v2435, 7
    %v2437 = vsub.s32 1, %v2436
    %v2438 = vrot.slane %v2408, %v2437
    %v2440 = vsel %vm82, %v2438, 0
    %2442 = vmatprep.subr.mxu0 0.0
    %2443 = vmatpush1.msra.mxu0 %v2425
    %2444 = vmatprep.subr.mxu0 0.0
    %2445 = vmatpush1.msra.mxu0 %v2424
    %2446 = vmatprep.subr.mxu0 0.0
    %2447 = vmatpush1.msra.mxu0 %v2423
    %2448 = vmatprep.subr.mxu0 0.0
    %2449 = vmatpush1.msra.mxu0 %v2422
    %2450 = vmatprep.subr.mxu0 0.0
    %2451 = vmatpush1.msra.mxu0 %v2421
    %2452 = vmatprep.subr.mxu0 0.0
    %2453 = vmatpush1.msra.mxu0 %v2420
    %2454 = vmatprep.subr.mxu0 0.0
    %2455 = vmatpush1.msra.mxu0 %v2419
    %2456 = vmatprep.subr.mxu0 0.0
    %2457 = vmatpush1.msra.mxu0 %v2418
    %2458 = vmatprep.subr.mxu0 0.0
    %2459 = vmatpush1.msra.mxu0 %v2417
    %2460 = vmatprep.subr.mxu0 0.0
    %2461 = vmatpush1.msra.mxu0 %v2416
    %2462 = vmatprep.subr.mxu0 0.0
    %2463 = vmatpush1.msra.mxu0 %v2415
    %2464 = vmatprep.subr.mxu0 0.0
    %2465 = vmatpush1.msra.mxu0 %v2414
    %2466 = vmatprep.subr.mxu0 0.0
    %2467 = vmatpush1.msra.mxu0 %v2413
    %2468 = vmatprep.subr.mxu0 0.0
    %2469 = vmatpush1.msra.mxu0 %v2412
    %2470 = vmatprep.subr.mxu0 0.0
    %2471 = vmatpush1.msra.mxu0 %v2411
    %2472 = vmatprep.subr.mxu0 0.0
    %2473 = vmatpush1.msra.mxu0 %v2410
    %2474 = vmatprep.subr.mxu0 0.0
    %2475 = vmatpush2.msra.mxu0 0.0
    %2476 = vmatprep.subr.mxu0 0.0
    %2477 = vmatpush2.msra.mxu0 0.0
    %2478 = vmatprep.subr.mxu0 0.0
    %2479 = vmatpush2.msra.mxu0 0.0
    %2480 = vmatprep.subr.mxu0 0.0
    %2481 = vmatpush2.msra.mxu0 0.0
    %2482 = vmatprep.subr.mxu0 0.0
    %2483 = vmatpush2.msra.mxu0 0.0
    %2484 = vmatprep.subr.mxu0 0.0
    %2485 = vmatpush2.msra.mxu0 0.0
    %2486 = vmatprep.subr.mxu0 0.0
    %2487 = vmatpush2.msra.mxu0 0.0
    %2488 = vmatprep.subr.mxu0 0.0
    %2489 = vmatpush2.msra.mxu0 0.0
    %2490 = vmatprep.subr.mxu0 0.0
    %2491 = vmatpush2.msra.mxu0 0.0
    %2492 = vmatprep.subr.mxu0 0.0
    %2493 = vmatpush2.msra.mxu0 0.0
    %2494 = vmatprep.subr.mxu0 0.0
    %2495 = vmatpush2.msra.mxu0 0.0
    %2496 = vmatprep.subr.mxu0 0.0
    %2497 = vmatpush2.msra.mxu0 0.0
    %2498 = vmatprep.subr.mxu0 0.0
    %2499 = vmatpush2.msra.mxu0 %v2429
    %2500 = vmatprep.subr.mxu0 0.0
    %2501 = vmatpush2.msra.mxu0 %v2428
    %2502 = vmatprep.subr.mxu0 0.0
    %2503 = vmatpush2.msra.mxu0 %v2427
    %2504 = vmatprep.subr.mxu0 0.0
    %2505 = vmatpush2.msra.mxu0 %v2426
    %2506 = vmatprep.mubr.f32.mxu0 %v2440
    %2507 = vmatmul.mubr.f32.gmra.mxu0 %v2434
    %v2508 = vpop.f32.mrf.mxu0
    %v2509 = vadd.f32 0.0, %v2508
    %v2510 = vpop.f32.mrf.mxu0
    %2511 = vdwg.mxu0
    %v2512 = vadd.f32 %v2406, %v2509
    %v2513 = vld [vmem:[%s6] sm:$0x1]
    %v2514 = vadd.f32 %v2512, %v2513
    %v2515 = vld [vmem:[%s7] sm:$0xff]
    %v2516 = vld [vmem:[%s7 + $0x8] sm:$0xff]
    %v2517 = vld [vmem:[%s7 + $0x10] sm:$0xff]
    %v2518 = vld [vmem:[%s7 + $0x18] sm:$0xff]
    %v2519 = vld [vmem:[%s7 + $0x20] sm:$0xff]
    %v2520 = vld [vmem:[%s7 + $0x28] sm:$0xff]
    %v2521 = vld [vmem:[%s7 + $0x30] sm:$0xff]
    %v2522 = vld [vmem:[%s7 + $0x38] sm:$0xff]
    %v2523 = vld [vmem:[%s7 + $0x40] sm:$0xff]
    %v2524 = vld [vmem:[%s7 + $0x48] sm:$0xff]
    %v2525 = vld [vmem:[%s7 + $0x50] sm:$0xff]
    %v2526 = vld [vmem:[%s7 + $0x58] sm:$0xff]
    %v2527 = vld [vmem:[%s7 + $0x60] sm:$0xff]
    %v2528 = vld [vmem:[%s7 + $0x68] sm:$0xff]
    %v2529 = vld [vmem:[%s7 + $0x70] sm:$0xff]
    %v2530 = vld [vmem:[%s8] sm:$0x1]
    %vm2531 = vcmask 982016
    %v2533 = vsel %vm2531, %v2514, 0
    %2535 = vmatprep.subr.mxu0 0.0
    %2536 = vmatpush1.msra.mxu0 0.0
    %2537 = vmatprep.subr.mxu0 0.0
    %2538 = vmatpush1.msra.mxu0 %v2529
    %2539 = vmatprep.subr.mxu0 0.0
    %2540 = vmatpush1.msra.mxu0 %v2528
    %2541 = vmatprep.subr.mxu0 0.0
    %2542 = vmatpush1.msra.mxu0 %v2527
    %2543 = vmatprep.subr.mxu0 0.0
    %2544 = vmatpush1.msra.mxu0 %v2526
    %2545 = vmatprep.subr.mxu0 0.0
    %2546 = vmatpush1.msra.mxu0 %v2525
    %2547 = vmatprep.subr.mxu0 0.0
    %2548 = vmatpush1.msra.mxu0 %v2524
    %2549 = vmatprep.subr.mxu0 0.0
    %2550 = vmatpush1.msra.mxu0 %v2523
    %2551 = vmatprep.subr.mxu0 0.0
    %2552 = vmatpush1.msra.mxu0 %v2522
    %2553 = vmatprep.subr.mxu0 0.0
    %2554 = vmatpush1.msra.mxu0 %v2521
    %2555 = vmatprep.subr.mxu0 0.0
    %2556 = vmatpush1.msra.mxu0 %v2520
    %2557 = vmatprep.subr.mxu0 0.0
    %2558 = vmatpush1.msra.mxu0 %v2519
    %2559 = vmatprep.subr.mxu0 0.0
    %2560 = vmatpush1.msra.mxu0 %v2518
    %2561 = vmatprep.subr.mxu0 0.0
    %2562 = vmatpush1.msra.mxu0 %v2517
    %2563 = vmatprep.subr.mxu0 0.0
    %2564 = vmatpush1.msra.mxu0 %v2516
    %2565 = vmatprep.subr.mxu0 0.0
    %2566 = vmatpush1.msra.mxu0 %v2515
    %2567 = vmatprep.subr.mxu0 0.0
    %2568 = vmatpush2.msra.mxu0 0.0
    %2569 = vmatprep.subr.mxu0 0.0
    %2570 = vmatpush2.msra.mxu0 0.0
    %2571 = vmatprep.subr.mxu0 0.0
    %2572 = vmatpush2.msra.mxu0 0.0
    %2573 = vmatprep.subr.mxu0 0.0
    %2574 = vmatpush2.msra.mxu0 0.0
    %2575 = vmatprep.subr.mxu0 0.0
    %2576 = vmatpush2.msra.mxu0 0.0
    %2577 = vmatprep.subr.mxu0 0.0
    %2578 = vmatpush2.msra.mxu0 0.0
    %2579 = vmatprep.subr.mxu0 0.0
    %2580 = vmatpush2.msra.mxu0 0.0
    %2581 = vmatprep.subr.mxu0 0.0
    %2582 = vmatpush2.msra.mxu0 0.0
    %2583 = vmatprep.subr.mxu0 0.0
    %2584 = vmatpush2.msra.mxu0 0.0
    %2585 = vmatprep.subr.mxu0 0.0
    %2586 = vmatpush2.msra.mxu0 0.0
    %2587 = vmatprep.subr.mxu0 0.0
    %2588 = vmatpush2.msra.mxu0 0.0
    %2589 = vmatprep.subr.mxu0 0.0
    %2590 = vmatpush2.msra.mxu0 0.0
    %2591 = vmatprep.subr.mxu0 0.0
    %2592 = vmatpush2.msra.mxu0 0.0
    %2593 = vmatprep.subr.mxu0 0.0
    %2594 = vmatpush2.msra.mxu0 0.0
    %2595 = vmatprep.subr.mxu0 0.0
    %2596 = vmatpush2.msra.mxu0 0.0
    %2597 = vmatprep.subr.mxu0 0.0
    %2598 = vmatpush2.msra.mxu0 0.0
    %2599 = vmatprep.mubr.f32.mxu0 0.0
    %2600 = vmatmul.mubr.f32.gmra.mxu0 %v2533
    %v2601 = vpop.f32.mrf.mxu0
    %v2602 = vadd.f32 %v2530, %v2601
    %v2603 = vpop.f32.mrf.mxu0
    %2604 = vdwg.mxu0
    %v2605 = vld [vmem:[%s9] sm:$0xff]
    %v2606 = vld [vmem:[%s9 + $0x8] sm:$0xff]
    %v2607 = vld [vmem:[%s9 + $0x10] sm:$0xff]
    %v2608 = vld [vmem:[%s9 + $0x18] sm:$0xff]
    %v2609 = vld [vmem:[%s9 + $0x20] sm:$0xff]
    %v2610 = vld [vmem:[%s9 + $0x28] sm:$0xff]
    %v2611 = vld [vmem:[%s9 + $0x30] sm:$0xff]
    %v2612 = vld [vmem:[%s9 + $0x38] sm:$0xff]
    %v2613 = vld [vmem:[%s9 + $0x40] sm:$0xff]
    %v2614 = vld [vmem:[%s9 + $0x48] sm:$0xff]
    %v2615 = vld [vmem:[%s9 + $0x50] sm:$0xf]
    %v2616 = vld [vmem:[%s10] sm:$0x1]
    %vm2617 = vcmask 687104
    %v2619 = vsel %vm2617, %v2602, 0
    %v2622 = vsel %vm680, %v2615, 0
    %2624 = vmatprep.subr.mxu0 0.0
    %2625 = vmatpush1.msra.mxu0 0.0
    %2626 = vmatprep.subr.mxu0 0.0
    %2627 = vmatpush1.msra.mxu0 0.0
    %2628 = vmatprep.subr.mxu0 0.0
    %2629 = vmatpush1.msra.mxu0 0.0
    %2630 = vmatprep.subr.mxu0 0.0
    %2631 = vmatpush1.msra.mxu0 0.0
    %2632 = vmatprep.subr.mxu0 0.0
    %2633 = vmatpush1.msra.mxu0 0.0
    %2634 = vmatprep.subr.mxu0 0.0
    %2635 = vmatpush1.msra.mxu0 %v2622
    %2636 = vmatprep.subr.mxu0 0.0
    %2637 = vmatpush1.msra.mxu0 %v2614
    %2638 = vmatprep.subr.mxu0 0.0
    %2639 = vmatpush1.msra.mxu0 %v2613
    %2640 = vmatprep.subr.mxu0 0.0
    %2641 = vmatpush1.msra.mxu0 %v2612
    %2642 = vmatprep.subr.mxu0 0.0
    %2643 = vmatpush1.msra.mxu0 %v2611
    %2644 = vmatprep.subr.mxu0 0.0
    %2645 = vmatpush1.msra.mxu0 %v2610
    %2646 = vmatprep.subr.mxu0 0.0
    %2647 = vmatpush1.msra.mxu0 %v2609
    %2648 = vmatprep.subr.mxu0 0.0
    %2649 = vmatpush1.msra.mxu0 %v2608
    %2650 = vmatprep.subr.mxu0 0.0
    %2651 = vmatpush1.msra.mxu0 %v2607
    %2652 = vmatprep.subr.mxu0 0.0
    %2653 = vmatpush1.msra.mxu0 %v2606
    %2654 = vmatprep.subr.mxu0 0.0
    %2655 = vmatpush1.msra.mxu0 %v2605
    %2656 = vmatprep.subr.mxu0 0.0
    %2657 = vmatpush2.msra.mxu0 0.0
    %2658 = vmatprep.subr.mxu0 0.0
    %2659 = vmatpush2.msra.mxu0 0.0
    %2660 = vmatprep.subr.mxu0 0.0
    %2661 = vmatpush2.msra.mxu0 0.0
    %2662 = vmatprep.subr.mxu0 0.0
    %2663 = vmatpush2.msra.mxu0 0.0
    %2664 = vmatprep.subr.mxu0 0.0
    %2665 = vmatpush2.msra.mxu0 0.0
    %2666 = vmatprep.subr.mxu0 0.0
    %2667 = vmatpush2.msra.mxu0 0.0
    %2668 = vmatprep.subr.mxu0 0.0
    %2669 = vmatpush2.msra.mxu0 0.0
    %2670 = vmatprep.subr.mxu0 0.0
    %2671 = vmatpush2.msra.mxu0 0.0
    %2672 = vmatprep.subr.mxu0 0.0
    %2673 = vmatpush2.msra.mxu0 0.0
    %2674 = vmatprep.subr.mxu0 0.0
    %2675 = vmatpush2.msra.mxu0 0.0
    %2676 = vmatprep.subr.mxu0 0.0
    %2677 = vmatpush2.msra.mxu0 0.0
    %2678 = vmatprep.subr.mxu0 0.0
    %2679 = vmatpush2.msra.mxu0 0.0
    %2680 = vmatprep.subr.mxu0 0.0
    %2681 = vmatpush2.msra.mxu0 0.0
    %2682 = vmatprep.subr.mxu0 0.0
    %2683 = vmatpush2.msra.mxu0 0.0
    %2684 = vmatprep.subr.mxu0 0.0
    %2685 = vmatpush2.msra.mxu0 0.0
    %2686 = vmatprep.subr.mxu0 0.0
    %2687 = vmatpush2.msra.mxu0 0.0
    %2688 = vmatprep.mubr.f32.mxu0 0.0
    %2689 = vmatmul.mubr.f32.gmra.mxu0 %v2619
    %v2690 = vpop.f32.mrf.mxu0
    %v2691 = vadd.f32 %v2616, %v2690
    %v2692 = vpop.f32.mrf.mxu0
    %2693 = vdwg.mxu0
    %vm2694 = vcmask 73728
    %2695 = vst.msk [vmem:[#allocation4] sm:$0x1] %vm2694, %v2691
    %s2696 = scalar_lea.vmem %s0, 32
    %v2697 = vld [vmem:[%s2696] sm:$0xff]
    %v2698 = vld [vmem:[%s2696 + $0x8] sm:$0xff]
    %v2699 = vld [vmem:[%s2696 + $0x10] sm:$0xff]
    %v2700 = vld [vmem:[%s2696 + $0x18] sm:$0xf]
    %v2701 = vld [vmem:[%s1] sm:$0xff]
    %v2702 = vld [vmem:[%s1 + $0x8] sm:$0xff]
    %v2703 = vld [vmem:[%s1 + $0x10] sm:$0xff]
    %v2704 = vld [vmem:[%s1 + $0x18] sm:$0xff]
    %v2705 = vld [vmem:[%s1 + $0x20] sm:$0xff]
    %v2706 = vld [vmem:[%s1 + $0x28] sm:$0xff]
    %v2707 = vld [vmem:[%s1 + $0x30] sm:$0xff]
    %v2708 = vld [vmem:[%s1 + $0x38] sm:$0xff]
    %v2709 = vld [vmem:[%s2696 + $0x1] sm:$0xff]
    %v2710 = vld [vmem:[%s2696 + $0x9] sm:$0xff]
    %v2711 = vld [vmem:[%s2696 + $0x11] sm:$0xff]
    %v2712 = vld [vmem:[%s2696 + $0x19] sm:$0xf]
    %v2713 = vld [vmem:[%s73] sm:$0xff]
    %v2714 = vld [vmem:[%s73 + $0x8] sm:$0xff]
    %v2715 = vld [vmem:[%s73 + $0x10] sm:$0xff]
    %v2716 = vld [vmem:[%s73 + $0x18] sm:$0xff]
    %v2717 = vld [vmem:[%s73 + $0x20] sm:$0xff]
    %v2718 = vld [vmem:[%s73 + $0x28] sm:$0xff]
    %v2719 = vld [vmem:[%s73 + $0x30] sm:$0xff]
    %v2720 = vld [vmem:[%s73 + $0x38] sm:$0xff]
    %v2722 = vsel %vm82, %v2709, 0
    %v2725 = vsel %vm82, %v2710, 0
    %v2728 = vsel %vm82, %v2711, 0
    %v2731 = vsel %vm82, %v2712, 0
    %2733 = vmatprep.subr.mxu0 0.0
    %2734 = vmatpush1.msra.mxu0 0.0
    %2735 = vmatprep.subr.mxu0 0.0
    %2736 = vmatpush1.msra.mxu0 0.0
    %2737 = vmatprep.subr.mxu0 0.0
    %2738 = vmatpush1.msra.mxu0 0.0
    %2739 = vmatprep.subr.mxu0 0.0
    %2740 = vmatpush1.msra.mxu0 0.0
    %2741 = vmatprep.subr.mxu0 0.0
    %2742 = vmatpush1.msra.mxu0 0.0
    %2743 = vmatprep.subr.mxu0 0.0
    %2744 = vmatpush1.msra.mxu0 0.0
    %2745 = vmatprep.subr.mxu0 0.0
    %2746 = vmatpush1.msra.mxu0 0.0
    %2747 = vmatprep.subr.mxu0 0.0
    %2748 = vmatpush1.msra.mxu0 0.0
    %2749 = vmatprep.subr.mxu0 0.0
    %2750 = vmatpush1.msra.mxu0 0.0
    %2751 = vmatprep.subr.mxu0 0.0
    %2752 = vmatpush1.msra.mxu0 0.0
    %2753 = vmatprep.subr.mxu0 0.0
    %2754 = vmatpush1.msra.mxu0 0.0
    %2755 = vmatprep.subr.mxu0 0.0
    %2756 = vmatpush1.msra.mxu0 0.0
    %2757 = vmatprep.subr.mxu0 %v2720
    %2758 = vmatpush1.msra.mxu0 %v2719
    %2759 = vmatprep.subr.mxu0 %v2718
    %2760 = vmatpush1.msra.mxu0 %v2717
    %2761 = vmatprep.subr.mxu0 %v2716
    %2762 = vmatpush1.msra.mxu0 %v2715
    %2763 = vmatprep.subr.mxu0 %v2714
    %2764 = vmatpush1.msra.mxu0 %v2713
    %2765 = vmatprep.subr.mxu0 0.0
    %2766 = vmatpush2.msra.mxu0 0.0
    %2767 = vmatprep.subr.mxu0 0.0
    %2768 = vmatpush2.msra.mxu0 0.0
    %2769 = vmatprep.subr.mxu0 0.0
    %2770 = vmatpush2.msra.mxu0 0.0
    %2771 = vmatprep.subr.mxu0 0.0
    %2772 = vmatpush2.msra.mxu0 0.0
    %2773 = vmatprep.subr.mxu0 0.0
    %2774 = vmatpush2.msra.mxu0 0.0
    %2775 = vmatprep.subr.mxu0 0.0
    %2776 = vmatpush2.msra.mxu0 0.0
    %2777 = vmatprep.subr.mxu0 0.0
    %2778 = vmatpush2.msra.mxu0 0.0
    %2779 = vmatprep.subr.mxu0 0.0
    %2780 = vmatpush2.msra.mxu0 0.0
    %2781 = vmatprep.subr.mxu0 0.0
    %2782 = vmatpush2.msra.mxu0 0.0
    %2783 = vmatprep.subr.mxu0 0.0
    %2784 = vmatpush2.msra.mxu0 0.0
    %2785 = vmatprep.subr.mxu0 0.0
    %2786 = vmatpush2.msra.mxu0 0.0
    %2787 = vmatprep.subr.mxu0 0.0
    %2788 = vmatpush2.msra.mxu0 0.0
    %2789 = vmatprep.subr.mxu0 0.0
    %2790 = vmatpush2.msra.mxu0 0.0
    %2791 = vmatprep.subr.mxu0 0.0
    %2792 = vmatpush2.msra.mxu0 0.0
    %2793 = vmatprep.subr.mxu0 0.0
    %2794 = vmatpush2.msra.mxu0 0.0
    %2795 = vmatprep.subr.mxu0 0.0
    %2796 = vmatpush2.msra.mxu0 0.0
    %2797 = vmatprep.mubr.f32.mxu0 0.0
    %2798 = vmatmul.mubr.f32.gmra.mxu0 %v2722
    %v2799 = vpop.f32.mrf.mxu0
    %v2800 = vadd.f32 0.0, %v2799
    %v2801 = vpop.f32.mrf.mxu0
    %v2802 = vadd.f32 0.0, %v2801
    %2803 = vmatprep.mubr.f32.mxu0 0.0
    %2804 = vmatmul.mubr.f32.gmra.mxu0 %v2725
    %v2805 = vpop.f32.mrf.mxu0
    %v2806 = vadd.f32 0.0, %v2805
    %v2807 = vpop.f32.mrf.mxu0
    %v2808 = vadd.f32 0.0, %v2807
    %2809 = vmatprep.mubr.f32.mxu0 0.0
    %2810 = vmatmul.mubr.f32.gmra.mxu0 %v2728
    %v2811 = vpop.f32.mrf.mxu0
    %v2812 = vadd.f32 0.0, %v2811
    %v2813 = vpop.f32.mrf.mxu0
    %v2814 = vadd.f32 0.0, %v2813
    %2815 = vmatprep.mubr.f32.mxu0 0.0
    %2816 = vmatmul.mubr.f32.gmra.mxu0 %v2731
    %v2817 = vpop.f32.mrf.mxu0
    %v2818 = vadd.f32 0.0, %v2817
    %v2819 = vpop.f32.mrf.mxu0
    %v2820 = vadd.f32 0.0, %v2819
    %2821 = vdwg.mxu0
    %v2823 = vsel %vm82, %v2697, 0
    %v2826 = vsel %vm82, %v2698, 0
    %v2829 = vsel %vm82, %v2699, 0
    %v2832 = vsel %vm82, %v2700, 0
    %2834 = vmatprep.subr.mxu0 0.0
    %2835 = vmatpush1.msra.mxu0 0.0
    %2836 = vmatprep.subr.mxu0 0.0
    %2837 = vmatpush1.msra.mxu0 0.0
    %2838 = vmatprep.subr.mxu0 0.0
    %2839 = vmatpush1.msra.mxu0 0.0
    %2840 = vmatprep.subr.mxu0 0.0
    %2841 = vmatpush1.msra.mxu0 0.0
    %2842 = vmatprep.subr.mxu0 0.0
    %2843 = vmatpush1.msra.mxu0 0.0
    %2844 = vmatprep.subr.mxu0 0.0
    %2845 = vmatpush1.msra.mxu0 0.0
    %2846 = vmatprep.subr.mxu0 0.0
    %2847 = vmatpush1.msra.mxu0 0.0
    %2848 = vmatprep.subr.mxu0 0.0
    %2849 = vmatpush1.msra.mxu0 0.0
    %2850 = vmatprep.subr.mxu0 0.0
    %2851 = vmatpush1.msra.mxu0 0.0
    %2852 = vmatprep.subr.mxu0 0.0
    %2853 = vmatpush1.msra.mxu0 0.0
    %2854 = vmatprep.subr.mxu0 0.0
    %2855 = vmatpush1.msra.mxu0 0.0
    %2856 = vmatprep.subr.mxu0 0.0
    %2857 = vmatpush1.msra.mxu0 0.0
    %2858 = vmatprep.subr.mxu0 %v2708
    %2859 = vmatpush1.msra.mxu0 %v2707
    %2860 = vmatprep.subr.mxu0 %v2706
    %2861 = vmatpush1.msra.mxu0 %v2705
    %2862 = vmatprep.subr.mxu0 %v2704
    %2863 = vmatpush1.msra.mxu0 %v2703
    %2864 = vmatprep.subr.mxu0 %v2702
    %2865 = vmatpush1.msra.mxu0 %v2701
    %2866 = vmatprep.subr.mxu0 0.0
    %2867 = vmatpush2.msra.mxu0 0.0
    %2868 = vmatprep.subr.mxu0 0.0
    %2869 = vmatpush2.msra.mxu0 0.0
    %2870 = vmatprep.subr.mxu0 0.0
    %2871 = vmatpush2.msra.mxu0 0.0
    %2872 = vmatprep.subr.mxu0 0.0
    %2873 = vmatpush2.msra.mxu0 0.0
    %2874 = vmatprep.subr.mxu0 0.0
    %2875 = vmatpush2.msra.mxu0 0.0
    %2876 = vmatprep.subr.mxu0 0.0
    %2877 = vmatpush2.msra.mxu0 0.0
    %2878 = vmatprep.subr.mxu0 0.0
    %2879 = vmatpush2.msra.mxu0 0.0
    %2880 = vmatprep.subr.mxu0 0.0
    %2881 = vmatpush2.msra.mxu0 0.0
    %2882 = vmatprep.subr.mxu0 0.0
    %2883 = vmatpush2.msra.mxu0 0.0
    %2884 = vmatprep.subr.mxu0 0.0
    %2885 = vmatpush2.msra.mxu0 0.0
    %2886 = vmatprep.subr.mxu0 0.0
    %2887 = vmatpush2.msra.mxu0 0.0
    %2888 = vmatprep.subr.mxu0 0.0
    %2889 = vmatpush2.msra.mxu0 0.0
    %2890 = vmatprep.subr.mxu0 0.0
    %2891 = vmatpush2.msra.mxu0 0.0
    %2892 = vmatprep.subr.mxu0 0.0
    %2893 = vmatpush2.msra.mxu0 0.0
    %2894 = vmatprep.subr.mxu0 0.0
    %2895 = vmatpush2.msra.mxu0 0.0
    %2896 = vmatprep.subr.mxu0 0.0
    %2897 = vmatpush2.msra.mxu0 0.0
    %2898 = vmatprep.mubr.f32.mxu0 0.0
    %2899 = vmatmul.mubr.f32.gmra.mxu0 %v2823
    %v2900 = vpop.f32.mrf.mxu0
    %v2901 = vadd.f32 %v2800, %v2900
    %v2902 = vpop.f32.mrf.mxu0
    %v2903 = vadd.f32 %v2802, %v2902
    %2904 = vmatprep.mubr.f32.mxu0 0.0
    %2905 = vmatmul.mubr.f32.gmra.mxu0 %v2826
    %v2906 = vpop.f32.mrf.mxu0
    %v2907 = vadd.f32 %v2806, %v2906
    %v2908 = vpop.f32.mrf.mxu0
    %v2909 = vadd.f32 %v2808, %v2908
    %2910 = vmatprep.mubr.f32.mxu0 0.0
    %2911 = vmatmul.mubr.f32.gmra.mxu0 %v2829
    %v2912 = vpop.f32.mrf.mxu0
    %v2913 = vadd.f32 %v2812, %v2912
    %v2914 = vpop.f32.mrf.mxu0
    %v2915 = vadd.f32 %v2814, %v2914
    %2916 = vmatprep.mubr.f32.mxu0 0.0
    %2917 = vmatmul.mubr.f32.gmra.mxu0 %v2832
    %v2918 = vpop.f32.mrf.mxu0
    %v2919 = vadd.f32 %v2818, %v2918
    %v2920 = vpop.f32.mrf.mxu0
    %v2921 = vadd.f32 %v2820, %v2920
    %2922 = vdwg.mxu0
    %v2923 = vld [vmem:[%s2696 + $0x2] sm:$0xff]
    %v2924 = vld [vmem:[%s2696 + $0xa] sm:$0xff]
    %v2925 = vld [vmem:[%s2696 + $0x12] sm:$0xff]
    %v2926 = vld [vmem:[%s2696 + $0x1a] sm:$0xf]
    %v2927 = vld [vmem:[%s289] sm:$0xff]
    %v2928 = vld [vmem:[%s289 + $0x8] sm:$0xff]
    %v2929 = vld [vmem:[%s289 + $0x10] sm:$0xff]
    %v2930 = vld [vmem:[%s289 + $0x18] sm:$0xff]
    %v2931 = vld [vmem:[%s289 + $0x20] sm:$0xff]
    %v2932 = vld [vmem:[%s289 + $0x28] sm:$0xff]
    %v2933 = vld [vmem:[%s289 + $0x30] sm:$0xff]
    %v2934 = vld [vmem:[%s289 + $0x38] sm:$0xff]
    %v2936 = vsel %vm82, %v2923, 0
    %v2939 = vsel %vm82, %v2924, 0
    %v2942 = vsel %vm82, %v2925, 0
    %v2945 = vsel %vm82, %v2926, 0
    %2947 = vmatprep.subr.mxu0 0.0
    %2948 = vmatpush1.msra.mxu0 0.0
    %2949 = vmatprep.subr.mxu0 0.0
    %2950 = vmatpush1.msra.mxu0 0.0
    %2951 = vmatprep.subr.mxu0 0.0
    %2952 = vmatpush1.msra.mxu0 0.0
    %2953 = vmatprep.subr.mxu0 0.0
    %2954 = vmatpush1.msra.mxu0 0.0
    %2955 = vmatprep.subr.mxu0 0.0
    %2956 = vmatpush1.msra.mxu0 0.0
    %2957 = vmatprep.subr.mxu0 0.0
    %2958 = vmatpush1.msra.mxu0 0.0
    %2959 = vmatprep.subr.mxu0 0.0
    %2960 = vmatpush1.msra.mxu0 0.0
    %2961 = vmatprep.subr.mxu0 0.0
    %2962 = vmatpush1.msra.mxu0 0.0
    %2963 = vmatprep.subr.mxu0 0.0
    %2964 = vmatpush1.msra.mxu0 0.0
    %2965 = vmatprep.subr.mxu0 0.0
    %2966 = vmatpush1.msra.mxu0 0.0
    %2967 = vmatprep.subr.mxu0 0.0
    %2968 = vmatpush1.msra.mxu0 0.0
    %2969 = vmatprep.subr.mxu0 0.0
    %2970 = vmatpush1.msra.mxu0 0.0
    %2971 = vmatprep.subr.mxu0 %v2934
    %2972 = vmatpush1.msra.mxu0 %v2933
    %2973 = vmatprep.subr.mxu0 %v2932
    %2974 = vmatpush1.msra.mxu0 %v2931
    %2975 = vmatprep.subr.mxu0 %v2930
    %2976 = vmatpush1.msra.mxu0 %v2929
    %2977 = vmatprep.subr.mxu0 %v2928
    %2978 = vmatpush1.msra.mxu0 %v2927
    %2979 = vmatprep.subr.mxu0 0.0
    %2980 = vmatpush2.msra.mxu0 0.0
    %2981 = vmatprep.subr.mxu0 0.0
    %2982 = vmatpush2.msra.mxu0 0.0
    %2983 = vmatprep.subr.mxu0 0.0
    %2984 = vmatpush2.msra.mxu0 0.0
    %2985 = vmatprep.subr.mxu0 0.0
    %2986 = vmatpush2.msra.mxu0 0.0
    %2987 = vmatprep.subr.mxu0 0.0
    %2988 = vmatpush2.msra.mxu0 0.0
    %2989 = vmatprep.subr.mxu0 0.0
    %2990 = vmatpush2.msra.mxu0 0.0
    %2991 = vmatprep.subr.mxu0 0.0
    %2992 = vmatpush2.msra.mxu0 0.0
    %2993 = vmatprep.subr.mxu0 0.0
    %2994 = vmatpush2.msra.mxu0 0.0
    %2995 = vmatprep.subr.mxu0 0.0
    %2996 = vmatpush2.msra.mxu0 0.0
    %2997 = vmatprep.subr.mxu0 0.0
    %2998 = vmatpush2.msra.mxu0 0.0
    %2999 = vmatprep.subr.mxu0 0.0
    %3000 = vmatpush2.msra.mxu0 0.0
    %3001 = vmatprep.subr.mxu0 0.0
    %3002 = vmatpush2.msra.mxu0 0.0
    %3003 = vmatprep.subr.mxu0 0.0
    %3004 = vmatpush2.msra.mxu0 0.0
    %3005 = vmatprep.subr.mxu0 0.0
    %3006 = vmatpush2.msra.mxu0 0.0
    %3007 = vmatprep.subr.mxu0 0.0
    %3008 = vmatpush2.msra.mxu0 0.0
    %3009 = vmatprep.subr.mxu0 0.0
    %3010 = vmatpush2.msra.mxu0 0.0
    %3011 = vmatprep.mubr.f32.mxu0 0.0
    %3012 = vmatmul.mubr.f32.gmra.mxu0 %v2936
    %v3013 = vpop.f32.mrf.mxu0
    %v3014 = vadd.f32 0.0, %v3013
    %v3015 = vpop.f32.mrf.mxu0
    %v3016 = vadd.f32 0.0, %v3015
    %3017 = vmatprep.mubr.f32.mxu0 0.0
    %3018 = vmatmul.mubr.f32.gmra.mxu0 %v2939
    %v3019 = vpop.f32.mrf.mxu0
    %v3020 = vadd.f32 0.0, %v3019
    %v3021 = vpop.f32.mrf.mxu0
    %v3022 = vadd.f32 0.0, %v3021
    %3023 = vmatprep.mubr.f32.mxu0 0.0
    %3024 = vmatmul.mubr.f32.gmra.mxu0 %v2942
    %v3025 = vpop.f32.mrf.mxu0
    %v3026 = vadd.f32 0.0, %v3025
    %v3027 = vpop.f32.mrf.mxu0
    %v3028 = vadd.f32 0.0, %v3027
    %3029 = vmatprep.mubr.f32.mxu0 0.0
    %3030 = vmatmul.mubr.f32.gmra.mxu0 %v2945
    %v3031 = vpop.f32.mrf.mxu0
    %v3032 = vadd.f32 0.0, %v3031
    %v3033 = vpop.f32.mrf.mxu0
    %v3034 = vadd.f32 0.0, %v3033
    %3035 = vdwg.mxu0
    %v3036 = vadd.f32 %v2901, %v3014
    %v3037 = vadd.f32 %v2903, %v3016
    %v3038 = vadd.f32 %v2907, %v3020
    %v3039 = vadd.f32 %v2909, %v3022
    %v3040 = vadd.f32 %v2913, %v3026
    %v3041 = vadd.f32 %v2915, %v3028
    %v3042 = vadd.f32 %v2919, %v3032
    %v3043 = vadd.f32 %v2921, %v3034
    %v3044 = vld [vmem:[%s2696 + $0x3] sm:$0xff]
    %v3045 = vld [vmem:[%s2696 + $0xb] sm:$0xff]
    %v3046 = vld [vmem:[%s2696 + $0x13] sm:$0xff]
    %v3047 = vld [vmem:[%s2696 + $0x1b] sm:$0xf]
    %v3048 = vld [vmem:[%s411] sm:$0xff]
    %v3049 = vld [vmem:[%s411 + $0x8] sm:$0xff]
    %v3050 = vld [vmem:[%s411 + $0x10] sm:$0xff]
    %v3051 = vld [vmem:[%s411 + $0x18] sm:$0xff]
    %v3052 = vld [vmem:[%s411 + $0x20] sm:$0xff]
    %v3053 = vld [vmem:[%s411 + $0x28] sm:$0xff]
    %v3054 = vld [vmem:[%s411 + $0x30] sm:$0xff]
    %v3055 = vld [vmem:[%s411 + $0x38] sm:$0xff]
    %v3057 = vsel %vm82, %v3044, 0
    %v3060 = vsel %vm82, %v3045, 0
    %v3063 = vsel %vm82, %v3046, 0
    %v3066 = vsel %vm82, %v3047, 0
    %3068 = vmatprep.subr.mxu0 0.0
    %3069 = vmatpush1.msra.mxu0 0.0
    %3070 = vmatprep.subr.mxu0 0.0
    %3071 = vmatpush1.msra.mxu0 0.0
    %3072 = vmatprep.subr.mxu0 0.0
    %3073 = vmatpush1.msra.mxu0 0.0
    %3074 = vmatprep.subr.mxu0 0.0
    %3075 = vmatpush1.msra.mxu0 0.0
    %3076 = vmatprep.subr.mxu0 0.0
    %3077 = vmatpush1.msra.mxu0 0.0
    %3078 = vmatprep.subr.mxu0 0.0
    %3079 = vmatpush1.msra.mxu0 0.0
    %3080 = vmatprep.subr.mxu0 0.0
    %3081 = vmatpush1.msra.mxu0 0.0
    %3082 = vmatprep.subr.mxu0 0.0
    %3083 = vmatpush1.msra.mxu0 0.0
    %3084 = vmatprep.subr.mxu0 0.0
    %3085 = vmatpush1.msra.mxu0 0.0
    %3086 = vmatprep.subr.mxu0 0.0
    %3087 = vmatpush1.msra.mxu0 0.0
    %3088 = vmatprep.subr.mxu0 0.0
    %3089 = vmatpush1.msra.mxu0 0.0
    %3090 = vmatprep.subr.mxu0 0.0
    %3091 = vmatpush1.msra.mxu0 0.0
    %3092 = vmatprep.subr.mxu0 %v3055
    %3093 = vmatpush1.msra.mxu0 %v3054
    %3094 = vmatprep.subr.mxu0 %v3053
    %3095 = vmatpush1.msra.mxu0 %v3052
    %3096 = vmatprep.subr.mxu0 %v3051
    %3097 = vmatpush1.msra.mxu0 %v3050
    %3098 = vmatprep.subr.mxu0 %v3049
    %3099 = vmatpush1.msra.mxu0 %v3048
    %3100 = vmatprep.subr.mxu0 0.0
    %3101 = vmatpush2.msra.mxu0 0.0
    %3102 = vmatprep.subr.mxu0 0.0
    %3103 = vmatpush2.msra.mxu0 0.0
    %3104 = vmatprep.subr.mxu0 0.0
    %3105 = vmatpush2.msra.mxu0 0.0
    %3106 = vmatprep.subr.mxu0 0.0
    %3107 = vmatpush2.msra.mxu0 0.0
    %3108 = vmatprep.subr.mxu0 0.0
    %3109 = vmatpush2.msra.mxu0 0.0
    %3110 = vmatprep.subr.mxu0 0.0
    %3111 = vmatpush2.msra.mxu0 0.0
    %3112 = vmatprep.subr.mxu0 0.0
    %3113 = vmatpush2.msra.mxu0 0.0
    %3114 = vmatprep.subr.mxu0 0.0
    %3115 = vmatpush2.msra.mxu0 0.0
    %3116 = vmatprep.subr.mxu0 0.0
    %3117 = vmatpush2.msra.mxu0 0.0
    %3118 = vmatprep.subr.mxu0 0.0
    %3119 = vmatpush2.msra.mxu0 0.0
    %3120 = vmatprep.subr.mxu0 0.0
    %3121 = vmatpush2.msra.mxu0 0.0
    %3122 = vmatprep.subr.mxu0 0.0
    %3123 = vmatpush2.msra.mxu0 0.0
    %3124 = vmatprep.subr.mxu0 0.0
    %3125 = vmatpush2.msra.mxu0 0.0
    %3126 = vmatprep.subr.mxu0 0.0
    %3127 = vmatpush2.msra.mxu0 0.0
    %3128 = vmatprep.subr.mxu0 0.0
    %3129 = vmatpush2.msra.mxu0 0.0
    %3130 = vmatprep.subr.mxu0 0.0
    %3131 = vmatpush2.msra.mxu0 0.0
    %3132 = vmatprep.mubr.f32.mxu0 0.0
    %3133 = vmatmul.mubr.f32.gmra.mxu0 %v3057
    %v3134 = vpop.f32.mrf.mxu0
    %v3135 = vadd.f32 0.0, %v3134
    %v3136 = vpop.f32.mrf.mxu0
    %v3137 = vadd.f32 0.0, %v3136
    %3138 = vmatprep.mubr.f32.mxu0 0.0
    %3139 = vmatmul.mubr.f32.gmra.mxu0 %v3060
    %v3140 = vpop.f32.mrf.mxu0
    %v3141 = vadd.f32 0.0, %v3140
    %v3142 = vpop.f32.mrf.mxu0
    %v3143 = vadd.f32 0.0, %v3142
    %3144 = vmatprep.mubr.f32.mxu0 0.0
    %3145 = vmatmul.mubr.f32.gmra.mxu0 %v3063
    %v3146 = vpop.f32.mrf.mxu0
    %v3147 = vadd.f32 0.0, %v3146
    %v3148 = vpop.f32.mrf.mxu0
    %v3149 = vadd.f32 0.0, %v3148
    %3150 = vmatprep.mubr.f32.mxu0 0.0
    %3151 = vmatmul.mubr.f32.gmra.mxu0 %v3066
    %v3152 = vpop.f32.mrf.mxu0
    %v3153 = vadd.f32 0.0, %v3152
    %v3154 = vpop.f32.mrf.mxu0
    %v3155 = vadd.f32 0.0, %v3154
    %3156 = vdwg.mxu0
    %v3157 = vadd.f32 %v3036, %v3135
    %v3158 = vadd.f32 %v3037, %v3137
    %v3159 = vadd.f32 %v3038, %v3141
    %v3160 = vadd.f32 %v3039, %v3143
    %v3161 = vadd.f32 %v3040, %v3147
    %v3162 = vadd.f32 %v3041, %v3149
    %v3163 = vadd.f32 %v3042, %v3153
    %v3164 = vadd.f32 %v3043, %v3155
    %v3165 = vld [vmem:[%s2696 + $0x4] sm:$0xff]
    %v3166 = vld [vmem:[%s2696 + $0xc] sm:$0xff]
    %v3167 = vld [vmem:[%s2696 + $0x14] sm:$0xff]
    %v3168 = vld [vmem:[%s2696 + $0x1c] sm:$0xf]
    %v3169 = vld [vmem:[%s533] sm:$0xff]
    %v3170 = vld [vmem:[%s533 + $0x8] sm:$0xff]
    %v3171 = vld [vmem:[%s533 + $0x10] sm:$0xff]
    %v3172 = vld [vmem:[%s533 + $0x18] sm:$0xff]
    %v3173 = vld [vmem:[%s533 + $0x20] sm:$0xff]
    %v3174 = vld [vmem:[%s533 + $0x28] sm:$0xff]
    %v3175 = vld [vmem:[%s533 + $0x30] sm:$0xff]
    %v3176 = vld [vmem:[%s533 + $0x38] sm:$0xff]
    %v3178 = vsel %vm82, %v3165, 0
    %v3181 = vsel %vm82, %v3166, 0
    %v3184 = vsel %vm82, %v3167, 0
    %v3187 = vsel %vm82, %v3168, 0
    %3189 = vmatprep.subr.mxu0 0.0
    %3190 = vmatpush1.msra.mxu0 0.0
    %3191 = vmatprep.subr.mxu0 0.0
    %3192 = vmatpush1.msra.mxu0 0.0
    %3193 = vmatprep.subr.mxu0 0.0
    %3194 = vmatpush1.msra.mxu0 0.0
    %3195 = vmatprep.subr.mxu0 0.0
    %3196 = vmatpush1.msra.mxu0 0.0
    %3197 = vmatprep.subr.mxu0 0.0
    %3198 = vmatpush1.msra.mxu0 0.0
    %3199 = vmatprep.subr.mxu0 0.0
    %3200 = vmatpush1.msra.mxu0 0.0
    %3201 = vmatprep.subr.mxu0 0.0
    %3202 = vmatpush1.msra.mxu0 0.0
    %3203 = vmatprep.subr.mxu0 0.0
    %3204 = vmatpush1.msra.mxu0 0.0
    %3205 = vmatprep.subr.mxu0 0.0
    %3206 = vmatpush1.msra.mxu0 0.0
    %3207 = vmatprep.subr.mxu0 0.0
    %3208 = vmatpush1.msra.mxu0 0.0
    %3209 = vmatprep.subr.mxu0 0.0
    %3210 = vmatpush1.msra.mxu0 0.0
    %3211 = vmatprep.subr.mxu0 0.0
    %3212 = vmatpush1.msra.mxu0 0.0
    %3213 = vmatprep.subr.mxu0 %v3176
    %3214 = vmatpush1.msra.mxu0 %v3175
    %3215 = vmatprep.subr.mxu0 %v3174
    %3216 = vmatpush1.msra.mxu0 %v3173
    %3217 = vmatprep.subr.mxu0 %v3172
    %3218 = vmatpush1.msra.mxu0 %v3171
    %3219 = vmatprep.subr.mxu0 %v3170
    %3220 = vmatpush1.msra.mxu0 %v3169
    %3221 = vmatprep.subr.mxu0 0.0
    %3222 = vmatpush2.msra.mxu0 0.0
    %3223 = vmatprep.subr.mxu0 0.0
    %3224 = vmatpush2.msra.mxu0 0.0
    %3225 = vmatprep.subr.mxu0 0.0
    %3226 = vmatpush2.msra.mxu0 0.0
    %3227 = vmatprep.subr.mxu0 0.0
    %3228 = vmatpush2.msra.mxu0 0.0
    %3229 = vmatprep.subr.mxu0 0.0
    %3230 = vmatpush2.msra.mxu0 0.0
    %3231 = vmatprep.subr.mxu0 0.0
    %3232 = vmatpush2.msra.mxu0 0.0
    %3233 = vmatprep.subr.mxu0 0.0
    %3234 = vmatpush2.msra.mxu0 0.0
    %3235 = vmatprep.subr.mxu0 0.0
    %3236 = vmatpush2.msra.mxu0 0.0
    %3237 = vmatprep.subr.mxu0 0.0
    %3238 = vmatpush2.msra.mxu0 0.0
    %3239 = vmatprep.subr.mxu0 0.0
    %3240 = vmatpush2.msra.mxu0 0.0
    %3241 = vmatprep.subr.mxu0 0.0
    %3242 = vmatpush2.msra.mxu0 0.0
    %3243 = vmatprep.subr.mxu0 0.0
    %3244 = vmatpush2.msra.mxu0 0.0
    %3245 = vmatprep.subr.mxu0 0.0
    %3246 = vmatpush2.msra.mxu0 0.0
    %3247 = vmatprep.subr.mxu0 0.0
    %3248 = vmatpush2.msra.mxu0 0.0
    %3249 = vmatprep.subr.mxu0 0.0
    %3250 = vmatpush2.msra.mxu0 0.0
    %3251 = vmatprep.subr.mxu0 0.0
    %3252 = vmatpush2.msra.mxu0 0.0
    %3253 = vmatprep.mubr.f32.mxu0 0.0
    %3254 = vmatmul.mubr.f32.gmra.mxu0 %v3178
    %v3255 = vpop.f32.mrf.mxu0
    %v3256 = vadd.f32 0.0, %v3255
    %v3257 = vpop.f32.mrf.mxu0
    %v3258 = vadd.f32 0.0, %v3257
    %3259 = vmatprep.mubr.f32.mxu0 0.0
    %3260 = vmatmul.mubr.f32.gmra.mxu0 %v3181
    %v3261 = vpop.f32.mrf.mxu0
    %v3262 = vadd.f32 0.0, %v3261
    %v3263 = vpop.f32.mrf.mxu0
    %v3264 = vadd.f32 0.0, %v3263
    %3265 = vmatprep.mubr.f32.mxu0 0.0
    %3266 = vmatmul.mubr.f32.gmra.mxu0 %v3184
    %v3267 = vpop.f32.mrf.mxu0
    %v3268 = vadd.f32 0.0, %v3267
    %v3269 = vpop.f32.mrf.mxu0
    %v3270 = vadd.f32 0.0, %v3269
    %3271 = vmatprep.mubr.f32.mxu0 0.0
    %3272 = vmatmul.mubr.f32.gmra.mxu0 %v3187
    %v3273 = vpop.f32.mrf.mxu0
    %v3274 = vadd.f32 0.0, %v3273
    %v3275 = vpop.f32.mrf.mxu0
    %v3276 = vadd.f32 0.0, %v3275
    %3277 = vdwg.mxu0
    %v3278 = vadd.f32 %v3157, %v3256
    %v3279 = vadd.f32 %v3158, %v3258
    %v3280 = vadd.f32 %v3159, %v3262
    %v3281 = vadd.f32 %v3160, %v3264
    %v3282 = vadd.f32 %v3161, %v3268
    %v3283 = vadd.f32 %v3162, %v3270
    %v3284 = vadd.f32 %v3163, %v3274
    %v3285 = vadd.f32 %v3164, %v3276
    %v3286 = vld [vmem:[%s2] sm:$0x3]
    %v3288 = vlaneseq
    %v3289 = vshrl.u32 %v3288, 7
    %v3290 = vsub.s32 0, %v3289
    %v3291 = vrot.slane %v3286, %v3290
    %v3292 = vlaneseq
    %v3293 = vshrl.u32 %v3292, 7
    %v3294 = vsub.s32 1, %v3293
    %v3295 = vrot.slane %v3286, %v3294
    %v3298 = vadd.f32 %v3278, %v3291
    %v3299 = vadd.f32 %v3279, %v3295
    %v3300 = vadd.f32 %v3280, %v3291
    %v3301 = vadd.f32 %v3281, %v3295
    %v3302 = vadd.f32 %v3282, %v3291
    %v3303 = vadd.f32 %v3283, %v3295
    %v3304 = vadd.f32 %v3284, %v3291
    %v3305 = vadd.f32 %v3285, %v3295
    %v3306 = vld [vmem:[%s11] sm:$0xff]
    %v3307 = vld [vmem:[%s11 + $0x8] sm:$0x3f]
    %v3309 = vsel %vm673, %v3306, 0
    %v3312 = vsel %vm673, %v3307, 0
    %v3315 = vsel %vm680, %v3304, 0
    %v3318 = vsel %vm680, %v3305, 0
    %3320 = vmatprep.subr.mxu0 0.0
    %3321 = vmatpush1.msra.mxu0 0.0
    %3322 = vmatprep.subr.mxu0 0.0
    %3323 = vmatpush1.msra.mxu0 0.0
    %3324 = vmatprep.subr.mxu0 0.0
    %3325 = vmatpush1.msra.mxu0 0.0
    %3326 = vmatprep.subr.mxu0 0.0
    %3327 = vmatpush1.msra.mxu0 0.0
    %3328 = vmatprep.subr.mxu0 0.0
    %3329 = vmatpush1.msra.mxu0 0.0
    %3330 = vmatprep.subr.mxu0 0.0
    %3331 = vmatpush1.msra.mxu0 0.0
    %3332 = vmatprep.subr.mxu0 0.0
    %3333 = vmatpush1.msra.mxu0 0.0
    %3334 = vmatprep.subr.mxu0 0.0
    %3335 = vmatpush1.msra.mxu0 0.0
    %3336 = vmatprep.subr.mxu0 0.0
    %3337 = vmatpush1.msra.mxu0 0.0
    %3338 = vmatprep.subr.mxu0 0.0
    %3339 = vmatpush1.msra.mxu0 0.0
    %3340 = vmatprep.subr.mxu0 0.0
    %3341 = vmatpush1.msra.mxu0 0.0
    %3342 = vmatprep.subr.mxu0 0.0
    %3343 = vmatpush1.msra.mxu0 0.0
    %3344 = vmatprep.subr.mxu0 %v3318
    %3345 = vmatpush1.msra.mxu0 %v3315
    %3346 = vmatprep.subr.mxu0 %v3303
    %3347 = vmatpush1.msra.mxu0 %v3302
    %3348 = vmatprep.subr.mxu0 %v3301
    %3349 = vmatpush1.msra.mxu0 %v3300
    %3350 = vmatprep.subr.mxu0 %v3299
    %3351 = vmatpush1.msra.mxu0 %v3298
    %3352 = vmatprep.subr.mxu0 0.0
    %3353 = vmatpush2.msra.mxu0 0.0
    %3354 = vmatprep.subr.mxu0 0.0
    %3355 = vmatpush2.msra.mxu0 0.0
    %3356 = vmatprep.subr.mxu0 0.0
    %3357 = vmatpush2.msra.mxu0 0.0
    %3358 = vmatprep.subr.mxu0 0.0
    %3359 = vmatpush2.msra.mxu0 0.0
    %3360 = vmatprep.subr.mxu0 0.0
    %3361 = vmatpush2.msra.mxu0 0.0
    %3362 = vmatprep.subr.mxu0 0.0
    %3363 = vmatpush2.msra.mxu0 0.0
    %3364 = vmatprep.subr.mxu0 0.0
    %3365 = vmatpush2.msra.mxu0 0.0
    %3366 = vmatprep.subr.mxu0 0.0
    %3367 = vmatpush2.msra.mxu0 0.0
    %3368 = vmatprep.subr.mxu0 0.0
    %3369 = vmatpush2.msra.mxu0 0.0
    %3370 = vmatprep.subr.mxu0 0.0
    %3371 = vmatpush2.msra.mxu0 0.0
    %3372 = vmatprep.subr.mxu0 0.0
    %3373 = vmatpush2.msra.mxu0 0.0
    %3374 = vmatprep.subr.mxu0 0.0
    %3375 = vmatpush2.msra.mxu0 0.0
    %3376 = vmatprep.subr.mxu0 0.0
    %3377 = vmatpush2.msra.mxu0 0.0
    %3378 = vmatprep.subr.mxu0 0.0
    %3379 = vmatpush2.msra.mxu0 0.0
    %3380 = vmatprep.subr.mxu0 0.0
    %3381 = vmatpush2.msra.mxu0 0.0
    %3382 = vmatprep.subr.mxu0 0.0
    %3383 = vmatpush2.msra.mxu0 0.0
    %3384 = vmatprep.mubr.f32.mxu0 0.0
    %3385 = vmatmul.mubr.f32.gmra.mxu0 %v3309
    %v3386 = vpop.f32.mrf.mxu0
    %v3387 = vadd.f32 0.0, %v3386
    %v3388 = vpop.f32.mrf.mxu0
    %v3389 = vadd.f32 0.0, %v3388
    %3390 = vmatprep.mubr.f32.mxu0 0.0
    %3391 = vmatmul.mubr.f32.gmra.mxu0 %v3312
    %v3392 = vpop.f32.mrf.mxu0
    %v3393 = vadd.f32 0.0, %v3392
    %v3394 = vpop.f32.mrf.mxu0
    %v3395 = vadd.f32 0.0, %v3394
    %3396 = vdwg.mxu0
    %v3397 = vld [vmem:[%s12] sm:$0xff]
    %v3398 = vld [vmem:[%s12 + $0x8] sm:$0x3f]
    %v3400 = vsel %vm673, %v3397, 0
    %v3403 = vsel %vm673, %v3398, 0
    %3405 = vmatprep.subr.mxu0 0.0
    %3406 = vmatpush1.msra.mxu0 0.0
    %3407 = vmatprep.subr.mxu0 0.0
    %3408 = vmatpush1.msra.mxu0 0.0
    %3409 = vmatprep.subr.mxu0 0.0
    %3410 = vmatpush1.msra.mxu0 0.0
    %3411 = vmatprep.subr.mxu0 0.0
    %3412 = vmatpush1.msra.mxu0 0.0
    %3413 = vmatprep.subr.mxu0 0.0
    %3414 = vmatpush1.msra.mxu0 0.0
    %3415 = vmatprep.subr.mxu0 0.0
    %3416 = vmatpush1.msra.mxu0 0.0
    %3417 = vmatprep.subr.mxu0 0.0
    %3418 = vmatpush1.msra.mxu0 0.0
    %3419 = vmatprep.subr.mxu0 0.0
    %3420 = vmatpush1.msra.mxu0 0.0
    %3421 = vmatprep.subr.mxu0 0.0
    %3422 = vmatpush1.msra.mxu0 0.0
    %3423 = vmatprep.subr.mxu0 0.0
    %3424 = vmatpush1.msra.mxu0 0.0
    %3425 = vmatprep.subr.mxu0 0.0
    %3426 = vmatpush1.msra.mxu0 0.0
    %3427 = vmatprep.subr.mxu0 0.0
    %3428 = vmatpush1.msra.mxu0 0.0
    %3429 = vmatprep.subr.mxu0 %v3318
    %3430 = vmatpush1.msra.mxu0 %v3315
    %3431 = vmatprep.subr.mxu0 %v3303
    %3432 = vmatpush1.msra.mxu0 %v3302
    %3433 = vmatprep.subr.mxu0 %v3301
    %3434 = vmatpush1.msra.mxu0 %v3300
    %3435 = vmatprep.subr.mxu0 %v3299
    %3436 = vmatpush1.msra.mxu0 %v3298
    %3437 = vmatprep.subr.mxu0 0.0
    %3438 = vmatpush2.msra.mxu0 0.0
    %3439 = vmatprep.subr.mxu0 0.0
    %3440 = vmatpush2.msra.mxu0 0.0
    %3441 = vmatprep.subr.mxu0 0.0
    %3442 = vmatpush2.msra.mxu0 0.0
    %3443 = vmatprep.subr.mxu0 0.0
    %3444 = vmatpush2.msra.mxu0 0.0
    %3445 = vmatprep.subr.mxu0 0.0
    %3446 = vmatpush2.msra.mxu0 0.0
    %3447 = vmatprep.subr.mxu0 0.0
    %3448 = vmatpush2.msra.mxu0 0.0
    %3449 = vmatprep.subr.mxu0 0.0
    %3450 = vmatpush2.msra.mxu0 0.0
    %3451 = vmatprep.subr.mxu0 0.0
    %3452 = vmatpush2.msra.mxu0 0.0
    %3453 = vmatprep.subr.mxu0 0.0
    %3454 = vmatpush2.msra.mxu0 0.0
    %3455 = vmatprep.subr.mxu0 0.0
    %3456 = vmatpush2.msra.mxu0 0.0
    %3457 = vmatprep.subr.mxu0 0.0
    %3458 = vmatpush2.msra.mxu0 0.0
    %3459 = vmatprep.subr.mxu0 0.0
    %3460 = vmatpush2.msra.mxu0 0.0
    %3461 = vmatprep.subr.mxu0 0.0
    %3462 = vmatpush2.msra.mxu0 0.0
    %3463 = vmatprep.subr.mxu0 0.0
    %3464 = vmatpush2.msra.mxu0 0.0
    %3465 = vmatprep.subr.mxu0 0.0
    %3466 = vmatpush2.msra.mxu0 0.0
    %3467 = vmatprep.subr.mxu0 0.0
    %3468 = vmatpush2.msra.mxu0 0.0
    %3469 = vmatprep.mubr.f32.mxu0 0.0
    %3470 = vmatmul.mubr.f32.gmra.mxu0 %v3400
    %v3471 = vpop.f32.mrf.mxu0
    %v3472 = vadd.f32 0.0, %v3471
    %v3473 = vpop.f32.mrf.mxu0
    %v3474 = vadd.f32 0.0, %v3473
    %3475 = vmatprep.mubr.f32.mxu0 0.0
    %3476 = vmatmul.mubr.f32.gmra.mxu0 %v3403
    %v3477 = vpop.f32.mrf.mxu0
    %v3478 = vadd.f32 0.0, %v3477
    %v3479 = vpop.f32.mrf.mxu0
    %v3480 = vadd.f32 0.0, %v3479
    %3481 = vdwg.mxu0
    %v3482 = vmax.f32 %v3387, %v3472
    %v3483 = vmax.f32 %v3389, %v3474
    %v3484 = vmax.f32 %v3393, %v3478
    %v3485 = vmax.f32 %v3395, %v3480
    %v3486 = vld [vmem:[%s13] sm:$0xff]
    %v3487 = vld [vmem:[%s13 + $0x8] sm:$0xff]
    %v3488 = vld [vmem:[%s13 + $0x10] sm:$0xff]
    %v3489 = vld [vmem:[%s13 + $0x18] sm:$0xff]
    %v3490 = vld [vmem:[%s13 + $0x20] sm:$0xff]
    %v3491 = vld [vmem:[%s13 + $0x28] sm:$0xff]
    %v3492 = vld [vmem:[%s13 + $0x30] sm:$0xff]
    %v3493 = vld [vmem:[%s13 + $0x38] sm:$0xff]
    %v3494 = vld [vmem:[%s13 + $0x40] sm:$0xff]
    %v3495 = vld [vmem:[%s13 + $0x48] sm:$0xff]
    %v3496 = vld [vmem:[%s13 + $0x50] sm:$0xff]
    %v3497 = vld [vmem:[%s13 + $0x58] sm:$0xff]
    %v3498 = vld [vmem:[%s13 + $0x60] sm:$0xff]
    %v3499 = vld [vmem:[%s13 + $0x68] sm:$0xff]
    %v3500 = vld [vmem:[%s13 + $0x70] sm:$0xff]
    %v3501 = vld [vmem:[%s13 + $0x78] sm:$0xff]
    %v3502 = vld [vmem:[%s13 + $0x80] sm:$0xff]
    %v3503 = vld [vmem:[%s13 + $0x88] sm:$0xff]
    %v3504 = vld [vmem:[%s13 + $0x90] sm:$0xff]
    %v3505 = vld [vmem:[%s13 + $0x98] sm:$0xff]
    %v3506 = vld [vmem:[%s13 + $0xa0] sm:$0xff]
    %v3507 = vld [vmem:[%s13 + $0xa8] sm:$0xff]
    %v3508 = vld [vmem:[%s13 + $0xb0] sm:$0xff]
    %v3509 = vld [vmem:[%s13 + $0xb8] sm:$0xff]
    %v3510 = vld [vmem:[%s13 + $0xc0] sm:$0xff]
    %v3511 = vld [vmem:[%s13 + $0xc8] sm:$0xff]
    %v3512 = vld [vmem:[%s13 + $0xd0] sm:$0xff]
    %v3513 = vld [vmem:[%s13 + $0xd8] sm:$0xff]
    %v3514 = vld [vmem:[%s13 + $0xe0] sm:$0xff]
    %v3515 = vld [vmem:[%s13 + $0xe8] sm:$0xff]
    %v3516 = vld [vmem:[%s13 + $0xf0] sm:$0xff]
    %v3517 = vld [vmem:[%s13 + $0xf8] sm:$0xff]
    %v3518 = vld [vmem:[%s13 + $0x100] sm:$0xff]
    %v3519 = vld [vmem:[%s13 + $0x108] sm:$0xff]
    %v3520 = vld [vmem:[%s13 + $0x110] sm:$0xff]
    %v3521 = vld [vmem:[%s13 + $0x118] sm:$0xff]
    %v3522 = vld [vmem:[%s13 + $0x120] sm:$0xff]
    %v3523 = vld [vmem:[%s13 + $0x128] sm:$0xff]
    %v3524 = vld [vmem:[%s13 + $0x130] sm:$0xff]
    %v3525 = vld [vmem:[%s13 + $0x138] sm:$0xff]
    %v3526 = vld [vmem:[%s13 + $0x140] sm:$0xff]
    %v3527 = vld [vmem:[%s13 + $0x148] sm:$0xff]
    %v3529 = vsel %vm895, %v3483, 0
    %v3532 = vsel %vm895, %v3485, 0
    %3534 = vmatprep.subr.mxu0 %v3517
    %3535 = vmatpush1.msra.mxu0 %v3516
    %3536 = vmatprep.subr.mxu0 %v3515
    %3537 = vmatpush1.msra.mxu0 %v3514
    %3538 = vmatprep.subr.mxu0 %v3513
    %3539 = vmatpush1.msra.mxu0 %v3512
    %3540 = vmatprep.subr.mxu0 %v3511
    %3541 = vmatpush1.msra.mxu0 %v3510
    %3542 = vmatprep.subr.mxu0 %v3509
    %3543 = vmatpush1.msra.mxu0 %v3508
    %3544 = vmatprep.subr.mxu0 %v3507
    %3545 = vmatpush1.msra.mxu0 %v3506
    %3546 = vmatprep.subr.mxu0 %v3505
    %3547 = vmatpush1.msra.mxu0 %v3504
    %3548 = vmatprep.subr.mxu0 %v3503
    %3549 = vmatpush1.msra.mxu0 %v3502
    %3550 = vmatprep.subr.mxu0 %v3501
    %3551 = vmatpush1.msra.mxu0 %v3500
    %3552 = vmatprep.subr.mxu0 %v3499
    %3553 = vmatpush1.msra.mxu0 %v3498
    %3554 = vmatprep.subr.mxu0 %v3497
    %3555 = vmatpush1.msra.mxu0 %v3496
    %3556 = vmatprep.subr.mxu0 %v3495
    %3557 = vmatpush1.msra.mxu0 %v3494
    %3558 = vmatprep.subr.mxu0 %v3493
    %3559 = vmatpush1.msra.mxu0 %v3492
    %3560 = vmatprep.subr.mxu0 %v3491
    %3561 = vmatpush1.msra.mxu0 %v3490
    %3562 = vmatprep.subr.mxu0 %v3489
    %3563 = vmatpush1.msra.mxu0 %v3488
    %3564 = vmatprep.subr.mxu0 %v3487
    %3565 = vmatpush1.msra.mxu0 %v3486
    %3566 = vmatprep.subr.mxu0 0.0
    %3567 = vmatpush2.msra.mxu0 0.0
    %3568 = vmatprep.subr.mxu0 0.0
    %3569 = vmatpush2.msra.mxu0 0.0
    %3570 = vmatprep.subr.mxu0 0.0
    %3571 = vmatpush2.msra.mxu0 0.0
    %3572 = vmatprep.subr.mxu0 0.0
    %3573 = vmatpush2.msra.mxu0 0.0
    %3574 = vmatprep.subr.mxu0 0.0
    %3575 = vmatpush2.msra.mxu0 0.0
    %3576 = vmatprep.subr.mxu0 0.0
    %3577 = vmatpush2.msra.mxu0 0.0
    %3578 = vmatprep.subr.mxu0 0.0
    %3579 = vmatpush2.msra.mxu0 0.0
    %3580 = vmatprep.subr.mxu0 0.0
    %3581 = vmatpush2.msra.mxu0 0.0
    %3582 = vmatprep.subr.mxu0 0.0
    %3583 = vmatpush2.msra.mxu0 0.0
    %3584 = vmatprep.subr.mxu0 0.0
    %3585 = vmatpush2.msra.mxu0 0.0
    %3586 = vmatprep.subr.mxu0 0.0
    %3587 = vmatpush2.msra.mxu0 0.0
    %3588 = vmatprep.subr.mxu0 %v3527
    %3589 = vmatpush2.msra.mxu0 %v3526
    %3590 = vmatprep.subr.mxu0 %v3525
    %3591 = vmatpush2.msra.mxu0 %v3524
    %3592 = vmatprep.subr.mxu0 %v3523
    %3593 = vmatpush2.msra.mxu0 %v3522
    %3594 = vmatprep.subr.mxu0 %v3521
    %3595 = vmatpush2.msra.mxu0 %v3520
    %3596 = vmatprep.subr.mxu0 %v3519
    %3597 = vmatpush2.msra.mxu0 %v3518
    %3598 = vmatprep.mubr.f32.mxu0 %v3529
    %3599 = vmatmul.mubr.f32.gmra.mxu0 %v3482
    %v3600 = vpop.f32.mrf.mxu0
    %v3601 = vadd.f32 0.0, %v3600
    %v3602 = vpop.f32.mrf.mxu0
    %v3603 = vadd.f32 0.0, %v3602
    %3604 = vmatprep.mubr.f32.mxu0 %v3532
    %3605 = vmatmul.mubr.f32.gmra.mxu0 %v3484
    %v3606 = vpop.f32.mrf.mxu0
    %v3607 = vadd.f32 0.0, %v3606
    %v3608 = vpop.f32.mrf.mxu0
    %v3609 = vadd.f32 0.0, %v3608
    %3610 = vdwg.mxu0
    %v3611 = vmax.f32 %v3482, %v3601
    %v3612 = vmax.f32 %v3483, %v3603
    %v3613 = vmax.f32 %v3484, %v3607
    %v3614 = vmax.f32 %v3485, %v3609
    %3615 = vst [vmem:[#allocation2] sm:$0xff] %v3611
    %3616 = vst.msk [vmem:[#allocation2 + $0x8] sm:$0xff] %vm895, %v3612
    %3617 = vst [vmem:[#allocation2 + $0x10] sm:$0x3f] %v3613
    %3618 = vst.msk [vmem:[#allocation2 + $0x18] sm:$0x3f] %vm986, %v3614
    %v3619 = vld [vmem:[#allocation2] sm:$0xff]
    %v3620 = vld [vmem:[#allocation2 + $0x8] sm:$0xff]
    %v3621 = vld [vmem:[#allocation2 + $0x10] sm:$0x3]
    %v3622 = vld [vmem:[#allocation2 + $0x18] sm:$0x3]
    %v3623 = vld [vmem:[%s3] sm:$0xff]
    %v3624 = vld [vmem:[%s3 + $0x8] sm:$0xff]
    %v3625 = vld [vmem:[%s3 + $0x10] sm:$0xff]
    %v3626 = vld [vmem:[%s3 + $0x18] sm:$0xff]
    %v3627 = vld [vmem:[%s3 + $0x20] sm:$0xff]
    %v3628 = vld [vmem:[%s3 + $0x28] sm:$0xff]
    %v3629 = vld [vmem:[%s3 + $0x30] sm:$0xff]
    %v3630 = vld [vmem:[%s3 + $0x38] sm:$0xff]
    %v3631 = vld [vmem:[%s3 + $0x40] sm:$0xff]
    %v3632 = vld [vmem:[%s3 + $0x48] sm:$0xff]
    %v3633 = vld [vmem:[%s3 + $0x50] sm:$0xff]
    %v3634 = vld [vmem:[%s3 + $0x58] sm:$0xff]
    %v3635 = vld [vmem:[%s3 + $0x60] sm:$0xff]
    %v3636 = vld [vmem:[%s3 + $0x68] sm:$0xff]
    %v3637 = vld [vmem:[%s3 + $0x70] sm:$0xff]
    %v3638 = vld [vmem:[%s3 + $0x78] sm:$0xff]
    %v3639 = vld [vmem:[%s3 + $0x80] sm:$0xff]
    %v3640 = vld [vmem:[%s3 + $0x88] sm:$0xff]
    %v3641 = vld [vmem:[%s3 + $0x90] sm:$0xff]
    %v3642 = vld [vmem:[%s3 + $0x98] sm:$0xff]
    %v3643 = vld [vmem:[%s3 + $0xa0] sm:$0xff]
    %v3644 = vld [vmem:[%s3 + $0xa8] sm:$0xff]
    %v3645 = vld [vmem:[%s3 + $0xb0] sm:$0xff]
    %v3646 = vld [vmem:[%s3 + $0xb8] sm:$0xff]
    %v3647 = vld [vmem:[%s3 + $0xc0] sm:$0xff]
    %v3648 = vld [vmem:[%s3 + $0xc8] sm:$0xff]
    %v3649 = vld [vmem:[%s3 + $0xd0] sm:$0xff]
    %v3650 = vld [vmem:[%s3 + $0xd8] sm:$0xff]
    %v3651 = vld [vmem:[%s3 + $0xe0] sm:$0xff]
    %v3652 = vld [vmem:[%s3 + $0xe8] sm:$0xff]
    %v3653 = vld [vmem:[%s3 + $0xf0] sm:$0xff]
    %v3654 = vld [vmem:[%s3 + $0xf8] sm:$0xff]
    %v3655 = vld [vmem:[%s3 + $0x100] sm:$0xff]
    %v3656 = vld [vmem:[%s3 + $0x108] sm:$0xff]
    %v3657 = vld [vmem:[%s3 + $0x110] sm:$0xff]
    %v3658 = vld [vmem:[%s3 + $0x118] sm:$0xff]
    %v3659 = vld [vmem:[%s3 + $0x120] sm:$0xff]
    %v3660 = vld [vmem:[%s3 + $0x128] sm:$0xff]
    %v3661 = vld [vmem:[%s3 + $0x130] sm:$0xff]
    %v3662 = vld [vmem:[%s3 + $0x138] sm:$0xff]
    %v3663 = vld [vmem:[%s3 + $0x140] sm:$0xff]
    %v3664 = vld [vmem:[%s3 + $0x148] sm:$0xff]
    %v3665 = vld [vmem:[#allocation2] sm:$0xfe]
    %v3666 = vld [vmem:[#allocation2 + $0x8] sm:$0xfe]
    %v3667 = vld [vmem:[#allocation2 + $0x10] sm:$0x7]
    %v3668 = vld [vmem:[#allocation2 + $0x18] sm:$0x7]
    %v3669 = vld [vmem:[%s1038] sm:$0xff]
    %v3670 = vld [vmem:[%s1038 + $0x8] sm:$0xff]
    %v3671 = vld [vmem:[%s1038 + $0x10] sm:$0xff]
    %v3672 = vld [vmem:[%s1038 + $0x18] sm:$0xff]
    %v3673 = vld [vmem:[%s1038 + $0x20] sm:$0xff]
    %v3674 = vld [vmem:[%s1038 + $0x28] sm:$0xff]
    %v3675 = vld [vmem:[%s1038 + $0x30] sm:$0xff]
    %v3676 = vld [vmem:[%s1038 + $0x38] sm:$0xff]
    %v3677 = vld [vmem:[%s1038 + $0x40] sm:$0xff]
    %v3678 = vld [vmem:[%s1038 + $0x48] sm:$0xff]
    %v3679 = vld [vmem:[%s1038 + $0x50] sm:$0xff]
    %v3680 = vld [vmem:[%s1038 + $0x58] sm:$0xff]
    %v3681 = vld [vmem:[%s1038 + $0x60] sm:$0xff]
    %v3682 = vld [vmem:[%s1038 + $0x68] sm:$0xff]
    %v3683 = vld [vmem:[%s1038 + $0x70] sm:$0xff]
    %v3684 = vld [vmem:[%s1038 + $0x78] sm:$0xff]
    %v3685 = vld [vmem:[%s1038 + $0x80] sm:$0xff]
    %v3686 = vld [vmem:[%s1038 + $0x88] sm:$0xff]
    %v3687 = vld [vmem:[%s1038 + $0x90] sm:$0xff]
    %v3688 = vld [vmem:[%s1038 + $0x98] sm:$0xff]
    %v3689 = vld [vmem:[%s1038 + $0xa0] sm:$0xff]
    %v3690 = vld [vmem:[%s1038 + $0xa8] sm:$0xff]
    %v3691 = vld [vmem:[%s1038 + $0xb0] sm:$0xff]
    %v3692 = vld [vmem:[%s1038 + $0xb8] sm:$0xff]
    %v3693 = vld [vmem:[%s1038 + $0xc0] sm:$0xff]
    %v3694 = vld [vmem:[%s1038 + $0xc8] sm:$0xff]
    %v3695 = vld [vmem:[%s1038 + $0xd0] sm:$0xff]
    %v3696 = vld [vmem:[%s1038 + $0xd8] sm:$0xff]
    %v3697 = vld [vmem:[%s1038 + $0xe0] sm:$0xff]
    %v3698 = vld [vmem:[%s1038 + $0xe8] sm:$0xff]
    %v3699 = vld [vmem:[%s1038 + $0xf0] sm:$0xff]
    %v3700 = vld [vmem:[%s1038 + $0xf8] sm:$0xff]
    %v3701 = vld [vmem:[%s1038 + $0x100] sm:$0xff]
    %v3702 = vld [vmem:[%s1038 + $0x108] sm:$0xff]
    %v3703 = vld [vmem:[%s1038 + $0x110] sm:$0xff]
    %v3704 = vld [vmem:[%s1038 + $0x118] sm:$0xff]
    %v3705 = vld [vmem:[%s1038 + $0x120] sm:$0xff]
    %v3706 = vld [vmem:[%s1038 + $0x128] sm:$0xff]
    %v3707 = vld [vmem:[%s1038 + $0x130] sm:$0xff]
    %v3708 = vld [vmem:[%s1038 + $0x138] sm:$0xff]
    %v3709 = vld [vmem:[%s1038 + $0x140] sm:$0xff]
    %v3710 = vld [vmem:[%s1038 + $0x148] sm:$0xff]
    %v3715 = vrot.slane %v3665, 1
    %v3716 = vrot.slane %v3667, 1
    %v3717 = vsel %vm1085, %v3715, %v3716
    %v3718 = vrot.slane %v3666, 1
    %v3719 = vrot.slane %v3668, 1
    %v3720 = vsel %vm1085, %v3718, %v3719
    %v3723 = vsel %vm895, %v3720, 0
    %v3725 = vsel %vm895, %v3719, 0
    %3727 = vmatprep.subr.mxu0 %v3700
    %3728 = vmatpush1.msra.mxu0 %v3699
    %3729 = vmatprep.subr.mxu0 %v3698
    %3730 = vmatpush1.msra.mxu0 %v3697
    %3731 = vmatprep.subr.mxu0 %v3696
    %3732 = vmatpush1.msra.mxu0 %v3695
    %3733 = vmatprep.subr.mxu0 %v3694
    %3734 = vmatpush1.msra.mxu0 %v3693
    %3735 = vmatprep.subr.mxu0 %v3692
    %3736 = vmatpush1.msra.mxu0 %v3691
    %3737 = vmatprep.subr.mxu0 %v3690
    %3738 = vmatpush1.msra.mxu0 %v3689
    %3739 = vmatprep.subr.mxu0 %v3688
    %3740 = vmatpush1.msra.mxu0 %v3687
    %3741 = vmatprep.subr.mxu0 %v3686
    %3742 = vmatpush1.msra.mxu0 %v3685
    %3743 = vmatprep.subr.mxu0 %v3684
    %3744 = vmatpush1.msra.mxu0 %v3683
    %3745 = vmatprep.subr.mxu0 %v3682
    %3746 = vmatpush1.msra.mxu0 %v3681
    %3747 = vmatprep.subr.mxu0 %v3680
    %3748 = vmatpush1.msra.mxu0 %v3679
    %3749 = vmatprep.subr.mxu0 %v3678
    %3750 = vmatpush1.msra.mxu0 %v3677
    %3751 = vmatprep.subr.mxu0 %v3676
    %3752 = vmatpush1.msra.mxu0 %v3675
    %3753 = vmatprep.subr.mxu0 %v3674
    %3754 = vmatpush1.msra.mxu0 %v3673
    %3755 = vmatprep.subr.mxu0 %v3672
    %3756 = vmatpush1.msra.mxu0 %v3671
    %3757 = vmatprep.subr.mxu0 %v3670
    %3758 = vmatpush1.msra.mxu0 %v3669
    %3759 = vmatprep.subr.mxu0 0.0
    %3760 = vmatpush2.msra.mxu0 0.0
    %3761 = vmatprep.subr.mxu0 0.0
    %3762 = vmatpush2.msra.mxu0 0.0
    %3763 = vmatprep.subr.mxu0 0.0
    %3764 = vmatpush2.msra.mxu0 0.0
    %3765 = vmatprep.subr.mxu0 0.0
    %3766 = vmatpush2.msra.mxu0 0.0
    %3767 = vmatprep.subr.mxu0 0.0
    %3768 = vmatpush2.msra.mxu0 0.0
    %3769 = vmatprep.subr.mxu0 0.0
    %3770 = vmatpush2.msra.mxu0 0.0
    %3771 = vmatprep.subr.mxu0 0.0
    %3772 = vmatpush2.msra.mxu0 0.0
    %3773 = vmatprep.subr.mxu0 0.0
    %3774 = vmatpush2.msra.mxu0 0.0
    %3775 = vmatprep.subr.mxu0 0.0
    %3776 = vmatpush2.msra.mxu0 0.0
    %3777 = vmatprep.subr.mxu0 0.0
    %3778 = vmatpush2.msra.mxu0 0.0
    %3779 = vmatprep.subr.mxu0 0.0
    %3780 = vmatpush2.msra.mxu0 0.0
    %3781 = vmatprep.subr.mxu0 %v3710
    %3782 = vmatpush2.msra.mxu0 %v3709
    %3783 = vmatprep.subr.mxu0 %v3708
    %3784 = vmatpush2.msra.mxu0 %v3707
    %3785 = vmatprep.subr.mxu0 %v3706
    %3786 = vmatpush2.msra.mxu0 %v3705
    %3787 = vmatprep.subr.mxu0 %v3704
    %3788 = vmatpush2.msra.mxu0 %v3703
    %3789 = vmatprep.subr.mxu0 %v3702
    %3790 = vmatpush2.msra.mxu0 %v3701
    %3791 = vmatprep.mubr.f32.mxu0 %v3723
    %3792 = vmatmul.mubr.f32.gmra.mxu0 %v3717
    %v3793 = vpop.f32.mrf.mxu0
    %v3794 = vadd.f32 0.0, %v3793
    %v3795 = vpop.f32.mrf.mxu0
    %v3796 = vadd.f32 0.0, %v3795
    %3797 = vmatprep.mubr.f32.mxu0 %v3725
    %3798 = vmatmul.mubr.f32.gmra.mxu0 %v3716
    %v3799 = vpop.f32.mrf.mxu0
    %v3800 = vadd.f32 0.0, %v3799
    %v3801 = vpop.f32.mrf.mxu0
    %v3802 = vadd.f32 0.0, %v3801
    %3803 = vdwg.mxu0
    %v3805 = vsel %vm895, %v3620, 0
    %v3808 = vsel %vm895, %v3622, 0
    %3810 = vmatprep.subr.mxu0 %v3654
    %3811 = vmatpush1.msra.mxu0 %v3653
    %3812 = vmatprep.subr.mxu0 %v3652
    %3813 = vmatpush1.msra.mxu0 %v3651
    %3814 = vmatprep.subr.mxu0 %v3650
    %3815 = vmatpush1.msra.mxu0 %v3649
    %3816 = vmatprep.subr.mxu0 %v3648
    %3817 = vmatpush1.msra.mxu0 %v3647
    %3818 = vmatprep.subr.mxu0 %v3646
    %3819 = vmatpush1.msra.mxu0 %v3645
    %3820 = vmatprep.subr.mxu0 %v3644
    %3821 = vmatpush1.msra.mxu0 %v3643
    %3822 = vmatprep.subr.mxu0 %v3642
    %3823 = vmatpush1.msra.mxu0 %v3641
    %3824 = vmatprep.subr.mxu0 %v3640
    %3825 = vmatpush1.msra.mxu0 %v3639
    %3826 = vmatprep.subr.mxu0 %v3638
    %3827 = vmatpush1.msra.mxu0 %v3637
    %3828 = vmatprep.subr.mxu0 %v3636
    %3829 = vmatpush1.msra.mxu0 %v3635
    %3830 = vmatprep.subr.mxu0 %v3634
    %3831 = vmatpush1.msra.mxu0 %v3633
    %3832 = vmatprep.subr.mxu0 %v3632
    %3833 = vmatpush1.msra.mxu0 %v3631
    %3834 = vmatprep.subr.mxu0 %v3630
    %3835 = vmatpush1.msra.mxu0 %v3629
    %3836 = vmatprep.subr.mxu0 %v3628
    %3837 = vmatpush1.msra.mxu0 %v3627
    %3838 = vmatprep.subr.mxu0 %v3626
    %3839 = vmatpush1.msra.mxu0 %v3625
    %3840 = vmatprep.subr.mxu0 %v3624
    %3841 = vmatpush1.msra.mxu0 %v3623
    %3842 = vmatprep.subr.mxu0 0.0
    %3843 = vmatpush2.msra.mxu0 0.0
    %3844 = vmatprep.subr.mxu0 0.0
    %3845 = vmatpush2.msra.mxu0 0.0
    %3846 = vmatprep.subr.mxu0 0.0
    %3847 = vmatpush2.msra.mxu0 0.0
    %3848 = vmatprep.subr.mxu0 0.0
    %3849 = vmatpush2.msra.mxu0 0.0
    %3850 = vmatprep.subr.mxu0 0.0
    %3851 = vmatpush2.msra.mxu0 0.0
    %3852 = vmatprep.subr.mxu0 0.0
    %3853 = vmatpush2.msra.mxu0 0.0
    %3854 = vmatprep.subr.mxu0 0.0
    %3855 = vmatpush2.msra.mxu0 0.0
    %3856 = vmatprep.subr.mxu0 0.0
    %3857 = vmatpush2.msra.mxu0 0.0
    %3858 = vmatprep.subr.mxu0 0.0
    %3859 = vmatpush2.msra.mxu0 0.0
    %3860 = vmatprep.subr.mxu0 0.0
    %3861 = vmatpush2.msra.mxu0 0.0
    %3862 = vmatprep.subr.mxu0 0.0
    %3863 = vmatpush2.msra.mxu0 0.0
    %3864 = vmatprep.subr.mxu0 %v3664
    %3865 = vmatpush2.msra.mxu0 %v3663
    %3866 = vmatprep.subr.mxu0 %v3662
    %3867 = vmatpush2.msra.mxu0 %v3661
    %3868 = vmatprep.subr.mxu0 %v3660
    %3869 = vmatpush2.msra.mxu0 %v3659
    %3870 = vmatprep.subr.mxu0 %v3658
    %3871 = vmatpush2.msra.mxu0 %v3657
    %3872 = vmatprep.subr.mxu0 %v3656
    %3873 = vmatpush2.msra.mxu0 %v3655
    %3874 = vmatprep.mubr.f32.mxu0 %v3805
    %3875 = vmatmul.mubr.f32.gmra.mxu0 %v3619
    %v3876 = vpop.f32.mrf.mxu0
    %v3877 = vadd.f32 %v3794, %v3876
    %v3878 = vpop.f32.mrf.mxu0
    %v3879 = vadd.f32 %v3796, %v3878
    %3880 = vmatprep.mubr.f32.mxu0 %v3808
    %3881 = vmatmul.mubr.f32.gmra.mxu0 %v3621
    %v3882 = vpop.f32.mrf.mxu0
    %v3883 = vadd.f32 %v3800, %v3882
    %v3884 = vpop.f32.mrf.mxu0
    %v3885 = vadd.f32 %v3802, %v3884
    %3886 = vdwg.mxu0
    %v3887 = vld [vmem:[#allocation2] sm:$0xfc]
    %v3888 = vld [vmem:[#allocation2 + $0x8] sm:$0xfc]
    %v3889 = vld [vmem:[#allocation2 + $0x10] sm:$0xf]
    %v3890 = vld [vmem:[#allocation2 + $0x18] sm:$0xf]
    %v3891 = vld [vmem:[%s1262] sm:$0xff]
    %v3892 = vld [vmem:[%s1262 + $0x8] sm:$0xff]
    %v3893 = vld [vmem:[%s1262 + $0x10] sm:$0xff]
    %v3894 = vld [vmem:[%s1262 + $0x18] sm:$0xff]
    %v3895 = vld [vmem:[%s1262 + $0x20] sm:$0xff]
    %v3896 = vld [vmem:[%s1262 + $0x28] sm:$0xff]
    %v3897 = vld [vmem:[%s1262 + $0x30] sm:$0xff]
    %v3898 = vld [vmem:[%s1262 + $0x38] sm:$0xff]
    %v3899 = vld [vmem:[%s1262 + $0x40] sm:$0xff]
    %v3900 = vld [vmem:[%s1262 + $0x48] sm:$0xff]
    %v3901 = vld [vmem:[%s1262 + $0x50] sm:$0xff]
    %v3902 = vld [vmem:[%s1262 + $0x58] sm:$0xff]
    %v3903 = vld [vmem:[%s1262 + $0x60] sm:$0xff]
    %v3904 = vld [vmem:[%s1262 + $0x68] sm:$0xff]
    %v3905 = vld [vmem:[%s1262 + $0x70] sm:$0xff]
    %v3906 = vld [vmem:[%s1262 + $0x78] sm:$0xff]
    %v3907 = vld [vmem:[%s1262 + $0x80] sm:$0xff]
    %v3908 = vld [vmem:[%s1262 + $0x88] sm:$0xff]
    %v3909 = vld [vmem:[%s1262 + $0x90] sm:$0xff]
    %v3910 = vld [vmem:[%s1262 + $0x98] sm:$0xff]
    %v3911 = vld [vmem:[%s1262 + $0xa0] sm:$0xff]
    %v3912 = vld [vmem:[%s1262 + $0xa8] sm:$0xff]
    %v3913 = vld [vmem:[%s1262 + $0xb0] sm:$0xff]
    %v3914 = vld [vmem:[%s1262 + $0xb8] sm:$0xff]
    %v3915 = vld [vmem:[%s1262 + $0xc0] sm:$0xff]
    %v3916 = vld [vmem:[%s1262 + $0xc8] sm:$0xff]
    %v3917 = vld [vmem:[%s1262 + $0xd0] sm:$0xff]
    %v3918 = vld [vmem:[%s1262 + $0xd8] sm:$0xff]
    %v3919 = vld [vmem:[%s1262 + $0xe0] sm:$0xff]
    %v3920 = vld [vmem:[%s1262 + $0xe8] sm:$0xff]
    %v3921 = vld [vmem:[%s1262 + $0xf0] sm:$0xff]
    %v3922 = vld [vmem:[%s1262 + $0xf8] sm:$0xff]
    %v3923 = vld [vmem:[%s1262 + $0x100] sm:$0xff]
    %v3924 = vld [vmem:[%s1262 + $0x108] sm:$0xff]
    %v3925 = vld [vmem:[%s1262 + $0x110] sm:$0xff]
    %v3926 = vld [vmem:[%s1262 + $0x118] sm:$0xff]
    %v3927 = vld [vmem:[%s1262 + $0x120] sm:$0xff]
    %v3928 = vld [vmem:[%s1262 + $0x128] sm:$0xff]
    %v3929 = vld [vmem:[%s1262 + $0x130] sm:$0xff]
    %v3930 = vld [vmem:[%s1262 + $0x138] sm:$0xff]
    %v3931 = vld [vmem:[%s1262 + $0x140] sm:$0xff]
    %v3932 = vld [vmem:[%s1262 + $0x148] sm:$0xff]
    %v3937 = vrot.slane %v3887, 2
    %v3938 = vrot.slane %v3889, 2
    %v3939 = vsel %vm1309, %v3937, %v3938
    %v3940 = vrot.slane %v3888, 2
    %v3941 = vrot.slane %v3890, 2
    %v3942 = vsel %vm1309, %v3940, %v3941
    %v3945 = vsel %vm895, %v3942, 0
    %v3947 = vsel %vm895, %v3941, 0
    %3949 = vmatprep.subr.mxu0 %v3922
    %3950 = vmatpush1.msra.mxu0 %v3921
    %3951 = vmatprep.subr.mxu0 %v3920
    %3952 = vmatpush1.msra.mxu0 %v3919
    %3953 = vmatprep.subr.mxu0 %v3918
    %3954 = vmatpush1.msra.mxu0 %v3917
    %3955 = vmatprep.subr.mxu0 %v3916
    %3956 = vmatpush1.msra.mxu0 %v3915
    %3957 = vmatprep.subr.mxu0 %v3914
    %3958 = vmatpush1.msra.mxu0 %v3913
    %3959 = vmatprep.subr.mxu0 %v3912
    %3960 = vmatpush1.msra.mxu0 %v3911
    %3961 = vmatprep.subr.mxu0 %v3910
    %3962 = vmatpush1.msra.mxu0 %v3909
    %3963 = vmatprep.subr.mxu0 %v3908
    %3964 = vmatpush1.msra.mxu0 %v3907
    %3965 = vmatprep.subr.mxu0 %v3906
    %3966 = vmatpush1.msra.mxu0 %v3905
    %3967 = vmatprep.subr.mxu0 %v3904
    %3968 = vmatpush1.msra.mxu0 %v3903
    %3969 = vmatprep.subr.mxu0 %v3902
    %3970 = vmatpush1.msra.mxu0 %v3901
    %3971 = vmatprep.subr.mxu0 %v3900
    %3972 = vmatpush1.msra.mxu0 %v3899
    %3973 = vmatprep.subr.mxu0 %v3898
    %3974 = vmatpush1.msra.mxu0 %v3897
    %3975 = vmatprep.subr.mxu0 %v3896
    %3976 = vmatpush1.msra.mxu0 %v3895
    %3977 = vmatprep.subr.mxu0 %v3894
    %3978 = vmatpush1.msra.mxu0 %v3893
    %3979 = vmatprep.subr.mxu0 %v3892
    %3980 = vmatpush1.msra.mxu0 %v3891
    %3981 = vmatprep.subr.mxu0 0.0
    %3982 = vmatpush2.msra.mxu0 0.0
    %3983 = vmatprep.subr.mxu0 0.0
    %3984 = vmatpush2.msra.mxu0 0.0
    %3985 = vmatprep.subr.mxu0 0.0
    %3986 = vmatpush2.msra.mxu0 0.0
    %3987 = vmatprep.subr.mxu0 0.0
    %3988 = vmatpush2.msra.mxu0 0.0
    %3989 = vmatprep.subr.mxu0 0.0
    %3990 = vmatpush2.msra.mxu0 0.0
    %3991 = vmatprep.subr.mxu0 0.0
    %3992 = vmatpush2.msra.mxu0 0.0
    %3993 = vmatprep.subr.mxu0 0.0
    %3994 = vmatpush2.msra.mxu0 0.0
    %3995 = vmatprep.subr.mxu0 0.0
    %3996 = vmatpush2.msra.mxu0 0.0
    %3997 = vmatprep.subr.mxu0 0.0
    %3998 = vmatpush2.msra.mxu0 0.0
    %3999 = vmatprep.subr.mxu0 0.0
    %4000 = vmatpush2.msra.mxu0 0.0
    %4001 = vmatprep.subr.mxu0 0.0
    %4002 = vmatpush2.msra.mxu0 0.0
    %4003 = vmatprep.subr.mxu0 %v3932
    %4004 = vmatpush2.msra.mxu0 %v3931
    %4005 = vmatprep.subr.mxu0 %v3930
    %4006 = vmatpush2.msra.mxu0 %v3929
    %4007 = vmatprep.subr.mxu0 %v3928
    %4008 = vmatpush2.msra.mxu0 %v3927
    %4009 = vmatprep.subr.mxu0 %v3926
    %4010 = vmatpush2.msra.mxu0 %v3925
    %4011 = vmatprep.subr.mxu0 %v3924
    %4012 = vmatpush2.msra.mxu0 %v3923
    %4013 = vmatprep.mubr.f32.mxu0 %v3945
    %4014 = vmatmul.mubr.f32.gmra.mxu0 %v3939
    %v4015 = vpop.f32.mrf.mxu0
    %v4016 = vadd.f32 0.0, %v4015
    %v4017 = vpop.f32.mrf.mxu0
    %v4018 = vadd.f32 0.0, %v4017
    %4019 = vmatprep.mubr.f32.mxu0 %v3947
    %4020 = vmatmul.mubr.f32.gmra.mxu0 %v3938
    %v4021 = vpop.f32.mrf.mxu0
    %v4022 = vadd.f32 0.0, %v4021
    %v4023 = vpop.f32.mrf.mxu0
    %v4024 = vadd.f32 0.0, %v4023
    %4025 = vdwg.mxu0
    %v4026 = vadd.f32 %v3877, %v4016
    %v4027 = vadd.f32 %v3879, %v4018
    %v4028 = vadd.f32 %v3883, %v4022
    %v4029 = vadd.f32 %v3885, %v4024
    %v4030 = vld [vmem:[#allocation2] sm:$0xf8]
    %v4031 = vld [vmem:[#allocation2 + $0x8] sm:$0xf8]
    %v4032 = vld [vmem:[#allocation2 + $0x10] sm:$0x1f]
    %v4033 = vld [vmem:[#allocation2 + $0x18] sm:$0x1f]
    %v4034 = vld [vmem:[%s1407] sm:$0xff]
    %v4035 = vld [vmem:[%s1407 + $0x8] sm:$0xff]
    %v4036 = vld [vmem:[%s1407 + $0x10] sm:$0xff]
    %v4037 = vld [vmem:[%s1407 + $0x18] sm:$0xff]
    %v4038 = vld [vmem:[%s1407 + $0x20] sm:$0xff]
    %v4039 = vld [vmem:[%s1407 + $0x28] sm:$0xff]
    %v4040 = vld [vmem:[%s1407 + $0x30] sm:$0xff]
    %v4041 = vld [vmem:[%s1407 + $0x38] sm:$0xff]
    %v4042 = vld [vmem:[%s1407 + $0x40] sm:$0xff]
    %v4043 = vld [vmem:[%s1407 + $0x48] sm:$0xff]
    %v4044 = vld [vmem:[%s1407 + $0x50] sm:$0xff]
    %v4045 = vld [vmem:[%s1407 + $0x58] sm:$0xff]
    %v4046 = vld [vmem:[%s1407 + $0x60] sm:$0xff]
    %v4047 = vld [vmem:[%s1407 + $0x68] sm:$0xff]
    %v4048 = vld [vmem:[%s1407 + $0x70] sm:$0xff]
    %v4049 = vld [vmem:[%s1407 + $0x78] sm:$0xff]
    %v4050 = vld [vmem:[%s1407 + $0x80] sm:$0xff]
    %v4051 = vld [vmem:[%s1407 + $0x88] sm:$0xff]
    %v4052 = vld [vmem:[%s1407 + $0x90] sm:$0xff]
    %v4053 = vld [vmem:[%s1407 + $0x98] sm:$0xff]
    %v4054 = vld [vmem:[%s1407 + $0xa0] sm:$0xff]
    %v4055 = vld [vmem:[%s1407 + $0xa8] sm:$0xff]
    %v4056 = vld [vmem:[%s1407 + $0xb0] sm:$0xff]
    %v4057 = vld [vmem:[%s1407 + $0xb8] sm:$0xff]
    %v4058 = vld [vmem:[%s1407 + $0xc0] sm:$0xff]
    %v4059 = vld [vmem:[%s1407 + $0xc8] sm:$0xff]
    %v4060 = vld [vmem:[%s1407 + $0xd0] sm:$0xff]
    %v4061 = vld [vmem:[%s1407 + $0xd8] sm:$0xff]
    %v4062 = vld [vmem:[%s1407 + $0xe0] sm:$0xff]
    %v4063 = vld [vmem:[%s1407 + $0xe8] sm:$0xff]
    %v4064 = vld [vmem:[%s1407 + $0xf0] sm:$0xff]
    %v4065 = vld [vmem:[%s1407 + $0xf8] sm:$0xff]
    %v4066 = vld [vmem:[%s1407 + $0x100] sm:$0xff]
    %v4067 = vld [vmem:[%s1407 + $0x108] sm:$0xff]
    %v4068 = vld [vmem:[%s1407 + $0x110] sm:$0xff]
    %v4069 = vld [vmem:[%s1407 + $0x118] sm:$0xff]
    %v4070 = vld [vmem:[%s1407 + $0x120] sm:$0xff]
    %v4071 = vld [vmem:[%s1407 + $0x128] sm:$0xff]
    %v4072 = vld [vmem:[%s1407 + $0x130] sm:$0xff]
    %v4073 = vld [vmem:[%s1407 + $0x138] sm:$0xff]
    %v4074 = vld [vmem:[%s1407 + $0x140] sm:$0xff]
    %v4075 = vld [vmem:[%s1407 + $0x148] sm:$0xff]
    %v4080 = vrot.slane %v4030, 3
    %v4081 = vrot.slane %v4032, 3
    %v4082 = vsel %vm1454, %v4080, %v4081
    %v4083 = vrot.slane %v4031, 3
    %v4084 = vrot.slane %v4033, 3
    %v4085 = vsel %vm1454, %v4083, %v4084
    %v4088 = vsel %vm895, %v4085, 0
    %v4090 = vsel %vm895, %v4084, 0
    %4092 = vmatprep.subr.mxu0 %v4065
    %4093 = vmatpush1.msra.mxu0 %v4064
    %4094 = vmatprep.subr.mxu0 %v4063
    %4095 = vmatpush1.msra.mxu0 %v4062
    %4096 = vmatprep.subr.mxu0 %v4061
    %4097 = vmatpush1.msra.mxu0 %v4060
    %4098 = vmatprep.subr.mxu0 %v4059
    %4099 = vmatpush1.msra.mxu0 %v4058
    %4100 = vmatprep.subr.mxu0 %v4057
    %4101 = vmatpush1.msra.mxu0 %v4056
    %4102 = vmatprep.subr.mxu0 %v4055
    %4103 = vmatpush1.msra.mxu0 %v4054
    %4104 = vmatprep.subr.mxu0 %v4053
    %4105 = vmatpush1.msra.mxu0 %v4052
    %4106 = vmatprep.subr.mxu0 %v4051
    %4107 = vmatpush1.msra.mxu0 %v4050
    %4108 = vmatprep.subr.mxu0 %v4049
    %4109 = vmatpush1.msra.mxu0 %v4048
    %4110 = vmatprep.subr.mxu0 %v4047
    %4111 = vmatpush1.msra.mxu0 %v4046
    %4112 = vmatprep.subr.mxu0 %v4045
    %4113 = vmatpush1.msra.mxu0 %v4044
    %4114 = vmatprep.subr.mxu0 %v4043
    %4115 = vmatpush1.msra.mxu0 %v4042
    %4116 = vmatprep.subr.mxu0 %v4041
    %4117 = vmatpush1.msra.mxu0 %v4040
    %4118 = vmatprep.subr.mxu0 %v4039
    %4119 = vmatpush1.msra.mxu0 %v4038
    %4120 = vmatprep.subr.mxu0 %v4037
    %4121 = vmatpush1.msra.mxu0 %v4036
    %4122 = vmatprep.subr.mxu0 %v4035
    %4123 = vmatpush1.msra.mxu0 %v4034
    %4124 = vmatprep.subr.mxu0 0.0
    %4125 = vmatpush2.msra.mxu0 0.0
    %4126 = vmatprep.subr.mxu0 0.0
    %4127 = vmatpush2.msra.mxu0 0.0
    %4128 = vmatprep.subr.mxu0 0.0
    %4129 = vmatpush2.msra.mxu0 0.0
    %4130 = vmatprep.subr.mxu0 0.0
    %4131 = vmatpush2.msra.mxu0 0.0
    %4132 = vmatprep.subr.mxu0 0.0
    %4133 = vmatpush2.msra.mxu0 0.0
    %4134 = vmatprep.subr.mxu0 0.0
    %4135 = vmatpush2.msra.mxu0 0.0
    %4136 = vmatprep.subr.mxu0 0.0
    %4137 = vmatpush2.msra.mxu0 0.0
    %4138 = vmatprep.subr.mxu0 0.0
    %4139 = vmatpush2.msra.mxu0 0.0
    %4140 = vmatprep.subr.mxu0 0.0
    %4141 = vmatpush2.msra.mxu0 0.0
    %4142 = vmatprep.subr.mxu0 0.0
    %4143 = vmatpush2.msra.mxu0 0.0
    %4144 = vmatprep.subr.mxu0 0.0
    %4145 = vmatpush2.msra.mxu0 0.0
    %4146 = vmatprep.subr.mxu0 %v4075
    %4147 = vmatpush2.msra.mxu0 %v4074
    %4148 = vmatprep.subr.mxu0 %v4073
    %4149 = vmatpush2.msra.mxu0 %v4072
    %4150 = vmatprep.subr.mxu0 %v4071
    %4151 = vmatpush2.msra.mxu0 %v4070
    %4152 = vmatprep.subr.mxu0 %v4069
    %4153 = vmatpush2.msra.mxu0 %v4068
    %4154 = vmatprep.subr.mxu0 %v4067
    %4155 = vmatpush2.msra.mxu0 %v4066
    %4156 = vmatprep.mubr.f32.mxu0 %v4088
    %4157 = vmatmul.mubr.f32.gmra.mxu0 %v4082
    %v4158 = vpop.f32.mrf.mxu0
    %v4159 = vadd.f32 0.0, %v4158
    %v4160 = vpop.f32.mrf.mxu0
    %v4161 = vadd.f32 0.0, %v4160
    %4162 = vmatprep.mubr.f32.mxu0 %v4090
    %4163 = vmatmul.mubr.f32.gmra.mxu0 %v4081
    %v4164 = vpop.f32.mrf.mxu0
    %v4165 = vadd.f32 0.0, %v4164
    %v4166 = vpop.f32.mrf.mxu0
    %v4167 = vadd.f32 0.0, %v4166
    %4168 = vdwg.mxu0
    %v4169 = vadd.f32 %v4026, %v4159
    %v4170 = vadd.f32 %v4027, %v4161
    %v4171 = vadd.f32 %v4028, %v4165
    %v4172 = vadd.f32 %v4029, %v4167
    %v4173 = vld [vmem:[#allocation2] sm:$0xf0]
    %v4174 = vld [vmem:[#allocation2 + $0x8] sm:$0xf0]
    %v4175 = vld [vmem:[#allocation2 + $0x10] sm:$0x3f]
    %v4176 = vld [vmem:[#allocation2 + $0x18] sm:$0x3f]
    %v4177 = vld [vmem:[%s1552] sm:$0xff]
    %v4178 = vld [vmem:[%s1552 + $0x8] sm:$0xff]
    %v4179 = vld [vmem:[%s1552 + $0x10] sm:$0xff]
    %v4180 = vld [vmem:[%s1552 + $0x18] sm:$0xff]
    %v4181 = vld [vmem:[%s1552 + $0x20] sm:$0xff]
    %v4182 = vld [vmem:[%s1552 + $0x28] sm:$0xff]
    %v4183 = vld [vmem:[%s1552 + $0x30] sm:$0xff]
    %v4184 = vld [vmem:[%s1552 + $0x38] sm:$0xff]
    %v4185 = vld [vmem:[%s1552 + $0x40] sm:$0xff]
    %v4186 = vld [vmem:[%s1552 + $0x48] sm:$0xff]
    %v4187 = vld [vmem:[%s1552 + $0x50] sm:$0xff]
    %v4188 = vld [vmem:[%s1552 + $0x58] sm:$0xff]
    %v4189 = vld [vmem:[%s1552 + $0x60] sm:$0xff]
    %v4190 = vld [vmem:[%s1552 + $0x68] sm:$0xff]
    %v4191 = vld [vmem:[%s1552 + $0x70] sm:$0xff]
    %v4192 = vld [vmem:[%s1552 + $0x78] sm:$0xff]
    %v4193 = vld [vmem:[%s1552 + $0x80] sm:$0xff]
    %v4194 = vld [vmem:[%s1552 + $0x88] sm:$0xff]
    %v4195 = vld [vmem:[%s1552 + $0x90] sm:$0xff]
    %v4196 = vld [vmem:[%s1552 + $0x98] sm:$0xff]
    %v4197 = vld [vmem:[%s1552 + $0xa0] sm:$0xff]
    %v4198 = vld [vmem:[%s1552 + $0xa8] sm:$0xff]
    %v4199 = vld [vmem:[%s1552 + $0xb0] sm:$0xff]
    %v4200 = vld [vmem:[%s1552 + $0xb8] sm:$0xff]
    %v4201 = vld [vmem:[%s1552 + $0xc0] sm:$0xff]
    %v4202 = vld [vmem:[%s1552 + $0xc8] sm:$0xff]
    %v4203 = vld [vmem:[%s1552 + $0xd0] sm:$0xff]
    %v4204 = vld [vmem:[%s1552 + $0xd8] sm:$0xff]
    %v4205 = vld [vmem:[%s1552 + $0xe0] sm:$0xff]
    %v4206 = vld [vmem:[%s1552 + $0xe8] sm:$0xff]
    %v4207 = vld [vmem:[%s1552 + $0xf0] sm:$0xff]
    %v4208 = vld [vmem:[%s1552 + $0xf8] sm:$0xff]
    %v4209 = vld [vmem:[%s1552 + $0x100] sm:$0xff]
    %v4210 = vld [vmem:[%s1552 + $0x108] sm:$0xff]
    %v4211 = vld [vmem:[%s1552 + $0x110] sm:$0xff]
    %v4212 = vld [vmem:[%s1552 + $0x118] sm:$0xff]
    %v4213 = vld [vmem:[%s1552 + $0x120] sm:$0xff]
    %v4214 = vld [vmem:[%s1552 + $0x128] sm:$0xff]
    %v4215 = vld [vmem:[%s1552 + $0x130] sm:$0xff]
    %v4216 = vld [vmem:[%s1552 + $0x138] sm:$0xff]
    %v4217 = vld [vmem:[%s1552 + $0x140] sm:$0xff]
    %v4218 = vld [vmem:[%s1552 + $0x148] sm:$0xff]
    %v4223 = vrot.slane %v4173, 4
    %v4224 = vrot.slane %v4175, 4
    %v4225 = vsel %vm680, %v4223, %v4224
    %v4226 = vrot.slane %v4174, 4
    %v4227 = vrot.slane %v4176, 4
    %v4228 = vsel %vm680, %v4226, %v4227
    %v4231 = vsel %vm895, %v4228, 0
    %v4233 = vsel %vm895, %v4227, 0
    %4235 = vmatprep.subr.mxu0 %v4208
    %4236 = vmatpush1.msra.mxu0 %v4207
    %4237 = vmatprep.subr.mxu0 %v4206
    %4238 = vmatpush1.msra.mxu0 %v4205
    %4239 = vmatprep.subr.mxu0 %v4204
    %4240 = vmatpush1.msra.mxu0 %v4203
    %4241 = vmatprep.subr.mxu0 %v4202
    %4242 = vmatpush1.msra.mxu0 %v4201
    %4243 = vmatprep.subr.mxu0 %v4200
    %4244 = vmatpush1.msra.mxu0 %v4199
    %4245 = vmatprep.subr.mxu0 %v4198
    %4246 = vmatpush1.msra.mxu0 %v4197
    %4247 = vmatprep.subr.mxu0 %v4196
    %4248 = vmatpush1.msra.mxu0 %v4195
    %4249 = vmatprep.subr.mxu0 %v4194
    %4250 = vmatpush1.msra.mxu0 %v4193
    %4251 = vmatprep.subr.mxu0 %v4192
    %4252 = vmatpush1.msra.mxu0 %v4191
    %4253 = vmatprep.subr.mxu0 %v4190
    %4254 = vmatpush1.msra.mxu0 %v4189
    %4255 = vmatprep.subr.mxu0 %v4188
    %4256 = vmatpush1.msra.mxu0 %v4187
    %4257 = vmatprep.subr.mxu0 %v4186
    %4258 = vmatpush1.msra.mxu0 %v4185
    %4259 = vmatprep.subr.mxu0 %v4184
    %4260 = vmatpush1.msra.mxu0 %v4183
    %4261 = vmatprep.subr.mxu0 %v4182
    %4262 = vmatpush1.msra.mxu0 %v4181
    %4263 = vmatprep.subr.mxu0 %v4180
    %4264 = vmatpush1.msra.mxu0 %v4179
    %4265 = vmatprep.subr.mxu0 %v4178
    %4266 = vmatpush1.msra.mxu0 %v4177
    %4267 = vmatprep.subr.mxu0 0.0
    %4268 = vmatpush2.msra.mxu0 0.0
    %4269 = vmatprep.subr.mxu0 0.0
    %4270 = vmatpush2.msra.mxu0 0.0
    %4271 = vmatprep.subr.mxu0 0.0
    %4272 = vmatpush2.msra.mxu0 0.0
    %4273 = vmatprep.subr.mxu0 0.0
    %4274 = vmatpush2.msra.mxu0 0.0
    %4275 = vmatprep.subr.mxu0 0.0
    %4276 = vmatpush2.msra.mxu0 0.0
    %4277 = vmatprep.subr.mxu0 0.0
    %4278 = vmatpush2.msra.mxu0 0.0
    %4279 = vmatprep.subr.mxu0 0.0
    %4280 = vmatpush2.msra.mxu0 0.0
    %4281 = vmatprep.subr.mxu0 0.0
    %4282 = vmatpush2.msra.mxu0 0.0
    %4283 = vmatprep.subr.mxu0 0.0
    %4284 = vmatpush2.msra.mxu0 0.0
    %4285 = vmatprep.subr.mxu0 0.0
    %4286 = vmatpush2.msra.mxu0 0.0
    %4287 = vmatprep.subr.mxu0 0.0
    %4288 = vmatpush2.msra.mxu0 0.0
    %4289 = vmatprep.subr.mxu0 %v4218
    %4290 = vmatpush2.msra.mxu0 %v4217
    %4291 = vmatprep.subr.mxu0 %v4216
    %4292 = vmatpush2.msra.mxu0 %v4215
    %4293 = vmatprep.subr.mxu0 %v4214
    %4294 = vmatpush2.msra.mxu0 %v4213
    %4295 = vmatprep.subr.mxu0 %v4212
    %4296 = vmatpush2.msra.mxu0 %v4211
    %4297 = vmatprep.subr.mxu0 %v4210
    %4298 = vmatpush2.msra.mxu0 %v4209
    %4299 = vmatprep.mubr.f32.mxu0 %v4231
    %4300 = vmatmul.mubr.f32.gmra.mxu0 %v4225
    %v4301 = vpop.f32.mrf.mxu0
    %v4302 = vadd.f32 0.0, %v4301
    %v4303 = vpop.f32.mrf.mxu0
    %v4304 = vadd.f32 0.0, %v4303
    %4305 = vmatprep.mubr.f32.mxu0 %v4233
    %4306 = vmatmul.mubr.f32.gmra.mxu0 %v4224
    %v4307 = vpop.f32.mrf.mxu0
    %v4308 = vadd.f32 0.0, %v4307
    %v4309 = vpop.f32.mrf.mxu0
    %v4310 = vadd.f32 0.0, %v4309
    %4311 = vdwg.mxu0
    %v4312 = vadd.f32 %v4169, %v4302
    %v4313 = vadd.f32 %v4170, %v4304
    %v4314 = vadd.f32 %v4171, %v4308
    %v4315 = vadd.f32 %v4172, %v4310
    %v4316 = vld [vmem:[%s4] sm:$0x3]
    %v4318 = vlaneseq
    %v4319 = vshrl.u32 %v4318, 7
    %v4320 = vsub.s32 0, %v4319
    %v4321 = vrot.slane %v4316, %v4320
    %v4322 = vlaneseq
    %v4323 = vshrl.u32 %v4322, 7
    %v4324 = vsub.s32 1, %v4323
    %v4325 = vrot.slane %v4316, %v4324
    %v4328 = vadd.f32 %v4312, %v4321
    %v4329 = vadd.f32 %v4313, %v4325
    %v4330 = vadd.f32 %v4314, %v4321
    %v4331 = vadd.f32 %v4315, %v4325
    %v4332 = vld [vmem:[%s14] sm:$0x1f]
    %v4334 = vsel %vm1709, %v4332, 0
    %v4337 = vsel %vm1713, %v4330, 0
    %v4340 = vsel %vm1713, %v4331, 0
    %4342 = vmatprep.subr.mxu0 0.0
    %4343 = vmatpush1.msra.mxu0 0.0
    %4344 = vmatprep.subr.mxu0 0.0
    %4345 = vmatpush1.msra.mxu0 0.0
    %4346 = vmatprep.subr.mxu0 0.0
    %4347 = vmatpush1.msra.mxu0 0.0
    %4348 = vmatprep.subr.mxu0 0.0
    %4349 = vmatpush1.msra.mxu0 0.0
    %4350 = vmatprep.subr.mxu0 0.0
    %4351 = vmatpush1.msra.mxu0 0.0
    %4352 = vmatprep.subr.mxu0 0.0
    %4353 = vmatpush1.msra.mxu0 0.0
    %4354 = vmatprep.subr.mxu0 0.0
    %4355 = vmatpush1.msra.mxu0 0.0
    %4356 = vmatprep.subr.mxu0 0.0
    %4357 = vmatpush1.msra.mxu0 0.0
    %4358 = vmatprep.subr.mxu0 0.0
    %4359 = vmatpush1.msra.mxu0 0.0
    %4360 = vmatprep.subr.mxu0 0.0
    %4361 = vmatpush1.msra.mxu0 0.0
    %4362 = vmatprep.subr.mxu0 0.0
    %4363 = vmatpush1.msra.mxu0 0.0
    %4364 = vmatprep.subr.mxu0 0.0
    %4365 = vmatpush1.msra.mxu0 0.0
    %4366 = vmatprep.subr.mxu0 0.0
    %4367 = vmatpush1.msra.mxu0 0.0
    %4368 = vmatprep.subr.mxu0 0.0
    %4369 = vmatpush1.msra.mxu0 0.0
    %4370 = vmatprep.subr.mxu0 %v4340
    %4371 = vmatpush1.msra.mxu0 %v4337
    %4372 = vmatprep.subr.mxu0 %v4329
    %4373 = vmatpush1.msra.mxu0 %v4328
    %4374 = vmatprep.subr.mxu0 0.0
    %4375 = vmatpush2.msra.mxu0 0.0
    %4376 = vmatprep.subr.mxu0 0.0
    %4377 = vmatpush2.msra.mxu0 0.0
    %4378 = vmatprep.subr.mxu0 0.0
    %4379 = vmatpush2.msra.mxu0 0.0
    %4380 = vmatprep.subr.mxu0 0.0
    %4381 = vmatpush2.msra.mxu0 0.0
    %4382 = vmatprep.subr.mxu0 0.0
    %4383 = vmatpush2.msra.mxu0 0.0
    %4384 = vmatprep.subr.mxu0 0.0
    %4385 = vmatpush2.msra.mxu0 0.0
    %4386 = vmatprep.subr.mxu0 0.0
    %4387 = vmatpush2.msra.mxu0 0.0
    %4388 = vmatprep.subr.mxu0 0.0
    %4389 = vmatpush2.msra.mxu0 0.0
    %4390 = vmatprep.subr.mxu0 0.0
    %4391 = vmatpush2.msra.mxu0 0.0
    %4392 = vmatprep.subr.mxu0 0.0
    %4393 = vmatpush2.msra.mxu0 0.0
    %4394 = vmatprep.subr.mxu0 0.0
    %4395 = vmatpush2.msra.mxu0 0.0
    %4396 = vmatprep.subr.mxu0 0.0
    %4397 = vmatpush2.msra.mxu0 0.0
    %4398 = vmatprep.subr.mxu0 0.0
    %4399 = vmatpush2.msra.mxu0 0.0
    %4400 = vmatprep.subr.mxu0 0.0
    %4401 = vmatpush2.msra.mxu0 0.0
    %4402 = vmatprep.subr.mxu0 0.0
    %4403 = vmatpush2.msra.mxu0 0.0
    %4404 = vmatprep.subr.mxu0 0.0
    %4405 = vmatpush2.msra.mxu0 0.0
    %4406 = vmatprep.mubr.f32.mxu0 0.0
    %4407 = vmatmul.mubr.f32.gmra.mxu0 %v4334
    %v4408 = vpop.f32.mrf.mxu0
    %v4409 = vadd.f32 0.0, %v4408
    %v4410 = vpop.f32.mrf.mxu0
    %v4411 = vadd.f32 0.0, %v4410
    %4412 = vdwg.mxu0
    %v4413 = vld [vmem:[%s15] sm:$0x1f]
    %v4415 = vsel %vm1709, %v4413, 0
    %4417 = vmatprep.subr.mxu0 0.0
    %4418 = vmatpush1.msra.mxu0 0.0
    %4419 = vmatprep.subr.mxu0 0.0
    %4420 = vmatpush1.msra.mxu0 0.0
    %4421 = vmatprep.subr.mxu0 0.0
    %4422 = vmatpush1.msra.mxu0 0.0
    %4423 = vmatprep.subr.mxu0 0.0
    %4424 = vmatpush1.msra.mxu0 0.0
    %4425 = vmatprep.subr.mxu0 0.0
    %4426 = vmatpush1.msra.mxu0 0.0
    %4427 = vmatprep.subr.mxu0 0.0
    %4428 = vmatpush1.msra.mxu0 0.0
    %4429 = vmatprep.subr.mxu0 0.0
    %4430 = vmatpush1.msra.mxu0 0.0
    %4431 = vmatprep.subr.mxu0 0.0
    %4432 = vmatpush1.msra.mxu0 0.0
    %4433 = vmatprep.subr.mxu0 0.0
    %4434 = vmatpush1.msra.mxu0 0.0
    %4435 = vmatprep.subr.mxu0 0.0
    %4436 = vmatpush1.msra.mxu0 0.0
    %4437 = vmatprep.subr.mxu0 0.0
    %4438 = vmatpush1.msra.mxu0 0.0
    %4439 = vmatprep.subr.mxu0 0.0
    %4440 = vmatpush1.msra.mxu0 0.0
    %4441 = vmatprep.subr.mxu0 0.0
    %4442 = vmatpush1.msra.mxu0 0.0
    %4443 = vmatprep.subr.mxu0 0.0
    %4444 = vmatpush1.msra.mxu0 0.0
    %4445 = vmatprep.subr.mxu0 %v4340
    %4446 = vmatpush1.msra.mxu0 %v4337
    %4447 = vmatprep.subr.mxu0 %v4329
    %4448 = vmatpush1.msra.mxu0 %v4328
    %4449 = vmatprep.subr.mxu0 0.0
    %4450 = vmatpush2.msra.mxu0 0.0
    %4451 = vmatprep.subr.mxu0 0.0
    %4452 = vmatpush2.msra.mxu0 0.0
    %4453 = vmatprep.subr.mxu0 0.0
    %4454 = vmatpush2.msra.mxu0 0.0
    %4455 = vmatprep.subr.mxu0 0.0
    %4456 = vmatpush2.msra.mxu0 0.0
    %4457 = vmatprep.subr.mxu0 0.0
    %4458 = vmatpush2.msra.mxu0 0.0
    %4459 = vmatprep.subr.mxu0 0.0
    %4460 = vmatpush2.msra.mxu0 0.0
    %4461 = vmatprep.subr.mxu0 0.0
    %4462 = vmatpush2.msra.mxu0 0.0
    %4463 = vmatprep.subr.mxu0 0.0
    %4464 = vmatpush2.msra.mxu0 0.0
    %4465 = vmatprep.subr.mxu0 0.0
    %4466 = vmatpush2.msra.mxu0 0.0
    %4467 = vmatprep.subr.mxu0 0.0
    %4468 = vmatpush2.msra.mxu0 0.0
    %4469 = vmatprep.subr.mxu0 0.0
    %4470 = vmatpush2.msra.mxu0 0.0
    %4471 = vmatprep.subr.mxu0 0.0
    %4472 = vmatpush2.msra.mxu0 0.0
    %4473 = vmatprep.subr.mxu0 0.0
    %4474 = vmatpush2.msra.mxu0 0.0
    %4475 = vmatprep.subr.mxu0 0.0
    %4476 = vmatpush2.msra.mxu0 0.0
    %4477 = vmatprep.subr.mxu0 0.0
    %4478 = vmatpush2.msra.mxu0 0.0
    %4479 = vmatprep.subr.mxu0 0.0
    %4480 = vmatpush2.msra.mxu0 0.0
    %4481 = vmatprep.mubr.f32.mxu0 0.0
    %4482 = vmatmul.mubr.f32.gmra.mxu0 %v4415
    %v4483 = vpop.f32.mrf.mxu0
    %v4484 = vadd.f32 0.0, %v4483
    %v4485 = vpop.f32.mrf.mxu0
    %v4486 = vadd.f32 0.0, %v4485
    %4487 = vdwg.mxu0
    %v4488 = vmax.f32 %v4409, %v4484
    %v4489 = vmax.f32 %v4411, %v4486
    %v4490 = vld [vmem:[%s16] sm:$0xff]
    %v4491 = vld [vmem:[%s16 + $0x8] sm:$0xff]
    %v4492 = vld [vmem:[%s16 + $0x10] sm:$0xff]
    %v4493 = vld [vmem:[%s16 + $0x18] sm:$0xff]
    %v4494 = vld [vmem:[%s16 + $0x20] sm:$0xff]
    %v4495 = vld [vmem:[%s16 + $0x28] sm:$0xff]
    %v4496 = vld [vmem:[%s16 + $0x30] sm:$0xff]
    %v4497 = vld [vmem:[%s16 + $0x38] sm:$0xff]
    %v4498 = vld [vmem:[%s16 + $0x40] sm:$0xff]
    %v4499 = vld [vmem:[%s16 + $0x48] sm:$0xff]
    %v4500 = vld [vmem:[%s16 + $0x50] sm:$0xff]
    %v4501 = vld [vmem:[%s16 + $0x58] sm:$0xff]
    %v4502 = vld [vmem:[%s16 + $0x60] sm:$0xff]
    %v4503 = vld [vmem:[%s16 + $0x68] sm:$0xff]
    %v4504 = vld [vmem:[%s16 + $0x70] sm:$0xff]
    %v4505 = vld [vmem:[%s16 + $0x78] sm:$0xff]
    %v4506 = vld [vmem:[%s16 + $0x80] sm:$0xff]
    %v4507 = vld [vmem:[%s16 + $0x88] sm:$0xff]
    %v4508 = vld [vmem:[%s16 + $0x90] sm:$0xff]
    %v4509 = vld [vmem:[%s16 + $0x98] sm:$0xff]
    %v4510 = vld [vmem:[%s16 + $0xa0] sm:$0xff]
    %v4511 = vld [vmem:[%s16 + $0xa8] sm:$0xff]
    %v4512 = vld [vmem:[%s16 + $0xb0] sm:$0xff]
    %v4513 = vld [vmem:[%s16 + $0xb8] sm:$0xff]
    %v4514 = vld [vmem:[%s16 + $0xc0] sm:$0xff]
    %v4515 = vld [vmem:[%s16 + $0xc8] sm:$0xff]
    %v4516 = vld [vmem:[%s16 + $0xd0] sm:$0xff]
    %v4517 = vld [vmem:[%s16 + $0xd8] sm:$0xff]
    %v4518 = vld [vmem:[%s16 + $0xe0] sm:$0xff]
    %v4519 = vld [vmem:[%s16 + $0xe8] sm:$0xff]
    %v4520 = vld [vmem:[%s16 + $0xf0] sm:$0xff]
    %v4521 = vld [vmem:[%s16 + $0xf8] sm:$0xff]
    %v4522 = vld [vmem:[%s16 + $0x100] sm:$0xff]
    %v4523 = vld [vmem:[%s16 + $0x108] sm:$0xff]
    %v4524 = vld [vmem:[%s16 + $0x110] sm:$0xff]
    %v4525 = vld [vmem:[%s16 + $0x118] sm:$0xff]
    %v4526 = vld [vmem:[%s16 + $0x120] sm:$0xff]
    %v4527 = vld [vmem:[%s16 + $0x128] sm:$0xff]
    %v4528 = vld [vmem:[%s16 + $0x130] sm:$0xff]
    %v4529 = vld [vmem:[%s16 + $0x138] sm:$0xff]
    %v4531 = vsel %vm82, %v4489, 0
    %4533 = vmatprep.subr.mxu0 %v4521
    %4534 = vmatpush1.msra.mxu0 %v4520
    %4535 = vmatprep.subr.mxu0 %v4519
    %4536 = vmatpush1.msra.mxu0 %v4518
    %4537 = vmatprep.subr.mxu0 %v4517
    %4538 = vmatpush1.msra.mxu0 %v4516
    %4539 = vmatprep.subr.mxu0 %v4515
    %4540 = vmatpush1.msra.mxu0 %v4514
    %4541 = vmatprep.subr.mxu0 %v4513
    %4542 = vmatpush1.msra.mxu0 %v4512
    %4543 = vmatprep.subr.mxu0 %v4511
    %4544 = vmatpush1.msra.mxu0 %v4510
    %4545 = vmatprep.subr.mxu0 %v4509
    %4546 = vmatpush1.msra.mxu0 %v4508
    %4547 = vmatprep.subr.mxu0 %v4507
    %4548 = vmatpush1.msra.mxu0 %v4506
    %4549 = vmatprep.subr.mxu0 %v4505
    %4550 = vmatpush1.msra.mxu0 %v4504
    %4551 = vmatprep.subr.mxu0 %v4503
    %4552 = vmatpush1.msra.mxu0 %v4502
    %4553 = vmatprep.subr.mxu0 %v4501
    %4554 = vmatpush1.msra.mxu0 %v4500
    %4555 = vmatprep.subr.mxu0 %v4499
    %4556 = vmatpush1.msra.mxu0 %v4498
    %4557 = vmatprep.subr.mxu0 %v4497
    %4558 = vmatpush1.msra.mxu0 %v4496
    %4559 = vmatprep.subr.mxu0 %v4495
    %4560 = vmatpush1.msra.mxu0 %v4494
    %4561 = vmatprep.subr.mxu0 %v4493
    %4562 = vmatpush1.msra.mxu0 %v4492
    %4563 = vmatprep.subr.mxu0 %v4491
    %4564 = vmatpush1.msra.mxu0 %v4490
    %4565 = vmatprep.subr.mxu0 0.0
    %4566 = vmatpush2.msra.mxu0 0.0
    %4567 = vmatprep.subr.mxu0 0.0
    %4568 = vmatpush2.msra.mxu0 0.0
    %4569 = vmatprep.subr.mxu0 0.0
    %4570 = vmatpush2.msra.mxu0 0.0
    %4571 = vmatprep.subr.mxu0 0.0
    %4572 = vmatpush2.msra.mxu0 0.0
    %4573 = vmatprep.subr.mxu0 0.0
    %4574 = vmatpush2.msra.mxu0 0.0
    %4575 = vmatprep.subr.mxu0 0.0
    %4576 = vmatpush2.msra.mxu0 0.0
    %4577 = vmatprep.subr.mxu0 0.0
    %4578 = vmatpush2.msra.mxu0 0.0
    %4579 = vmatprep.subr.mxu0 0.0
    %4580 = vmatpush2.msra.mxu0 0.0
    %4581 = vmatprep.subr.mxu0 0.0
    %4582 = vmatpush2.msra.mxu0 0.0
    %4583 = vmatprep.subr.mxu0 0.0
    %4584 = vmatpush2.msra.mxu0 0.0
    %4585 = vmatprep.subr.mxu0 0.0
    %4586 = vmatpush2.msra.mxu0 0.0
    %4587 = vmatprep.subr.mxu0 0.0
    %4588 = vmatpush2.msra.mxu0 0.0
    %4589 = vmatprep.subr.mxu0 %v4529
    %4590 = vmatpush2.msra.mxu0 %v4528
    %4591 = vmatprep.subr.mxu0 %v4527
    %4592 = vmatpush2.msra.mxu0 %v4526
    %4593 = vmatprep.subr.mxu0 %v4525
    %4594 = vmatpush2.msra.mxu0 %v4524
    %4595 = vmatprep.subr.mxu0 %v4523
    %4596 = vmatpush2.msra.mxu0 %v4522
    %4597 = vmatprep.mubr.f32.mxu0 %v4531
    %4598 = vmatmul.mubr.f32.gmra.mxu0 %v4488
    %v4599 = vpop.f32.mrf.mxu0
    %v4600 = vadd.f32 0.0, %v4599
    %v4601 = vpop.f32.mrf.mxu0
    %v4602 = vadd.f32 0.0, %v4601
    %4603 = vdwg.mxu0
    %v4604 = vmax.f32 %v4488, %v4600
    %v4605 = vmax.f32 %v4489, %v4602
    %4606 = vst [vmem:[#allocation3] sm:$0x1f] %v4604
    %4607 = vst.msk [vmem:[#allocation3 + $0x8] sm:$0x1f] %vm1985, %v4605
    %v4608 = vld [vmem:[#allocation3] ss:$8 sm:$0x3]
    %v4609 = vld [vmem:[%s5] sm:$0xff]
    %v4610 = vld [vmem:[%s5 + $0x8] sm:$0xff]
    %v4611 = vld [vmem:[%s5 + $0x10] sm:$0xff]
    %v4612 = vld [vmem:[%s5 + $0x18] sm:$0xff]
    %v4613 = vld [vmem:[%s5 + $0x20] sm:$0xff]
    %v4614 = vld [vmem:[%s5 + $0x28] sm:$0xff]
    %v4615 = vld [vmem:[%s5 + $0x30] sm:$0xff]
    %v4616 = vld [vmem:[%s5 + $0x38] sm:$0xff]
    %v4617 = vld [vmem:[%s5 + $0x40] sm:$0xff]
    %v4618 = vld [vmem:[%s5 + $0x48] sm:$0xff]
    %v4619 = vld [vmem:[%s5 + $0x50] sm:$0xff]
    %v4620 = vld [vmem:[%s5 + $0x58] sm:$0xff]
    %v4621 = vld [vmem:[%s5 + $0x60] sm:$0xff]
    %v4622 = vld [vmem:[%s5 + $0x68] sm:$0xff]
    %v4623 = vld [vmem:[%s5 + $0x70] sm:$0xff]
    %v4624 = vld [vmem:[%s5 + $0x78] sm:$0xff]
    %v4625 = vld [vmem:[%s5 + $0x80] sm:$0xff]
    %v4626 = vld [vmem:[%s5 + $0x88] sm:$0xff]
    %v4627 = vld [vmem:[%s5 + $0x90] sm:$0xff]
    %v4628 = vld [vmem:[%s5 + $0x98] sm:$0xff]
    %v4629 = vld [vmem:[%s2008] ss:$8 sm:$0x3]
    %v4630 = vld [vmem:[%s2010] sm:$0xff]
    %v4631 = vld [vmem:[%s2010 + $0x8] sm:$0xff]
    %v4632 = vld [vmem:[%s2010 + $0x10] sm:$0xff]
    %v4633 = vld [vmem:[%s2010 + $0x18] sm:$0xff]
    %v4634 = vld [vmem:[%s2010 + $0x20] sm:$0xff]
    %v4635 = vld [vmem:[%s2010 + $0x28] sm:$0xff]
    %v4636 = vld [vmem:[%s2010 + $0x30] sm:$0xff]
    %v4637 = vld [vmem:[%s2010 + $0x38] sm:$0xff]
    %v4638 = vld [vmem:[%s2010 + $0x40] sm:$0xff]
    %v4639 = vld [vmem:[%s2010 + $0x48] sm:$0xff]
    %v4640 = vld [vmem:[%s2010 + $0x50] sm:$0xff]
    %v4641 = vld [vmem:[%s2010 + $0x58] sm:$0xff]
    %v4642 = vld [vmem:[%s2010 + $0x60] sm:$0xff]
    %v4643 = vld [vmem:[%s2010 + $0x68] sm:$0xff]
    %v4644 = vld [vmem:[%s2010 + $0x70] sm:$0xff]
    %v4645 = vld [vmem:[%s2010 + $0x78] sm:$0xff]
    %v4646 = vld [vmem:[%s2010 + $0x80] sm:$0xff]
    %v4647 = vld [vmem:[%s2010 + $0x88] sm:$0xff]
    %v4648 = vld [vmem:[%s2010 + $0x90] sm:$0xff]
    %v4649 = vld [vmem:[%s2010 + $0x98] sm:$0xff]
    %v4651 = vlaneseq
    %v4652 = vshrl.u32 %v4651, 7
    %v4653 = vsub.s32 0, %v4652
    %v4654 = vrot.slane %v4629, %v4653
    %v4655 = vlaneseq
    %v4656 = vshrl.u32 %v4655, 7
    %v4657 = vsub.s32 1, %v4656
    %v4658 = vrot.slane %v4629, %v4657
    %v4660 = vsel %vm82, %v4658, 0
    %4662 = vmatprep.subr.mxu0 0.0
    %4663 = vmatpush1.msra.mxu0 %v4645
    %4664 = vmatprep.subr.mxu0 0.0
    %4665 = vmatpush1.msra.mxu0 %v4644
    %4666 = vmatprep.subr.mxu0 0.0
    %4667 = vmatpush1.msra.mxu0 %v4643
    %4668 = vmatprep.subr.mxu0 0.0
    %4669 = vmatpush1.msra.mxu0 %v4642
    %4670 = vmatprep.subr.mxu0 0.0
    %4671 = vmatpush1.msra.mxu0 %v4641
    %4672 = vmatprep.subr.mxu0 0.0
    %4673 = vmatpush1.msra.mxu0 %v4640
    %4674 = vmatprep.subr.mxu0 0.0
    %4675 = vmatpush1.msra.mxu0 %v4639
    %4676 = vmatprep.subr.mxu0 0.0
    %4677 = vmatpush1.msra.mxu0 %v4638
    %4678 = vmatprep.subr.mxu0 0.0
    %4679 = vmatpush1.msra.mxu0 %v4637
    %4680 = vmatprep.subr.mxu0 0.0
    %4681 = vmatpush1.msra.mxu0 %v4636
    %4682 = vmatprep.subr.mxu0 0.0
    %4683 = vmatpush1.msra.mxu0 %v4635
    %4684 = vmatprep.subr.mxu0 0.0
    %4685 = vmatpush1.msra.mxu0 %v4634
    %4686 = vmatprep.subr.mxu0 0.0
    %4687 = vmatpush1.msra.mxu0 %v4633
    %4688 = vmatprep.subr.mxu0 0.0
    %4689 = vmatpush1.msra.mxu0 %v4632
    %4690 = vmatprep.subr.mxu0 0.0
    %4691 = vmatpush1.msra.mxu0 %v4631
    %4692 = vmatprep.subr.mxu0 0.0
    %4693 = vmatpush1.msra.mxu0 %v4630
    %4694 = vmatprep.subr.mxu0 0.0
    %4695 = vmatpush2.msra.mxu0 0.0
    %4696 = vmatprep.subr.mxu0 0.0
    %4697 = vmatpush2.msra.mxu0 0.0
    %4698 = vmatprep.subr.mxu0 0.0
    %4699 = vmatpush2.msra.mxu0 0.0
    %4700 = vmatprep.subr.mxu0 0.0
    %4701 = vmatpush2.msra.mxu0 0.0
    %4702 = vmatprep.subr.mxu0 0.0
    %4703 = vmatpush2.msra.mxu0 0.0
    %4704 = vmatprep.subr.mxu0 0.0
    %4705 = vmatpush2.msra.mxu0 0.0
    %4706 = vmatprep.subr.mxu0 0.0
    %4707 = vmatpush2.msra.mxu0 0.0
    %4708 = vmatprep.subr.mxu0 0.0
    %4709 = vmatpush2.msra.mxu0 0.0
    %4710 = vmatprep.subr.mxu0 0.0
    %4711 = vmatpush2.msra.mxu0 0.0
    %4712 = vmatprep.subr.mxu0 0.0
    %4713 = vmatpush2.msra.mxu0 0.0
    %4714 = vmatprep.subr.mxu0 0.0
    %4715 = vmatpush2.msra.mxu0 0.0
    %4716 = vmatprep.subr.mxu0 0.0
    %4717 = vmatpush2.msra.mxu0 0.0
    %4718 = vmatprep.subr.mxu0 0.0
    %4719 = vmatpush2.msra.mxu0 %v4649
    %4720 = vmatprep.subr.mxu0 0.0
    %4721 = vmatpush2.msra.mxu0 %v4648
    %4722 = vmatprep.subr.mxu0 0.0
    %4723 = vmatpush2.msra.mxu0 %v4647
    %4724 = vmatprep.subr.mxu0 0.0
    %4725 = vmatpush2.msra.mxu0 %v4646
    %4726 = vmatprep.mubr.f32.mxu0 %v4660
    %4727 = vmatmul.mubr.f32.gmra.mxu0 %v4654
    %v4728 = vpop.f32.mrf.mxu0
    %v4729 = vadd.f32 0.0, %v4728
    %v4730 = vpop.f32.mrf.mxu0
    %4731 = vdwg.mxu0
    %v4733 = vlaneseq
    %v4734 = vshrl.u32 %v4733, 7
    %v4735 = vsub.s32 0, %v4734
    %v4736 = vrot.slane %v4608, %v4735
    %v4737 = vlaneseq
    %v4738 = vshrl.u32 %v4737, 7
    %v4739 = vsub.s32 1, %v4738
    %v4740 = vrot.slane %v4608, %v4739
    %v4742 = vsel %vm82, %v4740, 0
    %4744 = vmatprep.subr.mxu0 0.0
    %4745 = vmatpush1.msra.mxu0 %v4624
    %4746 = vmatprep.subr.mxu0 0.0
    %4747 = vmatpush1.msra.mxu0 %v4623
    %4748 = vmatprep.subr.mxu0 0.0
    %4749 = vmatpush1.msra.mxu0 %v4622
    %4750 = vmatprep.subr.mxu0 0.0
    %4751 = vmatpush1.msra.mxu0 %v4621
    %4752 = vmatprep.subr.mxu0 0.0
    %4753 = vmatpush1.msra.mxu0 %v4620
    %4754 = vmatprep.subr.mxu0 0.0
    %4755 = vmatpush1.msra.mxu0 %v4619
    %4756 = vmatprep.subr.mxu0 0.0
    %4757 = vmatpush1.msra.mxu0 %v4618
    %4758 = vmatprep.subr.mxu0 0.0
    %4759 = vmatpush1.msra.mxu0 %v4617
    %4760 = vmatprep.subr.mxu0 0.0
    %4761 = vmatpush1.msra.mxu0 %v4616
    %4762 = vmatprep.subr.mxu0 0.0
    %4763 = vmatpush1.msra.mxu0 %v4615
    %4764 = vmatprep.subr.mxu0 0.0
    %4765 = vmatpush1.msra.mxu0 %v4614
    %4766 = vmatprep.subr.mxu0 0.0
    %4767 = vmatpush1.msra.mxu0 %v4613
    %4768 = vmatprep.subr.mxu0 0.0
    %4769 = vmatpush1.msra.mxu0 %v4612
    %4770 = vmatprep.subr.mxu0 0.0
    %4771 = vmatpush1.msra.mxu0 %v4611
    %4772 = vmatprep.subr.mxu0 0.0
    %4773 = vmatpush1.msra.mxu0 %v4610
    %4774 = vmatprep.subr.mxu0 0.0
    %4775 = vmatpush1.msra.mxu0 %v4609
    %4776 = vmatprep.subr.mxu0 0.0
    %4777 = vmatpush2.msra.mxu0 0.0
    %4778 = vmatprep.subr.mxu0 0.0
    %4779 = vmatpush2.msra.mxu0 0.0
    %4780 = vmatprep.subr.mxu0 0.0
    %4781 = vmatpush2.msra.mxu0 0.0
    %4782 = vmatprep.subr.mxu0 0.0
    %4783 = vmatpush2.msra.mxu0 0.0
    %4784 = vmatprep.subr.mxu0 0.0
    %4785 = vmatpush2.msra.mxu0 0.0
    %4786 = vmatprep.subr.mxu0 0.0
    %4787 = vmatpush2.msra.mxu0 0.0
    %4788 = vmatprep.subr.mxu0 0.0
    %4789 = vmatpush2.msra.mxu0 0.0
    %4790 = vmatprep.subr.mxu0 0.0
    %4791 = vmatpush2.msra.mxu0 0.0
    %4792 = vmatprep.subr.mxu0 0.0
    %4793 = vmatpush2.msra.mxu0 0.0
    %4794 = vmatprep.subr.mxu0 0.0
    %4795 = vmatpush2.msra.mxu0 0.0
    %4796 = vmatprep.subr.mxu0 0.0
    %4797 = vmatpush2.msra.mxu0 0.0
    %4798 = vmatprep.subr.mxu0 0.0
    %4799 = vmatpush2.msra.mxu0 0.0
    %4800 = vmatprep.subr.mxu0 0.0
    %4801 = vmatpush2.msra.mxu0 %v4628
    %4802 = vmatprep.subr.mxu0 0.0
    %4803 = vmatpush2.msra.mxu0 %v4627
    %4804 = vmatprep.subr.mxu0 0.0
    %4805 = vmatpush2.msra.mxu0 %v4626
    %4806 = vmatprep.subr.mxu0 0.0
    %4807 = vmatpush2.msra.mxu0 %v4625
    %4808 = vmatprep.mubr.f32.mxu0 %v4742
    %4809 = vmatmul.mubr.f32.gmra.mxu0 %v4736
    %v4810 = vpop.f32.mrf.mxu0
    %v4811 = vadd.f32 %v4729, %v4810
    %v4812 = vpop.f32.mrf.mxu0
    %4813 = vdwg.mxu0
    %v4814 = vld [vmem:[%s2195] ss:$8 sm:$0x3]
    %v4815 = vld [vmem:[%s2197] sm:$0xff]
    %v4816 = vld [vmem:[%s2197 + $0x8] sm:$0xff]
    %v4817 = vld [vmem:[%s2197 + $0x10] sm:$0xff]
    %v4818 = vld [vmem:[%s2197 + $0x18] sm:$0xff]
    %v4819 = vld [vmem:[%s2197 + $0x20] sm:$0xff]
    %v4820 = vld [vmem:[%s2197 + $0x28] sm:$0xff]
    %v4821 = vld [vmem:[%s2197 + $0x30] sm:$0xff]
    %v4822 = vld [vmem:[%s2197 + $0x38] sm:$0xff]
    %v4823 = vld [vmem:[%s2197 + $0x40] sm:$0xff]
    %v4824 = vld [vmem:[%s2197 + $0x48] sm:$0xff]
    %v4825 = vld [vmem:[%s2197 + $0x50] sm:$0xff]
    %v4826 = vld [vmem:[%s2197 + $0x58] sm:$0xff]
    %v4827 = vld [vmem:[%s2197 + $0x60] sm:$0xff]
    %v4828 = vld [vmem:[%s2197 + $0x68] sm:$0xff]
    %v4829 = vld [vmem:[%s2197 + $0x70] sm:$0xff]
    %v4830 = vld [vmem:[%s2197 + $0x78] sm:$0xff]
    %v4831 = vld [vmem:[%s2197 + $0x80] sm:$0xff]
    %v4832 = vld [vmem:[%s2197 + $0x88] sm:$0xff]
    %v4833 = vld [vmem:[%s2197 + $0x90] sm:$0xff]
    %v4834 = vld [vmem:[%s2197 + $0x98] sm:$0xff]
    %v4836 = vlaneseq
    %v4837 = vshrl.u32 %v4836, 7
    %v4838 = vsub.s32 0, %v4837
    %v4839 = vrot.slane %v4814, %v4838
    %v4840 = vlaneseq
    %v4841 = vshrl.u32 %v4840, 7
    %v4842 = vsub.s32 1, %v4841
    %v4843 = vrot.slane %v4814, %v4842
    %v4845 = vsel %vm82, %v4843, 0
    %4847 = vmatprep.subr.mxu0 0.0
    %4848 = vmatpush1.msra.mxu0 %v4830
    %4849 = vmatprep.subr.mxu0 0.0
    %4850 = vmatpush1.msra.mxu0 %v4829
    %4851 = vmatprep.subr.mxu0 0.0
    %4852 = vmatpush1.msra.mxu0 %v4828
    %4853 = vmatprep.subr.mxu0 0.0
    %4854 = vmatpush1.msra.mxu0 %v4827
    %4855 = vmatprep.subr.mxu0 0.0
    %4856 = vmatpush1.msra.mxu0 %v4826
    %4857 = vmatprep.subr.mxu0 0.0
    %4858 = vmatpush1.msra.mxu0 %v4825
    %4859 = vmatprep.subr.mxu0 0.0
    %4860 = vmatpush1.msra.mxu0 %v4824
    %4861 = vmatprep.subr.mxu0 0.0
    %4862 = vmatpush1.msra.mxu0 %v4823
    %4863 = vmatprep.subr.mxu0 0.0
    %4864 = vmatpush1.msra.mxu0 %v4822
    %4865 = vmatprep.subr.mxu0 0.0
    %4866 = vmatpush1.msra.mxu0 %v4821
    %4867 = vmatprep.subr.mxu0 0.0
    %4868 = vmatpush1.msra.mxu0 %v4820
    %4869 = vmatprep.subr.mxu0 0.0
    %4870 = vmatpush1.msra.mxu0 %v4819
    %4871 = vmatprep.subr.mxu0 0.0
    %4872 = vmatpush1.msra.mxu0 %v4818
    %4873 = vmatprep.subr.mxu0 0.0
    %4874 = vmatpush1.msra.mxu0 %v4817
    %4875 = vmatprep.subr.mxu0 0.0
    %4876 = vmatpush1.msra.mxu0 %v4816
    %4877 = vmatprep.subr.mxu0 0.0
    %4878 = vmatpush1.msra.mxu0 %v4815
    %4879 = vmatprep.subr.mxu0 0.0
    %4880 = vmatpush2.msra.mxu0 0.0
    %4881 = vmatprep.subr.mxu0 0.0
    %4882 = vmatpush2.msra.mxu0 0.0
    %4883 = vmatprep.subr.mxu0 0.0
    %4884 = vmatpush2.msra.mxu0 0.0
    %4885 = vmatprep.subr.mxu0 0.0
    %4886 = vmatpush2.msra.mxu0 0.0
    %4887 = vmatprep.subr.mxu0 0.0
    %4888 = vmatpush2.msra.mxu0 0.0
    %4889 = vmatprep.subr.mxu0 0.0
    %4890 = vmatpush2.msra.mxu0 0.0
    %4891 = vmatprep.subr.mxu0 0.0
    %4892 = vmatpush2.msra.mxu0 0.0
    %4893 = vmatprep.subr.mxu0 0.0
    %4894 = vmatpush2.msra.mxu0 0.0
    %4895 = vmatprep.subr.mxu0 0.0
    %4896 = vmatpush2.msra.mxu0 0.0
    %4897 = vmatprep.subr.mxu0 0.0
    %4898 = vmatpush2.msra.mxu0 0.0
    %4899 = vmatprep.subr.mxu0 0.0
    %4900 = vmatpush2.msra.mxu0 0.0
    %4901 = vmatprep.subr.mxu0 0.0
    %4902 = vmatpush2.msra.mxu0 0.0
    %4903 = vmatprep.subr.mxu0 0.0
    %4904 = vmatpush2.msra.mxu0 %v4834
    %4905 = vmatprep.subr.mxu0 0.0
    %4906 = vmatpush2.msra.mxu0 %v4833
    %4907 = vmatprep.subr.mxu0 0.0
    %4908 = vmatpush2.msra.mxu0 %v4832
    %4909 = vmatprep.subr.mxu0 0.0
    %4910 = vmatpush2.msra.mxu0 %v4831
    %4911 = vmatprep.mubr.f32.mxu0 %v4845
    %4912 = vmatmul.mubr.f32.gmra.mxu0 %v4839
    %v4913 = vpop.f32.mrf.mxu0
    %v4914 = vadd.f32 0.0, %v4913
    %v4915 = vpop.f32.mrf.mxu0
    %4916 = vdwg.mxu0
    %v4917 = vadd.f32 %v4811, %v4914
    %v4918 = vld [vmem:[%s2301] ss:$8 sm:$0x3]
    %v4919 = vld [vmem:[%s2303] sm:$0xff]
    %v4920 = vld [vmem:[%s2303 + $0x8] sm:$0xff]
    %v4921 = vld [vmem:[%s2303 + $0x10] sm:$0xff]
    %v4922 = vld [vmem:[%s2303 + $0x18] sm:$0xff]
    %v4923 = vld [vmem:[%s2303 + $0x20] sm:$0xff]
    %v4924 = vld [vmem:[%s2303 + $0x28] sm:$0xff]
    %v4925 = vld [vmem:[%s2303 + $0x30] sm:$0xff]
    %v4926 = vld [vmem:[%s2303 + $0x38] sm:$0xff]
    %v4927 = vld [vmem:[%s2303 + $0x40] sm:$0xff]
    %v4928 = vld [vmem:[%s2303 + $0x48] sm:$0xff]
    %v4929 = vld [vmem:[%s2303 + $0x50] sm:$0xff]
    %v4930 = vld [vmem:[%s2303 + $0x58] sm:$0xff]
    %v4931 = vld [vmem:[%s2303 + $0x60] sm:$0xff]
    %v4932 = vld [vmem:[%s2303 + $0x68] sm:$0xff]
    %v4933 = vld [vmem:[%s2303 + $0x70] sm:$0xff]
    %v4934 = vld [vmem:[%s2303 + $0x78] sm:$0xff]
    %v4935 = vld [vmem:[%s2303 + $0x80] sm:$0xff]
    %v4936 = vld [vmem:[%s2303 + $0x88] sm:$0xff]
    %v4937 = vld [vmem:[%s2303 + $0x90] sm:$0xff]
    %v4938 = vld [vmem:[%s2303 + $0x98] sm:$0xff]
    %v4940 = vlaneseq
    %v4941 = vshrl.u32 %v4940, 7
    %v4942 = vsub.s32 0, %v4941
    %v4943 = vrot.slane %v4918, %v4942
    %v4944 = vlaneseq
    %v4945 = vshrl.u32 %v4944, 7
    %v4946 = vsub.s32 1, %v4945
    %v4947 = vrot.slane %v4918, %v4946
    %v4949 = vsel %vm82, %v4947, 0
    %4951 = vmatprep.subr.mxu0 0.0
    %4952 = vmatpush1.msra.mxu0 %v4934
    %4953 = vmatprep.subr.mxu0 0.0
    %4954 = vmatpush1.msra.mxu0 %v4933
    %4955 = vmatprep.subr.mxu0 0.0
    %4956 = vmatpush1.msra.mxu0 %v4932
    %4957 = vmatprep.subr.mxu0 0.0
    %4958 = vmatpush1.msra.mxu0 %v4931
    %4959 = vmatprep.subr.mxu0 0.0
    %4960 = vmatpush1.msra.mxu0 %v4930
    %4961 = vmatprep.subr.mxu0 0.0
    %4962 = vmatpush1.msra.mxu0 %v4929
    %4963 = vmatprep.subr.mxu0 0.0
    %4964 = vmatpush1.msra.mxu0 %v4928
    %4965 = vmatprep.subr.mxu0 0.0
    %4966 = vmatpush1.msra.mxu0 %v4927
    %4967 = vmatprep.subr.mxu0 0.0
    %4968 = vmatpush1.msra.mxu0 %v4926
    %4969 = vmatprep.subr.mxu0 0.0
    %4970 = vmatpush1.msra.mxu0 %v4925
    %4971 = vmatprep.subr.mxu0 0.0
    %4972 = vmatpush1.msra.mxu0 %v4924
    %4973 = vmatprep.subr.mxu0 0.0
    %4974 = vmatpush1.msra.mxu0 %v4923
    %4975 = vmatprep.subr.mxu0 0.0
    %4976 = vmatpush1.msra.mxu0 %v4922
    %4977 = vmatprep.subr.mxu0 0.0
    %4978 = vmatpush1.msra.mxu0 %v4921
    %4979 = vmatprep.subr.mxu0 0.0
    %4980 = vmatpush1.msra.mxu0 %v4920
    %4981 = vmatprep.subr.mxu0 0.0
    %4982 = vmatpush1.msra.mxu0 %v4919
    %4983 = vmatprep.subr.mxu0 0.0
    %4984 = vmatpush2.msra.mxu0 0.0
    %4985 = vmatprep.subr.mxu0 0.0
    %4986 = vmatpush2.msra.mxu0 0.0
    %4987 = vmatprep.subr.mxu0 0.0
    %4988 = vmatpush2.msra.mxu0 0.0
    %4989 = vmatprep.subr.mxu0 0.0
    %4990 = vmatpush2.msra.mxu0 0.0
    %4991 = vmatprep.subr.mxu0 0.0
    %4992 = vmatpush2.msra.mxu0 0.0
    %4993 = vmatprep.subr.mxu0 0.0
    %4994 = vmatpush2.msra.mxu0 0.0
    %4995 = vmatprep.subr.mxu0 0.0
    %4996 = vmatpush2.msra.mxu0 0.0
    %4997 = vmatprep.subr.mxu0 0.0
    %4998 = vmatpush2.msra.mxu0 0.0
    %4999 = vmatprep.subr.mxu0 0.0
    %5000 = vmatpush2.msra.mxu0 0.0
    %5001 = vmatprep.subr.mxu0 0.0
    %5002 = vmatpush2.msra.mxu0 0.0
    %5003 = vmatprep.subr.mxu0 0.0
    %5004 = vmatpush2.msra.mxu0 0.0
    %5005 = vmatprep.subr.mxu0 0.0
    %5006 = vmatpush2.msra.mxu0 0.0
    %5007 = vmatprep.subr.mxu0 0.0
    %5008 = vmatpush2.msra.mxu0 %v4938
    %5009 = vmatprep.subr.mxu0 0.0
    %5010 = vmatpush2.msra.mxu0 %v4937
    %5011 = vmatprep.subr.mxu0 0.0
    %5012 = vmatpush2.msra.mxu0 %v4936
    %5013 = vmatprep.subr.mxu0 0.0
    %5014 = vmatpush2.msra.mxu0 %v4935
    %5015 = vmatprep.mubr.f32.mxu0 %v4949
    %5016 = vmatmul.mubr.f32.gmra.mxu0 %v4943
    %v5017 = vpop.f32.mrf.mxu0
    %v5018 = vadd.f32 0.0, %v5017
    %v5019 = vpop.f32.mrf.mxu0
    %5020 = vdwg.mxu0
    %v5021 = vadd.f32 %v4917, %v5018
    %v5022 = vld [vmem:[%s2407] ss:$8 sm:$0x3]
    %v5023 = vld [vmem:[%s2409] sm:$0xff]
    %v5024 = vld [vmem:[%s2409 + $0x8] sm:$0xff]
    %v5025 = vld [vmem:[%s2409 + $0x10] sm:$0xff]
    %v5026 = vld [vmem:[%s2409 + $0x18] sm:$0xff]
    %v5027 = vld [vmem:[%s2409 + $0x20] sm:$0xff]
    %v5028 = vld [vmem:[%s2409 + $0x28] sm:$0xff]
    %v5029 = vld [vmem:[%s2409 + $0x30] sm:$0xff]
    %v5030 = vld [vmem:[%s2409 + $0x38] sm:$0xff]
    %v5031 = vld [vmem:[%s2409 + $0x40] sm:$0xff]
    %v5032 = vld [vmem:[%s2409 + $0x48] sm:$0xff]
    %v5033 = vld [vmem:[%s2409 + $0x50] sm:$0xff]
    %v5034 = vld [vmem:[%s2409 + $0x58] sm:$0xff]
    %v5035 = vld [vmem:[%s2409 + $0x60] sm:$0xff]
    %v5036 = vld [vmem:[%s2409 + $0x68] sm:$0xff]
    %v5037 = vld [vmem:[%s2409 + $0x70] sm:$0xff]
    %v5038 = vld [vmem:[%s2409 + $0x78] sm:$0xff]
    %v5039 = vld [vmem:[%s2409 + $0x80] sm:$0xff]
    %v5040 = vld [vmem:[%s2409 + $0x88] sm:$0xff]
    %v5041 = vld [vmem:[%s2409 + $0x90] sm:$0xff]
    %v5042 = vld [vmem:[%s2409 + $0x98] sm:$0xff]
    %v5044 = vlaneseq
    %v5045 = vshrl.u32 %v5044, 7
    %v5046 = vsub.s32 0, %v5045
    %v5047 = vrot.slane %v5022, %v5046
    %v5048 = vlaneseq
    %v5049 = vshrl.u32 %v5048, 7
    %v5050 = vsub.s32 1, %v5049
    %v5051 = vrot.slane %v5022, %v5050
    %v5053 = vsel %vm82, %v5051, 0
    %5055 = vmatprep.subr.mxu0 0.0
    %5056 = vmatpush1.msra.mxu0 %v5038
    %5057 = vmatprep.subr.mxu0 0.0
    %5058 = vmatpush1.msra.mxu0 %v5037
    %5059 = vmatprep.subr.mxu0 0.0
    %5060 = vmatpush1.msra.mxu0 %v5036
    %5061 = vmatprep.subr.mxu0 0.0
    %5062 = vmatpush1.msra.mxu0 %v5035
    %5063 = vmatprep.subr.mxu0 0.0
    %5064 = vmatpush1.msra.mxu0 %v5034
    %5065 = vmatprep.subr.mxu0 0.0
    %5066 = vmatpush1.msra.mxu0 %v5033
    %5067 = vmatprep.subr.mxu0 0.0
    %5068 = vmatpush1.msra.mxu0 %v5032
    %5069 = vmatprep.subr.mxu0 0.0
    %5070 = vmatpush1.msra.mxu0 %v5031
    %5071 = vmatprep.subr.mxu0 0.0
    %5072 = vmatpush1.msra.mxu0 %v5030
    %5073 = vmatprep.subr.mxu0 0.0
    %5074 = vmatpush1.msra.mxu0 %v5029
    %5075 = vmatprep.subr.mxu0 0.0
    %5076 = vmatpush1.msra.mxu0 %v5028
    %5077 = vmatprep.subr.mxu0 0.0
    %5078 = vmatpush1.msra.mxu0 %v5027
    %5079 = vmatprep.subr.mxu0 0.0
    %5080 = vmatpush1.msra.mxu0 %v5026
    %5081 = vmatprep.subr.mxu0 0.0
    %5082 = vmatpush1.msra.mxu0 %v5025
    %5083 = vmatprep.subr.mxu0 0.0
    %5084 = vmatpush1.msra.mxu0 %v5024
    %5085 = vmatprep.subr.mxu0 0.0
    %5086 = vmatpush1.msra.mxu0 %v5023
    %5087 = vmatprep.subr.mxu0 0.0
    %5088 = vmatpush2.msra.mxu0 0.0
    %5089 = vmatprep.subr.mxu0 0.0
    %5090 = vmatpush2.msra.mxu0 0.0
    %5091 = vmatprep.subr.mxu0 0.0
    %5092 = vmatpush2.msra.mxu0 0.0
    %5093 = vmatprep.subr.mxu0 0.0
    %5094 = vmatpush2.msra.mxu0 0.0
    %5095 = vmatprep.subr.mxu0 0.0
    %5096 = vmatpush2.msra.mxu0 0.0
    %5097 = vmatprep.subr.mxu0 0.0
    %5098 = vmatpush2.msra.mxu0 0.0
    %5099 = vmatprep.subr.mxu0 0.0
    %5100 = vmatpush2.msra.mxu0 0.0
    %5101 = vmatprep.subr.mxu0 0.0
    %5102 = vmatpush2.msra.mxu0 0.0
    %5103 = vmatprep.subr.mxu0 0.0
    %5104 = vmatpush2.msra.mxu0 0.0
    %5105 = vmatprep.subr.mxu0 0.0
    %5106 = vmatpush2.msra.mxu0 0.0
    %5107 = vmatprep.subr.mxu0 0.0
    %5108 = vmatpush2.msra.mxu0 0.0
    %5109 = vmatprep.subr.mxu0 0.0
    %5110 = vmatpush2.msra.mxu0 0.0
    %5111 = vmatprep.subr.mxu0 0.0
    %5112 = vmatpush2.msra.mxu0 %v5042
    %5113 = vmatprep.subr.mxu0 0.0
    %5114 = vmatpush2.msra.mxu0 %v5041
    %5115 = vmatprep.subr.mxu0 0.0
    %5116 = vmatpush2.msra.mxu0 %v5040
    %5117 = vmatprep.subr.mxu0 0.0
    %5118 = vmatpush2.msra.mxu0 %v5039
    %5119 = vmatprep.mubr.f32.mxu0 %v5053
    %5120 = vmatmul.mubr.f32.gmra.mxu0 %v5047
    %v5121 = vpop.f32.mrf.mxu0
    %v5122 = vadd.f32 0.0, %v5121
    %v5123 = vpop.f32.mrf.mxu0
    %5124 = vdwg.mxu0
    %v5125 = vadd.f32 %v5021, %v5122
    %v5126 = vld [vmem:[%s6] sm:$0x1]
    %v5127 = vadd.f32 %v5125, %v5126
    %v5128 = vld [vmem:[%s7] sm:$0xff]
    %v5129 = vld [vmem:[%s7 + $0x8] sm:$0xff]
    %v5130 = vld [vmem:[%s7 + $0x10] sm:$0xff]
    %v5131 = vld [vmem:[%s7 + $0x18] sm:$0xff]
    %v5132 = vld [vmem:[%s7 + $0x20] sm:$0xff]
    %v5133 = vld [vmem:[%s7 + $0x28] sm:$0xff]
    %v5134 = vld [vmem:[%s7 + $0x30] sm:$0xff]
    %v5135 = vld [vmem:[%s7 + $0x38] sm:$0xff]
    %v5136 = vld [vmem:[%s7 + $0x40] sm:$0xff]
    %v5137 = vld [vmem:[%s7 + $0x48] sm:$0xff]
    %v5138 = vld [vmem:[%s7 + $0x50] sm:$0xff]
    %v5139 = vld [vmem:[%s7 + $0x58] sm:$0xff]
    %v5140 = vld [vmem:[%s7 + $0x60] sm:$0xff]
    %v5141 = vld [vmem:[%s7 + $0x68] sm:$0xff]
    %v5142 = vld [vmem:[%s7 + $0x70] sm:$0xff]
    %v5143 = vld [vmem:[%s8] sm:$0x1]
    %v5145 = vsel %vm2531, %v5127, 0
    %5147 = vmatprep.subr.mxu0 0.0
    %5148 = vmatpush1.msra.mxu0 0.0
    %5149 = vmatprep.subr.mxu0 0.0
    %5150 = vmatpush1.msra.mxu0 %v5142
    %5151 = vmatprep.subr.mxu0 0.0
    %5152 = vmatpush1.msra.mxu0 %v5141
    %5153 = vmatprep.subr.mxu0 0.0
    %5154 = vmatpush1.msra.mxu0 %v5140
    %5155 = vmatprep.subr.mxu0 0.0
    %5156 = vmatpush1.msra.mxu0 %v5139
    %5157 = vmatprep.subr.mxu0 0.0
    %5158 = vmatpush1.msra.mxu0 %v5138
    %5159 = vmatprep.subr.mxu0 0.0
    %5160 = vmatpush1.msra.mxu0 %v5137
    %5161 = vmatprep.subr.mxu0 0.0
    %5162 = vmatpush1.msra.mxu0 %v5136
    %5163 = vmatprep.subr.mxu0 0.0
    %5164 = vmatpush1.msra.mxu0 %v5135
    %5165 = vmatprep.subr.mxu0 0.0
    %5166 = vmatpush1.msra.mxu0 %v5134
    %5167 = vmatprep.subr.mxu0 0.0
    %5168 = vmatpush1.msra.mxu0 %v5133
    %5169 = vmatprep.subr.mxu0 0.0
    %5170 = vmatpush1.msra.mxu0 %v5132
    %5171 = vmatprep.subr.mxu0 0.0
    %5172 = vmatpush1.msra.mxu0 %v5131
    %5173 = vmatprep.subr.mxu0 0.0
    %5174 = vmatpush1.msra.mxu0 %v5130
    %5175 = vmatprep.subr.mxu0 0.0
    %5176 = vmatpush1.msra.mxu0 %v5129
    %5177 = vmatprep.subr.mxu0 0.0
    %5178 = vmatpush1.msra.mxu0 %v5128
    %5179 = vmatprep.subr.mxu0 0.0
    %5180 = vmatpush2.msra.mxu0 0.0
    %5181 = vmatprep.subr.mxu0 0.0
    %5182 = vmatpush2.msra.mxu0 0.0
    %5183 = vmatprep.subr.mxu0 0.0
    %5184 = vmatpush2.msra.mxu0 0.0
    %5185 = vmatprep.subr.mxu0 0.0
    %5186 = vmatpush2.msra.mxu0 0.0
    %5187 = vmatprep.subr.mxu0 0.0
    %5188 = vmatpush2.msra.mxu0 0.0
    %5189 = vmatprep.subr.mxu0 0.0
    %5190 = vmatpush2.msra.mxu0 0.0
    %5191 = vmatprep.subr.mxu0 0.0
    %5192 = vmatpush2.msra.mxu0 0.0
    %5193 = vmatprep.subr.mxu0 0.0
    %5194 = vmatpush2.msra.mxu0 0.0
    %5195 = vmatprep.subr.mxu0 0.0
    %5196 = vmatpush2.msra.mxu0 0.0
    %5197 = vmatprep.subr.mxu0 0.0
    %5198 = vmatpush2.msra.mxu0 0.0
    %5199 = vmatprep.subr.mxu0 0.0
    %5200 = vmatpush2.msra.mxu0 0.0
    %5201 = vmatprep.subr.mxu0 0.0
    %5202 = vmatpush2.msra.mxu0 0.0
    %5203 = vmatprep.subr.mxu0 0.0
    %5204 = vmatpush2.msra.mxu0 0.0
    %5205 = vmatprep.subr.mxu0 0.0
    %5206 = vmatpush2.msra.mxu0 0.0
    %5207 = vmatprep.subr.mxu0 0.0
    %5208 = vmatpush2.msra.mxu0 0.0
    %5209 = vmatprep.subr.mxu0 0.0
    %5210 = vmatpush2.msra.mxu0 0.0
    %5211 = vmatprep.mubr.f32.mxu0 0.0
    %5212 = vmatmul.mubr.f32.gmra.mxu0 %v5145
    %v5213 = vpop.f32.mrf.mxu0
    %v5214 = vadd.f32 %v5143, %v5213
    %v5215 = vpop.f32.mrf.mxu0
    %5216 = vdwg.mxu0
    %v5217 = vld [vmem:[%s9] sm:$0xff]
    %v5218 = vld [vmem:[%s9 + $0x8] sm:$0xff]
    %v5219 = vld [vmem:[%s9 + $0x10] sm:$0xff]
    %v5220 = vld [vmem:[%s9 + $0x18] sm:$0xff]
    %v5221 = vld [vmem:[%s9 + $0x20] sm:$0xff]
    %v5222 = vld [vmem:[%s9 + $0x28] sm:$0xff]
    %v5223 = vld [vmem:[%s9 + $0x30] sm:$0xff]
    %v5224 = vld [vmem:[%s9 + $0x38] sm:$0xff]
    %v5225 = vld [vmem:[%s9 + $0x40] sm:$0xff]
    %v5226 = vld [vmem:[%s9 + $0x48] sm:$0xff]
    %v5227 = vld [vmem:[%s9 + $0x50] sm:$0xf]
    %v5228 = vld [vmem:[%s10] sm:$0x1]
    %v5230 = vsel %vm2617, %v5214, 0
    %v5233 = vsel %vm680, %v5227, 0
    %5235 = vmatprep.subr.mxu0 0.0
    %5236 = vmatpush1.msra.mxu0 0.0
    %5237 = vmatprep.subr.mxu0 0.0
    %5238 = vmatpush1.msra.mxu0 0.0
    %5239 = vmatprep.subr.mxu0 0.0
    %5240 = vmatpush1.msra.mxu0 0.0
    %5241 = vmatprep.subr.mxu0 0.0
    %5242 = vmatpush1.msra.mxu0 0.0
    %5243 = vmatprep.subr.mxu0 0.0
    %5244 = vmatpush1.msra.mxu0 0.0
    %5245 = vmatprep.subr.mxu0 0.0
    %5246 = vmatpush1.msra.mxu0 %v5233
    %5247 = vmatprep.subr.mxu0 0.0
    %5248 = vmatpush1.msra.mxu0 %v5226
    %5249 = vmatprep.subr.mxu0 0.0
    %5250 = vmatpush1.msra.mxu0 %v5225
    %5251 = vmatprep.subr.mxu0 0.0
    %5252 = vmatpush1.msra.mxu0 %v5224
    %5253 = vmatprep.subr.mxu0 0.0
    %5254 = vmatpush1.msra.mxu0 %v5223
    %5255 = vmatprep.subr.mxu0 0.0
    %5256 = vmatpush1.msra.mxu0 %v5222
    %5257 = vmatprep.subr.mxu0 0.0
    %5258 = vmatpush1.msra.mxu0 %v5221
    %5259 = vmatprep.subr.mxu0 0.0
    %5260 = vmatpush1.msra.mxu0 %v5220
    %5261 = vmatprep.subr.mxu0 0.0
    %5262 = vmatpush1.msra.mxu0 %v5219
    %5263 = vmatprep.subr.mxu0 0.0
    %5264 = vmatpush1.msra.mxu0 %v5218
    %5265 = vmatprep.subr.mxu0 0.0
    %5266 = vmatpush1.msra.mxu0 %v5217
    %5267 = vmatprep.subr.mxu0 0.0
    %5268 = vmatpush2.msra.mxu0 0.0
    %5269 = vmatprep.subr.mxu0 0.0
    %5270 = vmatpush2.msra.mxu0 0.0
    %5271 = vmatprep.subr.mxu0 0.0
    %5272 = vmatpush2.msra.mxu0 0.0
    %5273 = vmatprep.subr.mxu0 0.0
    %5274 = vmatpush2.msra.mxu0 0.0
    %5275 = vmatprep.subr.mxu0 0.0
    %5276 = vmatpush2.msra.mxu0 0.0
    %5277 = vmatprep.subr.mxu0 0.0
    %5278 = vmatpush2.msra.mxu0 0.0
    %5279 = vmatprep.subr.mxu0 0.0
    %5280 = vmatpush2.msra.mxu0 0.0
    %5281 = vmatprep.subr.mxu0 0.0
    %5282 = vmatpush2.msra.mxu0 0.0
    %5283 = vmatprep.subr.mxu0 0.0
    %5284 = vmatpush2.msra.mxu0 0.0
    %5285 = vmatprep.subr.mxu0 0.0
    %5286 = vmatpush2.msra.mxu0 0.0
    %5287 = vmatprep.subr.mxu0 0.0
    %5288 = vmatpush2.msra.mxu0 0.0
    %5289 = vmatprep.subr.mxu0 0.0
    %5290 = vmatpush2.msra.mxu0 0.0
    %5291 = vmatprep.subr.mxu0 0.0
    %5292 = vmatpush2.msra.mxu0 0.0
    %5293 = vmatprep.subr.mxu0 0.0
    %5294 = vmatpush2.msra.mxu0 0.0
    %5295 = vmatprep.subr.mxu0 0.0
    %5296 = vmatpush2.msra.mxu0 0.0
    %5297 = vmatprep.subr.mxu0 0.0
    %5298 = vmatpush2.msra.mxu0 0.0
    %5299 = vmatprep.mubr.f32.mxu0 0.0
    %5300 = vmatmul.mubr.f32.gmra.mxu0 %v5230
    %v5301 = vpop.f32.mrf.mxu0
    %v5302 = vadd.f32 %v5228, %v5301
    %v5303 = vpop.f32.mrf.mxu0
    %5304 = vdwg.mxu0
    %5305 = vst.msk [vmem:[#allocation4 + $0x1] sm:$0x1] %vm2694, %v5302
    // Predicated region
    $region70: #{lenet5_forward.1} parent=1 // pred_check
      _
    $region71: #{lenet5_forward.1} parent=1 // pred_check_branch
      %5307 = sbr.rel (0) target = $region73
    $region72: #{lenet5_forward.1} parent=1 // pred_region
      %s5309 = ssub.s32 32, 32
      %5310 = vsyncadd [#allocation5], %s5309
      %s5312 = sshll.u32 [#allocation4], 4
      %s5313 = int_to_ptr.vmem [resolvable:$true] %s5312
      %5315 = dma.vmem_to_hbm [thread:$0]  %s5313, 32, %s17, [#allocation5]
    $region73: #{lenet5_forward.1} parent=1 // pred_fallthru
      _
    // Predicated region
    $region74: #{lenet5_forward.1} parent=1 // pred_check
      _
    $region75: #{lenet5_forward.1} parent=1 // pred_check_branch
      %5317 = sbr.rel (0) target = $region77
    $region76: #{lenet5_forward.1} parent=1 // pred_region
      %5318 = dma.done [#allocation5], 32
    $region77: #{lenet5_forward.1} parent=1 // pred_fallthru
      _
    %5319 = vsyncpa [#allocation5], 1

</llo_original>
